<compile_context>
chip_gen: v7x
topology: tpu7x:2x2x1
jax: 0.10.0
libtpu: 0.0.40
codegen_flags: <defaults>
</compile_context>

<pallas_src>
import jax
import jax.numpy as jnp
from jax.experimental import pallas as pl
from jax.experimental.pallas import tpu as pltpu


def _rup(n, m):
    return ((n + m - 1) // m) * m


# ---------------------------------------------------------------------------
# Fused kernel: all GRU layers + MLP head.
#   x_ref     (T, d_in)                          VMEM
#   gru_ref   (rows, 4H)  consolidated GRU buf   VMEM
#   h1_ref    (rup8(H+1), 1024)  [W1^T ; b1]     VMEM
#   h2_ref    (rup8(1024+1), out_cols) [W2^T;b2] VMEM (out lanes padded to 128)
#   alpha_ref (1,)  shared PReLU alpha           SMEM
#   out_ref   (T, out_cols)                      VMEM (lane-dense store)
# ---------------------------------------------------------------------------
def _make_fused_kernel(T, d_in, H, L, mid, off_whh0, off_bias, off_w, stride_w):

    def gru_step(pre, h_prev):
        # pre lanes: [pre_r | pre_z | n_x + b_in | n_h + b_hn]
        # One EUP push covers both r and z: sigmoid(x) = 0.5*tanh(0.5x)+0.5 (exact).
        rz = 0.5 * jnp.tanh(0.5 * pre[:, 0:2 * H]) + 0.5
        r = rz[:, 0:H]
        z = rz[:, H:2 * H]
        n = jnp.tanh(pre[:, 2 * H:3 * H] + r * pre[:, 3 * H:4 * H])
        return (1.0 - z) * n + z * h_prev

    def kernel(x_ref, gru_ref, h1_ref, h2_ref, alpha_ref, out_ref):
        # ---- layer 0: whole-sequence input projection (off the recurrent chain),
        # then ONE packed (1,H)@(H,4H) dot per step.
        x = x_ref[...]
        wih0 = gru_ref[0:d_in, :]                           # (d_in, 4H)
        whh0 = gru_ref[off_whh0:off_whh0 + H, :]            # (H, 4H)
        b0 = gru_ref[off_bias:off_bias + 1, :]              # (1, 4H)
        gx = jnp.dot(x, wih0, preferred_element_type=jnp.float32) + b0   # (T, 4H)

        h = jnp.zeros((1, H), jnp.float32)                  # h0 = zeros (as in module)
        outs = []
        for t in range(T):                                  # fully unrolled
            pre = gx[t:t + 1, :] + jnp.dot(h, whh0,
                                           preferred_element_type=jnp.float32)
            h = gru_step(pre, h)
            outs.append(h)

        # ---- layers >= 1: per-step coupling to the previous layer (no sequence
        # barrier) with ONE packed (1,2H)@(2H,4H) dot per step.
        for l in range(1, L):
            w_l = gru_ref[off_w + (l - 1) * stride_w:
                          off_w + (l - 1) * stride_w + 2 * H, :]          # (2H, 4H)
            b_l = gru_ref[off_bias + 8 * l:off_bias + 8 * l + 1, :]       # (1, 4H)
            h = jnp.zeros((1, H), jnp.float32)
            nxt = []
            for t in range(T):
                xh = jnp.concatenate([outs[t], h], axis=1)                # (1, 2H)
                pre = jnp.dot(xh, w_l, preferred_element_type=jnp.float32) + b_l
                h = gru_step(pre, h)
                nxt.append(h)
            outs = nxt

        y = jnp.concatenate(outs, axis=0)                                 # (T, H)

        # ---- MLP head: PReLU(y @ W1^T + b1) -> PReLU(. @ W2^T + b2), shared alpha.
        a = alpha_ref[0]                                                  # SMEM scalar
        w1 = h1_ref[0:H, :]
        b1 = h1_ref[H:H + 1, :]
        z1 = jnp.dot(y, w1, preferred_element_type=jnp.float32) + b1
        z1 = jnp.where(z1 >= 0.0, z1, a * z1)
        w2 = h2_ref[0:mid, :]
        b2 = h2_ref[mid:mid + 1, :]
        z2 = jnp.dot(z1, w2, preferred_element_type=jnp.float32) + b2
        out_ref[...] = jnp.where(z2 >= 0.0, z2, a * z2)     # unmasked lane-dense store

    return kernel


# ---------------------------------------------------------------------------
# Trace-time weight packing (all free re-layout in the wrapper, no in-kernel .T).
# Column layout of every packed GRU matrix / bias row: [r | z | n_x | n_h] (4H lanes).
# ---------------------------------------------------------------------------
def _pack_gru_layer(wih, whh, bih, bhh, H, first):
    d = wih.shape[1]
    Wir, Wiz, Win = wih[0:H].T, wih[H:2 * H].T, wih[2 * H:3 * H].T    # (d, H)
    Whr, Whz, Whn = whh[0:H].T, whh[H:2 * H].T, whh[2 * H:3 * H].T    # (H, H)
    zi = jnp.zeros((d, H), jnp.float32)
    zh = jnp.zeros((H, H), jnp.float32)
    top = jnp.concatenate([Wir, Wiz, Win, zi], axis=1)                # input rows
    bot = jnp.concatenate([Whr, Whz, zh, Whn], axis=1)                # hidden rows
    bias = jnp.concatenate([bih[0:H] + bhh[0:H],                      # r (folded)
                            bih[H:2 * H] + bhh[H:2 * H],              # z (folded)
                            bih[2 * H:3 * H],                         # b_in
                            bhh[2 * H:3 * H]]).reshape(1, 4 * H)      # b_hn (gated)
    if first:
        return top, bot, bias                     # (d,4H), (H,4H), (1,4H)
    return jnp.concatenate([top, bot], axis=0), bias                  # (2H,4H), (1,4H)


def gru_model_forward(params, x):
    T, d_in = x.shape
    gru = params["gru"]
    L = len(gru)
    H = gru[0][1].shape[1]
    mid = params["w1"].shape[0]                  # 1024
    out_dim = params["w2"].shape[0]
    out_cols = _rup(out_dim, 128)

    def pad_rows(a, rows):
        return jnp.pad(a, ((0, rows - a.shape[0]), (0, 0)))

    # ---- one consolidated, 8-row-aligned buffer for ALL GRU layers -> 1 DMA
    wih0_p, whh0_p, b0 = _pack_gru_layer(*gru[0], H=H, first=True)
    off_whh0 = _rup(d_in, 8)
    off_bias = off_whh0 + _rup(H, 8)
    sections = [pad_rows(wih0_p, _rup(d_in, 8)), pad_rows(whh0_p, _rup(H, 8))]
    biases = [b0]
    packed_l = []
    for l in range(1, L):
        w_l, b_l = _pack_gru_layer(*gru[l], H=H, first=False)
        packed_l.append(w_l)
        biases.append(b_l)
    sections.append(jnp.concatenate([pad_rows(b, 8) for b in biases], axis=0))
    off_w = off_bias + 8 * L
    stride_w = _rup(2 * H, 8)
    for w_l in packed_l:
        sections.append(pad_rows(w_l, stride_w))
    gru_buf = jnp.concatenate(sections, axis=0)                       # (rows, 4H)

    # ---- head buffers: [W1^T ; b1] and [W2^T ; b2] with W2/b2 padded to 128 lanes
    h1_buf = pad_rows(jnp.concatenate([params["w1"].T,
                                       params["b1"].reshape(1, -1)], axis=0),
                      _rup(H + 1, 8))                                 # (rup8(H+1), 1024)
    w2_p = jnp.zeros((mid, out_cols), jnp.float32).at[:, :out_dim].set(params["w2"].T)
    b2_p = jnp.zeros((1, out_cols), jnp.float32).at[:, :out_dim].set(
        params["b2"].reshape(1, -1))
    h2_buf = pad_rows(jnp.concatenate([w2_p, b2_p], axis=0), _rup(mid + 1, 8))

    vmem = pl.BlockSpec(memory_space=pltpu.MemorySpace.VMEM)
    smem = pl.BlockSpec(memory_space=pltpu.MemorySpace.SMEM)

    # Footprint < 1 MiB: fits the default scoped-VMEM limit on v5e/v6e/v7x.
    # TODO(synk): if hidden_dim/seq_len grow, tile W1/W2 via pl.ANY + manual DMA
    # and set pltpu.CompilerParams(vmem_limit_bytes=...).
    out = pl.pallas_call(
        _make_fused_kernel(T, d_in, H, L, mid, off_whh0, off_bias, off_w, stride_w),
        out_shape=jax.ShapeDtypeStruct((T, out_cols), jnp.float32),
        in_specs=[vmem, vmem, vmem, vmem, smem],
        out_specs=vmem,
    )(x, gru_buf, h1_buf, h2_buf, params["prelu_alpha"])
    return jnp.squeeze(out[:, :out_dim])          # matches torch's out.squeeze()


# ---------------------------------------------------------------------------
# Pure-JAX reference (PyTorch nn.GRU / Linear / PReLU semantics) for a self-check.
# ---------------------------------------------------------------------------
def _reference_forward(params, x):
    hp = jax.lax.Precision.HIGHEST
    H = params["gru"][0][1].shape[1]
    seq = x
    for (wih, whh, bih, bhh) in params["gru"]:
        h = jnp.zeros((H,), jnp.float32)
        outs = []
        for t in range(seq.shape[0]):
            gi = jnp.dot(wih, seq[t], precision=hp) + bih
            gh = jnp.dot(whh, h, precision=hp) + bhh
            r = jax.nn.sigmoid(gi[0:H] + gh[0:H])
            z = jax.nn.sigmoid(gi[H:2 * H] + gh[H:2 * H])
            n = jnp.tanh(gi[2 * H:3 * H] + r * gh[2 * H:3 * H])
            h = (1.0 - z) * n + z * h
            outs.append(h)
        seq = jnp.stack(outs, axis=0)
    a = params["prelu_alpha"][0]
    z1 = jnp.dot(seq, params["w1"].T, precision=hp) + params["b1"]
    z1 = jnp.where(z1 >= 0, z1, a * z1)
    z2 = jnp.dot(z1, params["w2"].T, precision=hp) + params["b2"]
    z2 = jnp.where(z2 >= 0, z2, a * z2)
    return jnp.squeeze(z2)


# ---------------------------------------------------------------------------
# Parameter init (deterministic, PyTorch-like uniform(-1/sqrt(fan), 1/sqrt(fan)))
# ---------------------------------------------------------------------------
def init_params(key, input_dim, hidden_dim, layer_dim, output_dim):
    params = {}
    keys = jax.random.split(key, 4 * layer_dim + 4)
    idx = 0
    k = 1.0 / float(hidden_dim) ** 0.5
    gru = []
    for layer in range(layer_dim):
        d_in = input_dim if layer == 0 else hidden_dim
        wih = jax.random.uniform(keys[idx], (3 * hidden_dim, d_in), jnp.float32, -k, k); idx += 1
        whh = jax.random.uniform(keys[idx], (3 * hidden_dim, hidden_dim), jnp.float32, -k, k); idx += 1
        bih = jax.random.uniform(keys[idx], (3 * hidden_dim,), jnp.float32, -k, k); idx += 1
        bhh = jax.random.uniform(keys[idx], (3 * hidden_dim,), jnp.float32, -k, k); idx += 1
        gru.append((wih, whh, bih, bhh))
    params["gru"] = gru

    k1 = 1.0 / float(hidden_dim) ** 0.5
    params["w1"] = jax.random.uniform(keys[idx], (1024, hidden_dim), jnp.float32, -k1, k1); idx += 1
    params["b1"] = jax.random.uniform(keys[idx], (1024,), jnp.float32, -k1, k1); idx += 1
    k2 = 1.0 / float(1024) ** 0.5
    params["w2"] = jax.random.uniform(keys[idx], (output_dim, 1024), jnp.float32, -k2, k2); idx += 1
    params["b2"] = jax.random.uniform(keys[idx], (output_dim,), jnp.float32, -k2, k2); idx += 1
    params["prelu_alpha"] = jnp.array([0.25], jnp.float32)   # nn.PReLU default init
    return params


if __name__ == "__main__":
    input_dim, hidden_dim, layer_dim, seq_dim, output_dim = 16, 32, 2, 8, 4

    key = jax.random.PRNGKey(0)
    pkey, xkey = jax.random.split(key)
    params = init_params(pkey, input_dim, hidden_dim, layer_dim, output_dim)

    # Unbatched input (seq_len, input_dim), as implied by the h0 shape in forward().
    x = jax.random.normal(xkey, (seq_dim, input_dim), jnp.float32)

    fwd = jax.jit(gru_model_forward)
    out = fwd(params, x)
    jax.block_until_ready(out)
    assert out.shape == (seq_dim, output_dim), out.shape

    ref = _reference_forward(params, x)
    assert jnp.allclose(out, ref, atol=2e-2, rtol=2e-2), \
        float(jnp.max(jnp.abs(out - ref)))
    print("KERNEL_OK")
</pallas_src>

<mosaic_0001>
module attributes {stable_mosaic.version = 11 : i64} {
  func.func @kernel(%arg0: memref<8x16xf32, #tpu.memory_space<vmem>>, %arg1: memref<128x128xf32, #tpu.memory_space<vmem>>, %arg2: memref<40x1024xf32, #tpu.memory_space<vmem>>, %arg3: memref<1032x128xf32, #tpu.memory_space<vmem>>, %arg4: memref<1xf32, #tpu.memory_space<smem>>, %arg5: memref<8x128xf32, #tpu.memory_space<vmem>>) attributes {dimension_semantics = [], scalar_prefetch = 0 : i64, scratch_operands = 0 : i64, tpu.core_type = #tpu.core_type<tc>} {
    %c0 = arith.constant 0 : index
    %c0_0 = arith.constant 0 : index
    %0 = vector.load %arg0[%c0, %c0_0] : memref<8x16xf32, #tpu.memory_space<vmem>>, vector<8x16xf32>
    %c0_1 = arith.constant 0 : index
    %c0_2 = arith.constant 0 : index
    %1 = vector.load %arg1[%c0_1, %c0_2] : memref<128x128xf32, #tpu.memory_space<vmem>>, vector<16x128xf32>
    %c16 = arith.constant 16 : index
    %c0_3 = arith.constant 0 : index
    %2 = vector.load %arg1[%c16, %c0_3] : memref<128x128xf32, #tpu.memory_space<vmem>>, vector<32x128xf32>
    %c48 = arith.constant 48 : index
    %c0_4 = arith.constant 0 : index
    %3 = vector.load %arg1[%c48, %c0_4] : memref<128x128xf32, #tpu.memory_space<vmem>>, vector<1x128xf32>
    %cst = arith.constant dense<0.000000e+00> : vector<8x128xf32>
    %4 = tpu.matmul %0, %1, %cst {dimension_numbers = #tpu.dot_dimension_numbers<[1], [0], [0], [1], [0, 0, 1, 1], [], []>} : vector<8x16xf32>, vector<16x128xf32>, vector<8x128xf32> -> vector<8x128xf32>
    %5 = vector.broadcast %3 : vector<1x128xf32> to vector<8x128xf32>
    %6 = arith.addf %4, %5 : vector<8x128xf32>
    %cst_5 = arith.constant 0.000000e+00 : f32
    %7 = vector.broadcast %cst_5 : f32 to vector<1x32xf32>
    %8 = vector.extract_strided_slice %6 {offsets = [0, 0], sizes = [1, 128], strides = [1, 1]} : vector<8x128xf32> to vector<1x128xf32>
    %cst_6 = arith.constant dense<0.000000e+00> : vector<1x128xf32>
    %9 = tpu.matmul %7, %2, %cst_6 {dimension_numbers = #tpu.dot_dimension_numbers<[1], [0], [0], [1], [0, 0, 1, 1], [], []>} : vector<1x32xf32>, vector<32x128xf32>, vector<1x128xf32> -> vector<1x128xf32>
    %10 = arith.addf %8, %9 : vector<1x128xf32>
    %11 = vector.extract_strided_slice %10 {offsets = [0, 0], sizes = [1, 64], strides = [1, 1]} : vector<1x128xf32> to vector<1x64xf32>
    %cst_7 = arith.constant 5.000000e-01 : f32
    %12 = vector.broadcast %cst_7 : f32 to vector<1x64xf32>
    %13 = arith.mulf %12, %11 : vector<1x64xf32>
    %14 = math.tanh %13 : vector<1x64xf32>
    %cst_8 = arith.constant 5.000000e-01 : f32
    %15 = vector.broadcast %cst_8 : f32 to vector<1x64xf32>
    %16 = arith.mulf %15, %14 : vector<1x64xf32>
    %cst_9 = arith.constant 5.000000e-01 : f32
    %17 = vector.broadcast %cst_9 : f32 to vector<1x64xf32>
    %18 = arith.addf %16, %17 : vector<1x64xf32>
    %19 = vector.extract_strided_slice %18 {offsets = [0, 0], sizes = [1, 32], strides = [1, 1]} : vector<1x64xf32> to vector<1x32xf32>
    %20 = vector.extract_strided_slice %18 {offsets = [0, 32], sizes = [1, 32], strides = [1, 1]} : vector<1x64xf32> to vector<1x32xf32>
    %21 = vector.extract_strided_slice %10 {offsets = [0, 64], sizes = [1, 32], strides = [1, 1]} : vector<1x128xf32> to vector<1x32xf32>
    %22 = vector.extract_strided_slice %10 {offsets = [0, 96], sizes = [1, 32], strides = [1, 1]} : vector<1x128xf32> to vector<1x32xf32>
    %23 = arith.mulf %19, %22 : vector<1x32xf32>
    %24 = arith.addf %21, %23 : vector<1x32xf32>
    %25 = math.tanh %24 : vector<1x32xf32>
    %cst_10 = arith.constant 1.000000e+00 : f32
    %26 = vector.broadcast %cst_10 : f32 to vector<1x32xf32>
    %27 = arith.subf %26, %20 : vector<1x32xf32>
    %28 = arith.mulf %27, %25 : vector<1x32xf32>
    %29 = arith.mulf %20, %7 : vector<1x32xf32>
    %30 = arith.addf %28, %29 : vector<1x32xf32>
    %31 = vector.extract_strided_slice %6 {offsets = [1, 0], sizes = [1, 128], strides = [1, 1]} : vector<8x128xf32> to vector<1x128xf32>
    %cst_11 = arith.constant dense<0.000000e+00> : vector<1x128xf32>
    %32 = tpu.matmul %30, %2, %cst_11 {dimension_numbers = #tpu.dot_dimension_numbers<[1], [0], [0], [1], [0, 0, 1, 1], [], []>} : vector<1x32xf32>, vector<32x128xf32>, vector<1x128xf32> -> vector<1x128xf32>
    %33 = arith.addf %31, %32 : vector<1x128xf32>
    %34 = vector.extract_strided_slice %33 {offsets = [0, 0], sizes = [1, 64], strides = [1, 1]} : vector<1x128xf32> to vector<1x64xf32>
    %cst_12 = arith.constant 5.000000e-01 : f32
    %35 = vector.broadcast %cst_12 : f32 to vector<1x64xf32>
    %36 = arith.mulf %35, %34 : vector<1x64xf32>
    %37 = math.tanh %36 : vector<1x64xf32>
    %cst_13 = arith.constant 5.000000e-01 : f32
    %38 = vector.broadcast %cst_13 : f32 to vector<1x64xf32>
    %39 = arith.mulf %38, %37 : vector<1x64xf32>
    %cst_14 = arith.constant 5.000000e-01 : f32
    %40 = vector.broadcast %cst_14 : f32 to vector<1x64xf32>
    %41 = arith.addf %39, %40 : vector<1x64xf32>
    %42 = vector.extract_strided_slice %41 {offsets = [0, 0], sizes = [1, 32], strides = [1, 1]} : vector<1x64xf32> to vector<1x32xf32>
    %43 = vector.extract_strided_slice %41 {offsets = [0, 32], sizes = [1, 32], strides = [1, 1]} : vector<1x64xf32> to vector<1x32xf32>
    %44 = vector.extract_strided_slice %33 {offsets = [0, 64], sizes = [1, 32], strides = [1, 1]} : vector<1x128xf32> to vector<1x32xf32>
    %45 = vector.extract_strided_slice %33 {offsets = [0, 96], sizes = [1, 32], strides = [1, 1]} : vector<1x128xf32> to vector<1x32xf32>
    %46 = arith.mulf %42, %45 : vector<1x32xf32>
    %47 = arith.addf %44, %46 : vector<1x32xf32>
    %48 = math.tanh %47 : vector<1x32xf32>
    %cst_15 = arith.constant 1.000000e+00 : f32
    %49 = vector.broadcast %cst_15 : f32 to vector<1x32xf32>
    %50 = arith.subf %49, %43 : vector<1x32xf32>
    %51 = arith.mulf %50, %48 : vector<1x32xf32>
    %52 = arith.mulf %43, %30 : vector<1x32xf32>
    %53 = arith.addf %51, %52 : vector<1x32xf32>
    %54 = vector.extract_strided_slice %6 {offsets = [2, 0], sizes = [1, 128], strides = [1, 1]} : vector<8x128xf32> to vector<1x128xf32>
    %cst_16 = arith.constant dense<0.000000e+00> : vector<1x128xf32>
    %55 = tpu.matmul %53, %2, %cst_16 {dimension_numbers = #tpu.dot_dimension_numbers<[1], [0], [0], [1], [0, 0, 1, 1], [], []>} : vector<1x32xf32>, vector<32x128xf32>, vector<1x128xf32> -> vector<1x128xf32>
    %56 = arith.addf %54, %55 : vector<1x128xf32>
    %57 = vector.extract_strided_slice %56 {offsets = [0, 0], sizes = [1, 64], strides = [1, 1]} : vector<1x128xf32> to vector<1x64xf32>
    %cst_17 = arith.constant 5.000000e-01 : f32
    %58 = vector.broadcast %cst_17 : f32 to vector<1x64xf32>
    %59 = arith.mulf %58, %57 : vector<1x64xf32>
    %60 = math.tanh %59 : vector<1x64xf32>
    %cst_18 = arith.constant 5.000000e-01 : f32
    %61 = vector.broadcast %cst_18 : f32 to vector<1x64xf32>
    %62 = arith.mulf %61, %60 : vector<1x64xf32>
    %cst_19 = arith.constant 5.000000e-01 : f32
    %63 = vector.broadcast %cst_19 : f32 to vector<1x64xf32>
    %64 = arith.addf %62, %63 : vector<1x64xf32>
    %65 = vector.extract_strided_slice %64 {offsets = [0, 0], sizes = [1, 32], strides = [1, 1]} : vector<1x64xf32> to vector<1x32xf32>
    %66 = vector.extract_strided_slice %64 {offsets = [0, 32], sizes = [1, 32], strides = [1, 1]} : vector<1x64xf32> to vector<1x32xf32>
    %67 = vector.extract_strided_slice %56 {offsets = [0, 64], sizes = [1, 32], strides = [1, 1]} : vector<1x128xf32> to vector<1x32xf32>
    %68 = vector.extract_strided_slice %56 {offsets = [0, 96], sizes = [1, 32], strides = [1, 1]} : vector<1x128xf32> to vector<1x32xf32>
    %69 = arith.mulf %65, %68 : vector<1x32xf32>
    %70 = arith.addf %67, %69 : vector<1x32xf32>
    %71 = math.tanh %70 : vector<1x32xf32>
    %cst_20 = arith.constant 1.000000e+00 : f32
    %72 = vector.broadcast %cst_20 : f32 to vector<1x32xf32>
    %73 = arith.subf %72, %66 : vector<1x32xf32>
    %74 = arith.mulf %73, %71 : vector<1x32xf32>
    %75 = arith.mulf %66, %53 : vector<1x32xf32>
    %76 = arith.addf %74, %75 : vector<1x32xf32>
    %77 = vector.extract_strided_slice %6 {offsets = [3, 0], sizes = [1, 128], strides = [1, 1]} : vector<8x128xf32> to vector<1x128xf32>
    %cst_21 = arith.constant dense<0.000000e+00> : vector<1x128xf32>
    %78 = tpu.matmul %76, %2, %cst_21 {dimension_numbers = #tpu.dot_dimension_numbers<[1], [0], [0], [1], [0, 0, 1, 1], [], []>} : vector<1x32xf32>, vector<32x128xf32>, vector<1x128xf32> -> vector<1x128xf32>
    %79 = arith.addf %77, %78 : vector<1x128xf32>
    %80 = vector.extract_strided_slice %79 {offsets = [0, 0], sizes = [1, 64], strides = [1, 1]} : vector<1x128xf32> to vector<1x64xf32>
    %cst_22 = arith.constant 5.000000e-01 : f32
    %81 = vector.broadcast %cst_22 : f32 to vector<1x64xf32>
    %82 = arith.mulf %81, %80 : vector<1x64xf32>
    %83 = math.tanh %82 : vector<1x64xf32>
    %cst_23 = arith.constant 5.000000e-01 : f32
    %84 = vector.broadcast %cst_23 : f32 to vector<1x64xf32>
    %85 = arith.mulf %84, %83 : vector<1x64xf32>
    %cst_24 = arith.constant 5.000000e-01 : f32
    %86 = vector.broadcast %cst_24 : f32 to vector<1x64xf32>
    %87 = arith.addf %85, %86 : vector<1x64xf32>
    %88 = vector.extract_strided_slice %87 {offsets = [0, 0], sizes = [1, 32], strides = [1, 1]} : vector<1x64xf32> to vector<1x32xf32>
    %89 = vector.extract_strided_slice %87 {offsets = [0, 32], sizes = [1, 32], strides = [1, 1]} : vector<1x64xf32> to vector<1x32xf32>
    %90 = vector.extract_strided_slice %79 {offsets = [0, 64], sizes = [1, 32], strides = [1, 1]} : vector<1x128xf32> to vector<1x32xf32>
    %91 = vector.extract_strided_slice %79 {offsets = [0, 96], sizes = [1, 32], strides = [1, 1]} : vector<1x128xf32> to vector<1x32xf32>
    %92 = arith.mulf %88, %91 : vector<1x32xf32>
    %93 = arith.addf %90, %92 : vector<1x32xf32>
    %94 = math.tanh %93 : vector<1x32xf32>
    %cst_25 = arith.constant 1.000000e+00 : f32
    %95 = vector.broadcast %cst_25 : f32 to vector<1x32xf32>
    %96 = arith.subf %95, %89 : vector<1x32xf32>
    %97 = arith.mulf %96, %94 : vector<1x32xf32>
    %98 = arith.mulf %89, %76 : vector<1x32xf32>
    %99 = arith.addf %97, %98 : vector<1x32xf32>
    %100 = vector.extract_strided_slice %6 {offsets = [4, 0], sizes = [1, 128], strides = [1, 1]} : vector<8x128xf32> to vector<1x128xf32>
    %cst_26 = arith.constant dense<0.000000e+00> : vector<1x128xf32>
    %101 = tpu.matmul %99, %2, %cst_26 {dimension_numbers = #tpu.dot_dimension_numbers<[1], [0], [0], [1], [0, 0, 1, 1], [], []>} : vector<1x32xf32>, vector<32x128xf32>, vector<1x128xf32> -> vector<1x128xf32>
    %102 = arith.addf %100, %101 : vector<1x128xf32>
    %103 = vector.extract_strided_slice %102 {offsets = [0, 0], sizes = [1, 64], strides = [1, 1]} : vector<1x128xf32> to vector<1x64xf32>
    %cst_27 = arith.constant 5.000000e-01 : f32
    %104 = vector.broadcast %cst_27 : f32 to vector<1x64xf32>
    %105 = arith.mulf %104, %103 : vector<1x64xf32>
    %106 = math.tanh %105 : vector<1x64xf32>
    %cst_28 = arith.constant 5.000000e-01 : f32
    %107 = vector.broadcast %cst_28 : f32 to vector<1x64xf32>
    %108 = arith.mulf %107, %106 : vector<1x64xf32>
    %cst_29 = arith.constant 5.000000e-01 : f32
    %109 = vector.broadcast %cst_29 : f32 to vector<1x64xf32>
    %110 = arith.addf %108, %109 : vector<1x64xf32>
    %111 = vector.extract_strided_slice %110 {offsets = [0, 0], sizes = [1, 32], strides = [1, 1]} : vector<1x64xf32> to vector<1x32xf32>
    %112 = vector.extract_strided_slice %110 {offsets = [0, 32], sizes = [1, 32], strides = [1, 1]} : vector<1x64xf32> to vector<1x32xf32>
    %113 = vector.extract_strided_slice %102 {offsets = [0, 64], sizes = [1, 32], strides = [1, 1]} : vector<1x128xf32> to vector<1x32xf32>
    %114 = vector.extract_strided_slice %102 {offsets = [0, 96], sizes = [1, 32], strides = [1, 1]} : vector<1x128xf32> to vector<1x32xf32>
    %115 = arith.mulf %111, %114 : vector<1x32xf32>
    %116 = arith.addf %113, %115 : vector<1x32xf32>
    %117 = math.tanh %116 : vector<1x32xf32>
    %cst_30 = arith.constant 1.000000e+00 : f32
    %118 = vector.broadcast %cst_30 : f32 to vector<1x32xf32>
    %119 = arith.subf %118, %112 : vector<1x32xf32>
    %120 = arith.mulf %119, %117 : vector<1x32xf32>
    %121 = arith.mulf %112, %99 : vector<1x32xf32>
    %122 = arith.addf %120, %121 : vector<1x32xf32>
    %123 = vector.extract_strided_slice %6 {offsets = [5, 0], sizes = [1, 128], strides = [1, 1]} : vector<8x128xf32> to vector<1x128xf32>
    %cst_31 = arith.constant dense<0.000000e+00> : vector<1x128xf32>
    %124 = tpu.matmul %122, %2, %cst_31 {dimension_numbers = #tpu.dot_dimension_numbers<[1], [0], [0], [1], [0, 0, 1, 1], [], []>} : vector<1x32xf32>, vector<32x128xf32>, vector<1x128xf32> -> vector<1x128xf32>
    %125 = arith.addf %123, %124 : vector<1x128xf32>
    %126 = vector.extract_strided_slice %125 {offsets = [0, 0], sizes = [1, 64], strides = [1, 1]} : vector<1x128xf32> to vector<1x64xf32>
    %cst_32 = arith.constant 5.000000e-01 : f32
    %127 = vector.broadcast %cst_32 : f32 to vector<1x64xf32>
    %128 = arith.mulf %127, %126 : vector<1x64xf32>
    %129 = math.tanh %128 : vector<1x64xf32>
    %cst_33 = arith.constant 5.000000e-01 : f32
    %130 = vector.broadcast %cst_33 : f32 to vector<1x64xf32>
    %131 = arith.mulf %130, %129 : vector<1x64xf32>
    %cst_34 = arith.constant 5.000000e-01 : f32
    %132 = vector.broadcast %cst_34 : f32 to vector<1x64xf32>
    %133 = arith.addf %131, %132 : vector<1x64xf32>
    %134 = vector.extract_strided_slice %133 {offsets = [0, 0], sizes = [1, 32], strides = [1, 1]} : vector<1x64xf32> to vector<1x32xf32>
    %135 = vector.extract_strided_slice %133 {offsets = [0, 32], sizes = [1, 32], strides = [1, 1]} : vector<1x64xf32> to vector<1x32xf32>
    %136 = vector.extract_strided_slice %125 {offsets = [0, 64], sizes = [1, 32], strides = [1, 1]} : vector<1x128xf32> to vector<1x32xf32>
    %137 = vector.extract_strided_slice %125 {offsets = [0, 96], sizes = [1, 32], strides = [1, 1]} : vector<1x128xf32> to vector<1x32xf32>
    %138 = arith.mulf %134, %137 : vector<1x32xf32>
    %139 = arith.addf %136, %138 : vector<1x32xf32>
    %140 = math.tanh %139 : vector<1x32xf32>
    %cst_35 = arith.constant 1.000000e+00 : f32
    %141 = vector.broadcast %cst_35 : f32 to vector<1x32xf32>
    %142 = arith.subf %141, %135 : vector<1x32xf32>
    %143 = arith.mulf %142, %140 : vector<1x32xf32>
    %144 = arith.mulf %135, %122 : vector<1x32xf32>
    %145 = arith.addf %143, %144 : vector<1x32xf32>
    %146 = vector.extract_strided_slice %6 {offsets = [6, 0], sizes = [1, 128], strides = [1, 1]} : vector<8x128xf32> to vector<1x128xf32>
    %cst_36 = arith.constant dense<0.000000e+00> : vector<1x128xf32>
    %147 = tpu.matmul %145, %2, %cst_36 {dimension_numbers = #tpu.dot_dimension_numbers<[1], [0], [0], [1], [0, 0, 1, 1], [], []>} : vector<1x32xf32>, vector<32x128xf32>, vector<1x128xf32> -> vector<1x128xf32>
    %148 = arith.addf %146, %147 : vector<1x128xf32>
    %149 = vector.extract_strided_slice %148 {offsets = [0, 0], sizes = [1, 64], strides = [1, 1]} : vector<1x128xf32> to vector<1x64xf32>
    %cst_37 = arith.constant 5.000000e-01 : f32
    %150 = vector.broadcast %cst_37 : f32 to vector<1x64xf32>
    %151 = arith.mulf %150, %149 : vector<1x64xf32>
    %152 = math.tanh %151 : vector<1x64xf32>
    %cst_38 = arith.constant 5.000000e-01 : f32
    %153 = vector.broadcast %cst_38 : f32 to vector<1x64xf32>
    %154 = arith.mulf %153, %152 : vector<1x64xf32>
    %cst_39 = arith.constant 5.000000e-01 : f32
    %155 = vector.broadcast %cst_39 : f32 to vector<1x64xf32>
    %156 = arith.addf %154, %155 : vector<1x64xf32>
    %157 = vector.extract_strided_slice %156 {offsets = [0, 0], sizes = [1, 32], strides = [1, 1]} : vector<1x64xf32> to vector<1x32xf32>
    %158 = vector.extract_strided_slice %156 {offsets = [0, 32], sizes = [1, 32], strides = [1, 1]} : vector<1x64xf32> to vector<1x32xf32>
    %159 = vector.extract_strided_slice %148 {offsets = [0, 64], sizes = [1, 32], strides = [1, 1]} : vector<1x128xf32> to vector<1x32xf32>
    %160 = vector.extract_strided_slice %148 {offsets = [0, 96], sizes = [1, 32], strides = [1, 1]} : vector<1x128xf32> to vector<1x32xf32>
    %161 = arith.mulf %157, %160 : vector<1x32xf32>
    %162 = arith.addf %159, %161 : vector<1x32xf32>
    %163 = math.tanh %162 : vector<1x32xf32>
    %cst_40 = arith.constant 1.000000e+00 : f32
    %164 = vector.broadcast %cst_40 : f32 to vector<1x32xf32>
    %165 = arith.subf %164, %158 : vector<1x32xf32>
    %166 = arith.mulf %165, %163 : vector<1x32xf32>
    %167 = arith.mulf %158, %145 : vector<1x32xf32>
    %168 = arith.addf %166, %167 : vector<1x32xf32>
    %169 = vector.extract_strided_slice %6 {offsets = [7, 0], sizes = [1, 128], strides = [1, 1]} : vector<8x128xf32> to vector<1x128xf32>
    %cst_41 = arith.constant dense<0.000000e+00> : vector<1x128xf32>
    %170 = tpu.matmul %168, %2, %cst_41 {dimension_numbers = #tpu.dot_dimension_numbers<[1], [0], [0], [1], [0, 0, 1, 1], [], []>} : vector<1x32xf32>, vector<32x128xf32>, vector<1x128xf32> -> vector<1x128xf32>
    %171 = arith.addf %169, %170 : vector<1x128xf32>
    %172 = vector.extract_strided_slice %171 {offsets = [0, 0], sizes = [1, 64], strides = [1, 1]} : vector<1x128xf32> to vector<1x64xf32>
    %cst_42 = arith.constant 5.000000e-01 : f32
    %173 = vector.broadcast %cst_42 : f32 to vector<1x64xf32>
    %174 = arith.mulf %173, %172 : vector<1x64xf32>
    %175 = math.tanh %174 : vector<1x64xf32>
    %cst_43 = arith.constant 5.000000e-01 : f32
    %176 = vector.broadcast %cst_43 : f32 to vector<1x64xf32>
    %177 = arith.mulf %176, %175 : vector<1x64xf32>
    %cst_44 = arith.constant 5.000000e-01 : f32
    %178 = vector.broadcast %cst_44 : f32 to vector<1x64xf32>
    %179 = arith.addf %177, %178 : vector<1x64xf32>
    %180 = vector.extract_strided_slice %179 {offsets = [0, 0], sizes = [1, 32], strides = [1, 1]} : vector<1x64xf32> to vector<1x32xf32>
    %181 = vector.extract_strided_slice %179 {offsets = [0, 32], sizes = [1, 32], strides = [1, 1]} : vector<1x64xf32> to vector<1x32xf32>
    %182 = vector.extract_strided_slice %171 {offsets = [0, 64], sizes = [1, 32], strides = [1, 1]} : vector<1x128xf32> to vector<1x32xf32>
    %183 = vector.extract_strided_slice %171 {offsets = [0, 96], sizes = [1, 32], strides = [1, 1]} : vector<1x128xf32> to vector<1x32xf32>
    %184 = arith.mulf %180, %183 : vector<1x32xf32>
    %185 = arith.addf %182, %184 : vector<1x32xf32>
    %186 = math.tanh %185 : vector<1x32xf32>
    %cst_45 = arith.constant 1.000000e+00 : f32
    %187 = vector.broadcast %cst_45 : f32 to vector<1x32xf32>
    %188 = arith.subf %187, %181 : vector<1x32xf32>
    %189 = arith.mulf %188, %186 : vector<1x32xf32>
    %190 = arith.mulf %181, %168 : vector<1x32xf32>
    %191 = arith.addf %189, %190 : vector<1x32xf32>
    %c64 = arith.constant 64 : index
    %c0_46 = arith.constant 0 : index
    %192 = vector.load %arg1[%c64, %c0_46] : memref<128x128xf32, #tpu.memory_space<vmem>>, vector<64x128xf32>
    %c56 = arith.constant 56 : index
    %c0_47 = arith.constant 0 : index
    %193 = vector.load %arg1[%c56, %c0_47] : memref<128x128xf32, #tpu.memory_space<vmem>>, vector<1x128xf32>
    %cst_48 = arith.constant 0.000000e+00 : f32
    %194 = vector.broadcast %cst_48 : f32 to vector<1x32xf32>
    %195 = tpu.concatenate %30, %194 in 1 : vector<1x32xf32>, vector<1x32xf32> -> vector<1x64xf32>
    %cst_49 = arith.constant dense<0.000000e+00> : vector<1x128xf32>
    %196 = tpu.matmul %195, %192, %cst_49 {dimension_numbers = #tpu.dot_dimension_numbers<[1], [0], [0], [1], [0, 0, 1, 1], [], []>} : vector<1x64xf32>, vector<64x128xf32>, vector<1x128xf32> -> vector<1x128xf32>
    %197 = arith.addf %196, %193 : vector<1x128xf32>
    %198 = vector.extract_strided_slice %197 {offsets = [0, 0], sizes = [1, 64], strides = [1, 1]} : vector<1x128xf32> to vector<1x64xf32>
    %cst_50 = arith.constant 5.000000e-01 : f32
    %199 = vector.broadcast %cst_50 : f32 to vector<1x64xf32>
    %200 = arith.mulf %199, %198 : vector<1x64xf32>
    %201 = math.tanh %200 : vector<1x64xf32>
    %cst_51 = arith.constant 5.000000e-01 : f32
    %202 = vector.broadcast %cst_51 : f32 to vector<1x64xf32>
    %203 = arith.mulf %202, %201 : vector<1x64xf32>
    %cst_52 = arith.constant 5.000000e-01 : f32
    %204 = vector.broadcast %cst_52 : f32 to vector<1x64xf32>
    %205 = arith.addf %203, %204 : vector<1x64xf32>
    %206 = vector.extract_strided_slice %205 {offsets = [0, 0], sizes = [1, 32], strides = [1, 1]} : vector<1x64xf32> to vector<1x32xf32>
    %207 = vector.extract_strided_slice %205 {offsets = [0, 32], sizes = [1, 32], strides = [1, 1]} : vector<1x64xf32> to vector<1x32xf32>
    %208 = vector.extract_strided_slice %197 {offsets = [0, 64], sizes = [1, 32], strides = [1, 1]} : vector<1x128xf32> to vector<1x32xf32>
    %209 = vector.extract_strided_slice %197 {offsets = [0, 96], sizes = [1, 32], strides = [1, 1]} : vector<1x128xf32> to vector<1x32xf32>
    %210 = arith.mulf %206, %209 : vector<1x32xf32>
    %211 = arith.addf %208, %210 : vector<1x32xf32>
    %212 = math.tanh %211 : vector<1x32xf32>
    %cst_53 = arith.constant 1.000000e+00 : f32
    %213 = vector.broadcast %cst_53 : f32 to vector<1x32xf32>
    %214 = arith.subf %213, %207 : vector<1x32xf32>
    %215 = arith.mulf %214, %212 : vector<1x32xf32>
    %216 = arith.mulf %207, %194 : vector<1x32xf32>
    %217 = arith.addf %215, %216 : vector<1x32xf32>
    %218 = tpu.concatenate %53, %217 in 1 : vector<1x32xf32>, vector<1x32xf32> -> vector<1x64xf32>
    %cst_54 = arith.constant dense<0.000000e+00> : vector<1x128xf32>
    %219 = tpu.matmul %218, %192, %cst_54 {dimension_numbers = #tpu.dot_dimension_numbers<[1], [0], [0], [1], [0, 0, 1, 1], [], []>} : vector<1x64xf32>, vector<64x128xf32>, vector<1x128xf32> -> vector<1x128xf32>
    %220 = arith.addf %219, %193 : vector<1x128xf32>
    %221 = vector.extract_strided_slice %220 {offsets = [0, 0], sizes = [1, 64], strides = [1, 1]} : vector<1x128xf32> to vector<1x64xf32>
    %cst_55 = arith.constant 5.000000e-01 : f32
    %222 = vector.broadcast %cst_55 : f32 to vector<1x64xf32>
    %223 = arith.mulf %222, %221 : vector<1x64xf32>
    %224 = math.tanh %223 : vector<1x64xf32>
    %cst_56 = arith.constant 5.000000e-01 : f32
    %225 = vector.broadcast %cst_56 : f32 to vector<1x64xf32>
    %226 = arith.mulf %225, %224 : vector<1x64xf32>
    %cst_57 = arith.constant 5.000000e-01 : f32
    %227 = vector.broadcast %cst_57 : f32 to vector<1x64xf32>
    %228 = arith.addf %226, %227 : vector<1x64xf32>
    %229 = vector.extract_strided_slice %228 {offsets = [0, 0], sizes = [1, 32], strides = [1, 1]} : vector<1x64xf32> to vector<1x32xf32>
    %230 = vector.extract_strided_slice %228 {offsets = [0, 32], sizes = [1, 32], strides = [1, 1]} : vector<1x64xf32> to vector<1x32xf32>
    %231 = vector.extract_strided_slice %220 {offsets = [0, 64], sizes = [1, 32], strides = [1, 1]} : vector<1x128xf32> to vector<1x32xf32>
    %232 = vector.extract_strided_slice %220 {offsets = [0, 96], sizes = [1, 32], strides = [1, 1]} : vector<1x128xf32> to vector<1x32xf32>
    %233 = arith.mulf %229, %232 : vector<1x32xf32>
    %234 = arith.addf %231, %233 : vector<1x32xf32>
    %235 = math.tanh %234 : vector<1x32xf32>
    %cst_58 = arith.constant 1.000000e+00 : f32
    %236 = vector.broadcast %cst_58 : f32 to vector<1x32xf32>
    %237 = arith.subf %236, %230 : vector<1x32xf32>
    %238 = arith.mulf %237, %235 : vector<1x32xf32>
    %239 = arith.mulf %230, %217 : vector<1x32xf32>
    %240 = arith.addf %238, %239 : vector<1x32xf32>
    %241 = tpu.concatenate %76, %240 in 1 : vector<1x32xf32>, vector<1x32xf32> -> vector<1x64xf32>
    %cst_59 = arith.constant dense<0.000000e+00> : vector<1x128xf32>
    %242 = tpu.matmul %241, %192, %cst_59 {dimension_numbers = #tpu.dot_dimension_numbers<[1], [0], [0], [1], [0, 0, 1, 1], [], []>} : vector<1x64xf32>, vector<64x128xf32>, vector<1x128xf32> -> vector<1x128xf32>
    %243 = arith.addf %242, %193 : vector<1x128xf32>
    %244 = vector.extract_strided_slice %243 {offsets = [0, 0], sizes = [1, 64], strides = [1, 1]} : vector<1x128xf32> to vector<1x64xf32>
    %cst_60 = arith.constant 5.000000e-01 : f32
    %245 = vector.broadcast %cst_60 : f32 to vector<1x64xf32>
    %246 = arith.mulf %245, %244 : vector<1x64xf32>
    %247 = math.tanh %246 : vector<1x64xf32>
    %cst_61 = arith.constant 5.000000e-01 : f32
    %248 = vector.broadcast %cst_61 : f32 to vector<1x64xf32>
    %249 = arith.mulf %248, %247 : vector<1x64xf32>
    %cst_62 = arith.constant 5.000000e-01 : f32
    %250 = vector.broadcast %cst_62 : f32 to vector<1x64xf32>
    %251 = arith.addf %249, %250 : vector<1x64xf32>
    %252 = vector.extract_strided_slice %251 {offsets = [0, 0], sizes = [1, 32], strides = [1, 1]} : vector<1x64xf32> to vector<1x32xf32>
    %253 = vector.extract_strided_slice %251 {offsets = [0, 32], sizes = [1, 32], strides = [1, 1]} : vector<1x64xf32> to vector<1x32xf32>
    %254 = vector.extract_strided_slice %243 {offsets = [0, 64], sizes = [1, 32], strides = [1, 1]} : vector<1x128xf32> to vector<1x32xf32>
    %255 = vector.extract_strided_slice %243 {offsets = [0, 96], sizes = [1, 32], strides = [1, 1]} : vector<1x128xf32> to vector<1x32xf32>
    %256 = arith.mulf %252, %255 : vector<1x32xf32>
    %257 = arith.addf %254, %256 : vector<1x32xf32>
    %258 = math.tanh %257 : vector<1x32xf32>
    %cst_63 = arith.constant 1.000000e+00 : f32
    %259 = vector.broadcast %cst_63 : f32 to vector<1x32xf32>
    %260 = arith.subf %259, %253 : vector<1x32xf32>
    %261 = arith.mulf %260, %258 : vector<1x32xf32>
    %262 = arith.mulf %253, %240 : vector<1x32xf32>
    %263 = arith.addf %261, %262 : vector<1x32xf32>
    %264 = tpu.concatenate %99, %263 in 1 : vector<1x32xf32>, vector<1x32xf32> -> vector<1x64xf32>
    %cst_64 = arith.constant dense<0.000000e+00> : vector<1x128xf32>
    %265 = tpu.matmul %264, %192, %cst_64 {dimension_numbers = #tpu.dot_dimension_numbers<[1], [0], [0], [1], [0, 0, 1, 1], [], []>} : vector<1x64xf32>, vector<64x128xf32>, vector<1x128xf32> -> vector<1x128xf32>
    %266 = arith.addf %265, %193 : vector<1x128xf32>
    %267 = vector.extract_strided_slice %266 {offsets = [0, 0], sizes = [1, 64], strides = [1, 1]} : vector<1x128xf32> to vector<1x64xf32>
    %cst_65 = arith.constant 5.000000e-01 : f32
    %268 = vector.broadcast %cst_65 : f32 to vector<1x64xf32>
    %269 = arith.mulf %268, %267 : vector<1x64xf32>
    %270 = math.tanh %269 : vector<1x64xf32>
    %cst_66 = arith.constant 5.000000e-01 : f32
    %271 = vector.broadcast %cst_66 : f32 to vector<1x64xf32>
    %272 = arith.mulf %271, %270 : vector<1x64xf32>
    %cst_67 = arith.constant 5.000000e-01 : f32
    %273 = vector.broadcast %cst_67 : f32 to vector<1x64xf32>
    %274 = arith.addf %272, %273 : vector<1x64xf32>
    %275 = vector.extract_strided_slice %274 {offsets = [0, 0], sizes = [1, 32], strides = [1, 1]} : vector<1x64xf32> to vector<1x32xf32>
    %276 = vector.extract_strided_slice %274 {offsets = [0, 32], sizes = [1, 32], strides = [1, 1]} : vector<1x64xf32> to vector<1x32xf32>
    %277 = vector.extract_strided_slice %266 {offsets = [0, 64], sizes = [1, 32], strides = [1, 1]} : vector<1x128xf32> to vector<1x32xf32>
    %278 = vector.extract_strided_slice %266 {offsets = [0, 96], sizes = [1, 32], strides = [1, 1]} : vector<1x128xf32> to vector<1x32xf32>
    %279 = arith.mulf %275, %278 : vector<1x32xf32>
    %280 = arith.addf %277, %279 : vector<1x32xf32>
    %281 = math.tanh %280 : vector<1x32xf32>
    %cst_68 = arith.constant 1.000000e+00 : f32
    %282 = vector.broadcast %cst_68 : f32 to vector<1x32xf32>
    %283 = arith.subf %282, %276 : vector<1x32xf32>
    %284 = arith.mulf %283, %281 : vector<1x32xf32>
    %285 = arith.mulf %276, %263 : vector<1x32xf32>
    %286 = arith.addf %284, %285 : vector<1x32xf32>
    %287 = tpu.concatenate %122, %286 in 1 : vector<1x32xf32>, vector<1x32xf32> -> vector<1x64xf32>
    %cst_69 = arith.constant dense<0.000000e+00> : vector<1x128xf32>
    %288 = tpu.matmul %287, %192, %cst_69 {dimension_numbers = #tpu.dot_dimension_numbers<[1], [0], [0], [1], [0, 0, 1, 1], [], []>} : vector<1x64xf32>, vector<64x128xf32>, vector<1x128xf32> -> vector<1x128xf32>
    %289 = arith.addf %288, %193 : vector<1x128xf32>
    %290 = vector.extract_strided_slice %289 {offsets = [0, 0], sizes = [1, 64], strides = [1, 1]} : vector<1x128xf32> to vector<1x64xf32>
    %cst_70 = arith.constant 5.000000e-01 : f32
    %291 = vector.broadcast %cst_70 : f32 to vector<1x64xf32>
    %292 = arith.mulf %291, %290 : vector<1x64xf32>
    %293 = math.tanh %292 : vector<1x64xf32>
    %cst_71 = arith.constant 5.000000e-01 : f32
    %294 = vector.broadcast %cst_71 : f32 to vector<1x64xf32>
    %295 = arith.mulf %294, %293 : vector<1x64xf32>
    %cst_72 = arith.constant 5.000000e-01 : f32
    %296 = vector.broadcast %cst_72 : f32 to vector<1x64xf32>
    %297 = arith.addf %295, %296 : vector<1x64xf32>
    %298 = vector.extract_strided_slice %297 {offsets = [0, 0], sizes = [1, 32], strides = [1, 1]} : vector<1x64xf32> to vector<1x32xf32>
    %299 = vector.extract_strided_slice %297 {offsets = [0, 32], sizes = [1, 32], strides = [1, 1]} : vector<1x64xf32> to vector<1x32xf32>
    %300 = vector.extract_strided_slice %289 {offsets = [0, 64], sizes = [1, 32], strides = [1, 1]} : vector<1x128xf32> to vector<1x32xf32>
    %301 = vector.extract_strided_slice %289 {offsets = [0, 96], sizes = [1, 32], strides = [1, 1]} : vector<1x128xf32> to vector<1x32xf32>
    %302 = arith.mulf %298, %301 : vector<1x32xf32>
    %303 = arith.addf %300, %302 : vector<1x32xf32>
    %304 = math.tanh %303 : vector<1x32xf32>
    %cst_73 = arith.constant 1.000000e+00 : f32
    %305 = vector.broadcast %cst_73 : f32 to vector<1x32xf32>
    %306 = arith.subf %305, %299 : vector<1x32xf32>
    %307 = arith.mulf %306, %304 : vector<1x32xf32>
    %308 = arith.mulf %299, %286 : vector<1x32xf32>
    %309 = arith.addf %307, %308 : vector<1x32xf32>
    %310 = tpu.concatenate %145, %309 in 1 : vector<1x32xf32>, vector<1x32xf32> -> vector<1x64xf32>
    %cst_74 = arith.constant dense<0.000000e+00> : vector<1x128xf32>
    %311 = tpu.matmul %310, %192, %cst_74 {dimension_numbers = #tpu.dot_dimension_numbers<[1], [0], [0], [1], [0, 0, 1, 1], [], []>} : vector<1x64xf32>, vector<64x128xf32>, vector<1x128xf32> -> vector<1x128xf32>
    %312 = arith.addf %311, %193 : vector<1x128xf32>
    %313 = vector.extract_strided_slice %312 {offsets = [0, 0], sizes = [1, 64], strides = [1, 1]} : vector<1x128xf32> to vector<1x64xf32>
    %cst_75 = arith.constant 5.000000e-01 : f32
    %314 = vector.broadcast %cst_75 : f32 to vector<1x64xf32>
    %315 = arith.mulf %314, %313 : vector<1x64xf32>
    %316 = math.tanh %315 : vector<1x64xf32>
    %cst_76 = arith.constant 5.000000e-01 : f32
    %317 = vector.broadcast %cst_76 : f32 to vector<1x64xf32>
    %318 = arith.mulf %317, %316 : vector<1x64xf32>
    %cst_77 = arith.constant 5.000000e-01 : f32
    %319 = vector.broadcast %cst_77 : f32 to vector<1x64xf32>
    %320 = arith.addf %318, %319 : vector<1x64xf32>
    %321 = vector.extract_strided_slice %320 {offsets = [0, 0], sizes = [1, 32], strides = [1, 1]} : vector<1x64xf32> to vector<1x32xf32>
    %322 = vector.extract_strided_slice %320 {offsets = [0, 32], sizes = [1, 32], strides = [1, 1]} : vector<1x64xf32> to vector<1x32xf32>
    %323 = vector.extract_strided_slice %312 {offsets = [0, 64], sizes = [1, 32], strides = [1, 1]} : vector<1x128xf32> to vector<1x32xf32>
    %324 = vector.extract_strided_slice %312 {offsets = [0, 96], sizes = [1, 32], strides = [1, 1]} : vector<1x128xf32> to vector<1x32xf32>
    %325 = arith.mulf %321, %324 : vector<1x32xf32>
    %326 = arith.addf %323, %325 : vector<1x32xf32>
    %327 = math.tanh %326 : vector<1x32xf32>
    %cst_78 = arith.constant 1.000000e+00 : f32
    %328 = vector.broadcast %cst_78 : f32 to vector<1x32xf32>
    %329 = arith.subf %328, %322 : vector<1x32xf32>
    %330 = arith.mulf %329, %327 : vector<1x32xf32>
    %331 = arith.mulf %322, %309 : vector<1x32xf32>
    %332 = arith.addf %330, %331 : vector<1x32xf32>
    %333 = tpu.concatenate %168, %332 in 1 : vector<1x32xf32>, vector<1x32xf32> -> vector<1x64xf32>
    %cst_79 = arith.constant dense<0.000000e+00> : vector<1x128xf32>
    %334 = tpu.matmul %333, %192, %cst_79 {dimension_numbers = #tpu.dot_dimension_numbers<[1], [0], [0], [1], [0, 0, 1, 1], [], []>} : vector<1x64xf32>, vector<64x128xf32>, vector<1x128xf32> -> vector<1x128xf32>
    %335 = arith.addf %334, %193 : vector<1x128xf32>
    %336 = vector.extract_strided_slice %335 {offsets = [0, 0], sizes = [1, 64], strides = [1, 1]} : vector<1x128xf32> to vector<1x64xf32>
    %cst_80 = arith.constant 5.000000e-01 : f32
    %337 = vector.broadcast %cst_80 : f32 to vector<1x64xf32>
    %338 = arith.mulf %337, %336 : vector<1x64xf32>
    %339 = math.tanh %338 : vector<1x64xf32>
    %cst_81 = arith.constant 5.000000e-01 : f32
    %340 = vector.broadcast %cst_81 : f32 to vector<1x64xf32>
    %341 = arith.mulf %340, %339 : vector<1x64xf32>
    %cst_82 = arith.constant 5.000000e-01 : f32
    %342 = vector.broadcast %cst_82 : f32 to vector<1x64xf32>
    %343 = arith.addf %341, %342 : vector<1x64xf32>
    %344 = vector.extract_strided_slice %343 {offsets = [0, 0], sizes = [1, 32], strides = [1, 1]} : vector<1x64xf32> to vector<1x32xf32>
    %345 = vector.extract_strided_slice %343 {offsets = [0, 32], sizes = [1, 32], strides = [1, 1]} : vector<1x64xf32> to vector<1x32xf32>
    %346 = vector.extract_strided_slice %335 {offsets = [0, 64], sizes = [1, 32], strides = [1, 1]} : vector<1x128xf32> to vector<1x32xf32>
    %347 = vector.extract_strided_slice %335 {offsets = [0, 96], sizes = [1, 32], strides = [1, 1]} : vector<1x128xf32> to vector<1x32xf32>
    %348 = arith.mulf %344, %347 : vector<1x32xf32>
    %349 = arith.addf %346, %348 : vector<1x32xf32>
    %350 = math.tanh %349 : vector<1x32xf32>
    %cst_83 = arith.constant 1.000000e+00 : f32
    %351 = vector.broadcast %cst_83 : f32 to vector<1x32xf32>
    %352 = arith.subf %351, %345 : vector<1x32xf32>
    %353 = arith.mulf %352, %350 : vector<1x32xf32>
    %354 = arith.mulf %345, %332 : vector<1x32xf32>
    %355 = arith.addf %353, %354 : vector<1x32xf32>
    %356 = tpu.concatenate %191, %355 in 1 : vector<1x32xf32>, vector<1x32xf32> -> vector<1x64xf32>
    %cst_84 = arith.constant dense<0.000000e+00> : vector<1x128xf32>
    %357 = tpu.matmul %356, %192, %cst_84 {dimension_numbers = #tpu.dot_dimension_numbers<[1], [0], [0], [1], [0, 0, 1, 1], [], []>} : vector<1x64xf32>, vector<64x128xf32>, vector<1x128xf32> -> vector<1x128xf32>
    %358 = arith.addf %357, %193 : vector<1x128xf32>
    %359 = vector.extract_strided_slice %358 {offsets = [0, 0], sizes = [1, 64], strides = [1, 1]} : vector<1x128xf32> to vector<1x64xf32>
    %cst_85 = arith.constant 5.000000e-01 : f32
    %360 = vector.broadcast %cst_85 : f32 to vector<1x64xf32>
    %361 = arith.mulf %360, %359 : vector<1x64xf32>
    %362 = math.tanh %361 : vector<1x64xf32>
    %cst_86 = arith.constant 5.000000e-01 : f32
    %363 = vector.broadcast %cst_86 : f32 to vector<1x64xf32>
    %364 = arith.mulf %363, %362 : vector<1x64xf32>
    %cst_87 = arith.constant 5.000000e-01 : f32
    %365 = vector.broadcast %cst_87 : f32 to vector<1x64xf32>
    %366 = arith.addf %364, %365 : vector<1x64xf32>
    %367 = vector.extract_strided_slice %366 {offsets = [0, 0], sizes = [1, 32], strides = [1, 1]} : vector<1x64xf32> to vector<1x32xf32>
    %368 = vector.extract_strided_slice %366 {offsets = [0, 32], sizes = [1, 32], strides = [1, 1]} : vector<1x64xf32> to vector<1x32xf32>
    %369 = vector.extract_strided_slice %358 {offsets = [0, 64], sizes = [1, 32], strides = [1, 1]} : vector<1x128xf32> to vector<1x32xf32>
    %370 = vector.extract_strided_slice %358 {offsets = [0, 96], sizes = [1, 32], strides = [1, 1]} : vector<1x128xf32> to vector<1x32xf32>
    %371 = arith.mulf %367, %370 : vector<1x32xf32>
    %372 = arith.addf %369, %371 : vector<1x32xf32>
    %373 = math.tanh %372 : vector<1x32xf32>
    %cst_88 = arith.constant 1.000000e+00 : f32
    %374 = vector.broadcast %cst_88 : f32 to vector<1x32xf32>
    %375 = arith.subf %374, %368 : vector<1x32xf32>
    %376 = arith.mulf %375, %373 : vector<1x32xf32>
    %377 = arith.mulf %368, %355 : vector<1x32xf32>
    %378 = arith.addf %376, %377 : vector<1x32xf32>
    %379 = tpu.concatenate %217, %240, %263, %286, %309, %332, %355, %378 in 0 : vector<1x32xf32>, vector<1x32xf32>, vector<1x32xf32>, vector<1x32xf32>, vector<1x32xf32>, vector<1x32xf32>, vector<1x32xf32>, vector<1x32xf32> -> vector<8x32xf32>
    %c0_89 = arith.constant 0 : index
    %380 = memref.load %arg4[%c0_89] : memref<1xf32, #tpu.memory_space<smem>>
    %c0_90 = arith.constant 0 : index
    %c0_91 = arith.constant 0 : index
    %381 = vector.load %arg2[%c0_90, %c0_91] : memref<40x1024xf32, #tpu.memory_space<vmem>>, vector<32x1024xf32>
    %c32 = arith.constant 32 : index
    %c0_92 = arith.constant 0 : index
    %382 = vector.load %arg2[%c32, %c0_92] : memref<40x1024xf32, #tpu.memory_space<vmem>>, vector<1x1024xf32>
    %cst_93 = arith.constant dense<0.000000e+00> : vector<8x1024xf32>
    %383 = tpu.matmul %379, %381, %cst_93 {dimension_numbers = #tpu.dot_dimension_numbers<[1], [0], [0], [1], [0, 0, 1, 1], [], []>} : vector<8x32xf32>, vector<32x1024xf32>, vector<8x1024xf32> -> vector<8x1024xf32>
    %384 = vector.broadcast %382 : vector<1x1024xf32> to vector<8x1024xf32>
    %385 = arith.addf %383, %384 : vector<8x1024xf32>
    %cst_94 = arith.constant 0.000000e+00 : f32
    %386 = vector.broadcast %cst_94 : f32 to vector<8x1024xf32>
    %387 = arith.cmpf oge, %385, %386 : vector<8x1024xf32>
    %388 = vector.broadcast %380 : f32 to vector<8x1024xf32>
    %389 = arith.mulf %388, %385 : vector<8x1024xf32>
    %390 = arith.select %387, %385, %389 : vector<8x1024xi1>, vector<8x1024xf32>
    %c0_95 = arith.constant 0 : index
    %c0_96 = arith.constant 0 : index
    %391 = vector.load %arg3[%c0_95, %c0_96] : memref<1032x128xf32, #tpu.memory_space<vmem>>, vector<1024x128xf32>
    %c1024 = arith.constant 1024 : index
    %c0_97 = arith.constant 0 : index
    %392 = vector.load %arg3[%c1024, %c0_97] : memref<1032x128xf32, #tpu.memory_space<vmem>>, vector<1x128xf32>
    %cst_98 = arith.constant dense<0.000000e+00> : vector<8x128xf32>
    %393 = tpu.matmul %390, %391, %cst_98 {dimension_numbers = #tpu.dot_dimension_numbers<[1], [0], [0], [1], [0, 0, 1, 1], [], []>} : vector<8x1024xf32>, vector<1024x128xf32>, vector<8x128xf32> -> vector<8x128xf32>
    %394 = vector.broadcast %392 : vector<1x128xf32> to vector<8x128xf32>
    %395 = arith.addf %393, %394 : vector<8x128xf32>
    %cst_99 = arith.constant 0.000000e+00 : f32
    %396 = vector.broadcast %cst_99 : f32 to vector<8x128xf32>
    %397 = arith.cmpf oge, %395, %396 : vector<8x128xf32>
    %398 = vector.broadcast %380 : f32 to vector<8x128xf32>
    %399 = arith.mulf %398, %395 : vector<8x128xf32>
    %400 = arith.select %397, %395, %399 : vector<8x128xi1>, vector<8x128xf32>
    %c0_100 = arith.constant 0 : index
    %c0_101 = arith.constant 0 : index
    %401 = vector.load %arg5[%c0_100, %c0_101] : memref<8x128xf32, #tpu.memory_space<vmem>>, vector<8x128xf32>
    tpu.vector_store %arg5[%c0_100, %c0_101], %400 {strides = array<i32>} : memref<8x128xf32, #tpu.memory_space<vmem>>, vector<8x128xf32>,
    return
  }
}

</mosaic_0001>

<llo_original>
// kernel: gru_model_forward.1
$region0: #{gru_model_forward.1}
  #allocation0 [shape = 'u32[]', space=smem, size = 0x4, offset = 0x4, fixed_abs, tag = 'smem constant byte address 0x4 - core index']
  #allocation1 [shape = 'u32[144,128]{1,0:T(1,128)}', space=vmem, size = 0x12000, scoped, tag = 'internal scratch']
  #allocation2 [shape = 'f32[1]{0:T(128)S(6)}', space=smem, size = 0x200, scoped, tag = 'scoped memory for gru_model_forward.1']
  %s0 = inlined_call_operand.vmem [shape: f32[8,16], index: 0, kind: input, shape index: {}]
  %s1 = inlined_call_operand.vmem [shape: f32[128,128], index: 1, kind: input, shape index: {}]
  %s2 = inlined_call_operand.vmem [shape: f32[40,1024], index: 2, kind: input, shape index: {}]
  %s3 = inlined_call_operand.vmem [shape: f32[1032,128], index: 3, kind: input, shape index: {}]
  %s4 = inlined_call_operand.<no memory space> [shape: f32[1], index: 4, kind: input, shape index: {}]
  %s5 = inlined_call_operand.vmem [shape: f32[8,128], index: 5, kind: output, shape index: {}]
  %s6 = sld [smem:[#allocation0]]
  $region30: #{gru_model_forward.1} parent=0
    _
  %s8 = ssub.s32 1, %s6
  %s9 = scalar_select 0, %s8, %s6
  %10 = sst [smem:[#allocation2]] %s4
  // Predicated region
  $region2: #{gru_model_forward.1} parent=0 // pred_check
    _
  $region3: #{gru_model_forward.1} parent=0 // pred_check_branch
    %12 = sbr.rel (0) target = $region5
  $region4: #{gru_model_forward.1} parent=0 // pred_region
    _
  $region5: #{gru_model_forward.1} parent=0 // pred_fallthru
    _
  // Predicated region
  $region6: #{gru_model_forward.1} parent=0 // pred_check
    _
  $region7: #{gru_model_forward.1} parent=0 // pred_check_branch
    %14 = sbr.rel (0) target = $region9
  $region8: #{gru_model_forward.1} parent=0 // pred_region
    _
  $region9: #{gru_model_forward.1} parent=0 // pred_fallthru
    _
  // Predicated region
  $region10: #{gru_model_forward.1} parent=0 // pred_check
    _
  $region11: #{gru_model_forward.1} parent=0 // pred_check_branch
    %16 = sbr.rel (0) target = $region13
  $region12: #{gru_model_forward.1} parent=0 // pred_region
    _
  $region13: #{gru_model_forward.1} parent=0 // pred_fallthru
    _
  // Predicated region
  $region14: #{gru_model_forward.1} parent=0 // pred_check
    _
  $region15: #{gru_model_forward.1} parent=0 // pred_check_branch
    %18 = sbr.rel (0) target = $region17
  $region16: #{gru_model_forward.1} parent=0 // pred_region
    _
  $region17: #{gru_model_forward.1} parent=0 // pred_fallthru
    _
  // Predicated region
  $region18: #{gru_model_forward.1} parent=0 // pred_check
    _
  $region19: #{gru_model_forward.1} parent=0 // pred_check_branch
    %20 = sbr.rel (0) target = $region21
  $region20: #{gru_model_forward.1} parent=0 // pred_region
    _
  $region21: #{gru_model_forward.1} parent=0 // pred_fallthru
    _
  %v21 = vld [vmem:[%s0] sm:$0xff]
  %v22 = vld [vmem:[%s1] sm:$0xff]
  %v23 = vld [vmem:[%s1 + $0x8] sm:$0xff]
  %v24 = vld [vmem:[%s1 + $0x10] sm:$0xff]
  %v25 = vld [vmem:[%s1 + $0x18] sm:$0xff]
  %v26 = vld [vmem:[%s1 + $0x20] sm:$0xff]
  %v27 = vld [vmem:[%s1 + $0x28] sm:$0xff]
  %v28 = vld [vmem:[%s1 + $0x30] sm:$0x1]
  %v29 = vlaneseq
  %v30 = vshrl.u32 %v29, 7
  %v31 = vsub.s32 0, %v30
  %v32 = vrot.slane %v28, %v31
  %vm33 = vcmask 130048
  %v35 = vsel %vm33, %v21, 0
  %37 = vmatprep.subr.mxu0 0.0
  %38 = vmatpush1.msra.mxu0 %v22
  %39 = vmatprep.subr.mxu0 0.0
  %40 = vmatpush1.msra.mxu0 %v23
  %41 = vmatprep.subr.mxu0 0.0
  %42 = vmatpush1.msra.mxu0 0.0
  %43 = vmatprep.subr.mxu0 0.0
  %44 = vmatpush1.msra.mxu0 0.0
  %45 = vmatprep.subr.mxu0 0.0
  %46 = vmatpush1.msra.mxu0 0.0
  %47 = vmatprep.subr.mxu0 0.0
  %48 = vmatpush1.msra.mxu0 0.0
  %49 = vmatprep.subr.mxu0 0.0
  %50 = vmatpush1.msra.mxu0 0.0
  %51 = vmatprep.subr.mxu0 0.0
  %52 = vmatpush1.msra.mxu0 0.0
  %53 = vmatprep.subr.mxu0 0.0
  %54 = vmatpush1.msra.mxu0 0.0
  %55 = vmatprep.subr.mxu0 0.0
  %56 = vmatpush1.msra.mxu0 0.0
  %57 = vmatprep.subr.mxu0 0.0
  %58 = vmatpush1.msra.mxu0 0.0
  %59 = vmatprep.subr.mxu0 0.0
  %60 = vmatpush1.msra.mxu0 0.0
  %61 = vmatprep.subr.mxu0 0.0
  %62 = vmatpush1.msra.mxu0 0.0
  %63 = vmatprep.subr.mxu0 0.0
  %64 = vmatpush1.msra.mxu0 0.0
  %65 = vmatprep.subr.mxu0 0.0
  %66 = vmatpush1.msra.mxu0 0.0
  %67 = vmatprep.subr.mxu0 0.0
  %68 = vmatpush1.msra.mxu0 0.0
  %69 = vmatprep.subr.mxu0 0.0
  %70 = vmatpush1.msra.mxu0 0.0
  %71 = vmatprep.subr.mxu0 0.0
  %72 = vmatpush1.msra.mxu0 0.0
  %73 = vmatprep.subr.mxu0 0.0
  %74 = vmatpush1.msra.mxu0 0.0
  %75 = vmatprep.subr.mxu0 0.0
  %76 = vmatpush1.msra.mxu0 0.0
  %77 = vmatprep.subr.mxu0 0.0
  %78 = vmatpush1.msra.mxu0 0.0
  %79 = vmatprep.subr.mxu0 0.0
  %80 = vmatpush1.msra.mxu0 0.0
  %81 = vmatprep.subr.mxu0 0.0
  %82 = vmatpush1.msra.mxu0 0.0
  %83 = vmatprep.subr.mxu0 0.0
  %84 = vmatpush1.msra.mxu0 0.0
  %85 = vmatprep.subr.mxu0 0.0
  %86 = vmatpush1.msra.mxu0 0.0
  %87 = vmatprep.subr.mxu0 0.0
  %88 = vmatpush1.msra.mxu0 0.0
  %89 = vmatprep.subr.mxu0 0.0
  %90 = vmatpush1.msra.mxu0 0.0
  %91 = vmatprep.subr.mxu0 0.0
  %92 = vmatpush1.msra.mxu0 0.0
  %93 = vmatprep.subr.mxu0 0.0
  %94 = vmatpush1.msra.mxu0 0.0
  %95 = vmatprep.subr.mxu0 0.0
  %96 = vmatpush1.msra.mxu0 0.0
  %97 = vmatprep.subr.mxu0 0.0
  %98 = vmatpush1.msra.mxu0 0.0
  %99 = vmatprep.subr.mxu0 0.0
  %100 = vmatpush1.msra.mxu0 0.0
  %101 = vmatprep.mubr.f32.mxu0 0.0
  %102 = vmatmul.mubr.f32.gmra.mrb[0].mxu0 %v35
  %v103 = vpop.f32.mrb[0].mxu0
  %v104 = vadd.f32 %v32, %v103
  %v105 = vpop.f32.mrb[0].mxu0
  %106 = vdwg.mxu0
  %vm107 = vcmask 261120
  %v109 = vsel %vm107, 0.0, 0
  %111 = vmatprep.subr.mxu0 0.0
  %112 = vmatpush1.msra.mxu0 %v24
  %113 = vmatprep.subr.mxu0 0.0
  %114 = vmatpush1.msra.mxu0 %v25
  %115 = vmatprep.subr.mxu0 0.0
  %116 = vmatpush1.msra.mxu0 %v26
  %117 = vmatprep.subr.mxu0 0.0
  %118 = vmatpush1.msra.mxu0 %v27
  %119 = vmatprep.subr.mxu0 0.0
  %120 = vmatpush1.msra.mxu0 0.0
  %121 = vmatprep.subr.mxu0 0.0
  %122 = vmatpush1.msra.mxu0 0.0
  %123 = vmatprep.subr.mxu0 0.0
  %124 = vmatpush1.msra.mxu0 0.0
  %125 = vmatprep.subr.mxu0 0.0
  %126 = vmatpush1.msra.mxu0 0.0
  %127 = vmatprep.subr.mxu0 0.0
  %128 = vmatpush1.msra.mxu0 0.0
  %129 = vmatprep.subr.mxu0 0.0
  %130 = vmatpush1.msra.mxu0 0.0
  %131 = vmatprep.subr.mxu0 0.0
  %132 = vmatpush1.msra.mxu0 0.0
  %133 = vmatprep.subr.mxu0 0.0
  %134 = vmatpush1.msra.mxu0 0.0
  %135 = vmatprep.subr.mxu0 0.0
  %136 = vmatpush1.msra.mxu0 0.0
  %137 = vmatprep.subr.mxu0 0.0
  %138 = vmatpush1.msra.mxu0 0.0
  %139 = vmatprep.subr.mxu0 0.0
  %140 = vmatpush1.msra.mxu0 0.0
  %141 = vmatprep.subr.mxu0 0.0
  %142 = vmatpush1.msra.mxu0 0.0
  %143 = vmatprep.subr.mxu0 0.0
  %144 = vmatpush1.msra.mxu0 0.0
  %145 = vmatprep.subr.mxu0 0.0
  %146 = vmatpush1.msra.mxu0 0.0
  %147 = vmatprep.subr.mxu0 0.0
  %148 = vmatpush1.msra.mxu0 0.0
  %149 = vmatprep.subr.mxu0 0.0
  %150 = vmatpush1.msra.mxu0 0.0
  %151 = vmatprep.subr.mxu0 0.0
  %152 = vmatpush1.msra.mxu0 0.0
  %153 = vmatprep.subr.mxu0 0.0
  %154 = vmatpush1.msra.mxu0 0.0
  %155 = vmatprep.subr.mxu0 0.0
  %156 = vmatpush1.msra.mxu0 0.0
  %157 = vmatprep.subr.mxu0 0.0
  %158 = vmatpush1.msra.mxu0 0.0
  %159 = vmatprep.subr.mxu0 0.0
  %160 = vmatpush1.msra.mxu0 0.0
  %161 = vmatprep.subr.mxu0 0.0
  %162 = vmatpush1.msra.mxu0 0.0
  %163 = vmatprep.subr.mxu0 0.0
  %164 = vmatpush1.msra.mxu0 0.0
  %165 = vmatprep.subr.mxu0 0.0
  %166 = vmatpush1.msra.mxu0 0.0
  %167 = vmatprep.subr.mxu0 0.0
  %168 = vmatpush1.msra.mxu0 0.0
  %169 = vmatprep.subr.mxu0 0.0
  %170 = vmatpush1.msra.mxu0 0.0
  %171 = vmatprep.subr.mxu0 0.0
  %172 = vmatpush1.msra.mxu0 0.0
  %173 = vmatprep.subr.mxu0 0.0
  %174 = vmatpush1.msra.mxu0 0.0
  %175 = vmatprep.mubr.f32.mxu0 0.0
  %176 = vmatmul.mubr.f32.gmra.mrb[0].mxu0 %v109
  %v177 = vpop.f32.mrb[0].mxu0
  %v178 = vadd.f32 0.0, %v177
  %v179 = vpop.f32.mrb[0].mxu0
  %180 = vdwg.mxu0
  %v181 = vadd.f32 %v104, %v178
  %v182 = vmul.f32 %v181, 0.5
  %v183 = vtanh.pop %v182
  %v184 = vmul.f32 %v183, 0.5
  %v185 = vadd.f32 %v184, 0.5
  %187 = vrot.lane.b32.xlu0 %v181, 32
  %v188 = vpop.permute.xlu0 %187
  %v190 = vmul.f32 %v185, %v188
  %192 = vrot.lane.b32.xlu0 %v190, 64
  %v193 = vpop.permute.xlu0 %192
  %v195 = vadd.f32 %v181, %v193
  %v196 = vtanh.pop %v195
  %v197 = vsub.f32 1.0, %v185
  %199 = vrot.lane.b32.xlu0 %v196, 96
  %v200 = vpop.permute.xlu0 %199
  %v202 = vmul.f32 %v197, %v200
  %v203 = vmul.f32 %v185, 0.0
  %v204 = vadd.f32 %v202, %v203
  %206 = vrot.lane.b32.xlu0 %v204, 96
  %v207 = vpop.permute.xlu0 %206
  %v208 = vsel %vm107, %v207, 0
  %210 = vmatprep.subr.mxu0 0.0
  %211 = vmatpush1.msra.mxu0 %v24
  %212 = vmatprep.subr.mxu0 0.0
  %213 = vmatpush1.msra.mxu0 %v25
  %214 = vmatprep.subr.mxu0 0.0
  %215 = vmatpush1.msra.mxu0 %v26
  %216 = vmatprep.subr.mxu0 0.0
  %217 = vmatpush1.msra.mxu0 %v27
  %218 = vmatprep.subr.mxu0 0.0
  %219 = vmatpush1.msra.mxu0 0.0
  %220 = vmatprep.subr.mxu0 0.0
  %221 = vmatpush1.msra.mxu0 0.0
  %222 = vmatprep.subr.mxu0 0.0
  %223 = vmatpush1.msra.mxu0 0.0
  %224 = vmatprep.subr.mxu0 0.0
  %225 = vmatpush1.msra.mxu0 0.0
  %226 = vmatprep.subr.mxu0 0.0
  %227 = vmatpush1.msra.mxu0 0.0
  %228 = vmatprep.subr.mxu0 0.0
  %229 = vmatpush1.msra.mxu0 0.0
  %230 = vmatprep.subr.mxu0 0.0
  %231 = vmatpush1.msra.mxu0 0.0
  %232 = vmatprep.subr.mxu0 0.0
  %233 = vmatpush1.msra.mxu0 0.0
  %234 = vmatprep.subr.mxu0 0.0
  %235 = vmatpush1.msra.mxu0 0.0
  %236 = vmatprep.subr.mxu0 0.0
  %237 = vmatpush1.msra.mxu0 0.0
  %238 = vmatprep.subr.mxu0 0.0
  %239 = vmatpush1.msra.mxu0 0.0
  %240 = vmatprep.subr.mxu0 0.0
  %241 = vmatpush1.msra.mxu0 0.0
  %242 = vmatprep.subr.mxu0 0.0
  %243 = vmatpush1.msra.mxu0 0.0
  %244 = vmatprep.subr.mxu0 0.0
  %245 = vmatpush1.msra.mxu0 0.0
  %246 = vmatprep.subr.mxu0 0.0
  %247 = vmatpush1.msra.mxu0 0.0
  %248 = vmatprep.subr.mxu0 0.0
  %249 = vmatpush1.msra.mxu0 0.0
  %250 = vmatprep.subr.mxu0 0.0
  %251 = vmatpush1.msra.mxu0 0.0
  %252 = vmatprep.subr.mxu0 0.0
  %253 = vmatpush1.msra.mxu0 0.0
  %254 = vmatprep.subr.mxu0 0.0
  %255 = vmatpush1.msra.mxu0 0.0
  %256 = vmatprep.subr.mxu0 0.0
  %257 = vmatpush1.msra.mxu0 0.0
  %258 = vmatprep.subr.mxu0 0.0
  %259 = vmatpush1.msra.mxu0 0.0
  %260 = vmatprep.subr.mxu0 0.0
  %261 = vmatpush1.msra.mxu0 0.0
  %262 = vmatprep.subr.mxu0 0.0
  %263 = vmatpush1.msra.mxu0 0.0
  %264 = vmatprep.subr.mxu0 0.0
  %265 = vmatpush1.msra.mxu0 0.0
  %266 = vmatprep.subr.mxu0 0.0
  %267 = vmatpush1.msra.mxu0 0.0
  %268 = vmatprep.subr.mxu0 0.0
  %269 = vmatpush1.msra.mxu0 0.0
  %270 = vmatprep.subr.mxu0 0.0
  %271 = vmatpush1.msra.mxu0 0.0
  %272 = vmatprep.subr.mxu0 0.0
  %273 = vmatpush1.msra.mxu0 0.0
  %274 = vmatprep.mubr.f32.mxu0 0.0
  %275 = vmatmul.mubr.f32.gmra.mrb[0].mxu0 %v208
  %v276 = vpop.f32.mrb[0].mxu0
  %v277 = vadd.f32 0.0, %v276
  %v278 = vpop.f32.mrb[0].mxu0
  %279 = vdwg.mxu0
  %v281 = vrot.slane %v277, 7
  %v283 = vadd.f32 %v104, %v281
  %v284 = vmul.f32 %v283, 0.5
  %v285 = vtanh.pop %v284
  %v286 = vmul.f32 %v285, 0.5
  %v287 = vadd.f32 %v286, 0.5
  %289 = vrot.lane.b32.xlu0 %v283, 32
  %v290 = vpop.permute.xlu0 %289
  %v292 = vmul.f32 %v287, %v290
  %294 = vrot.lane.b32.xlu0 %v292, 64
  %v295 = vpop.permute.xlu0 %294
  %v297 = vadd.f32 %v283, %v295
  %v298 = vtanh.pop %v297
  %v299 = vsub.f32 1.0, %v287
  %301 = vrot.lane.b32.xlu0 %v298, 96
  %v302 = vpop.permute.xlu0 %301
  %v304 = vmul.f32 %v299, %v302
  %v305 = vrot.slane %v204, 7
  %v307 = vmul.f32 %v287, %v305
  %v308 = vadd.f32 %v304, %v307
  %v310 = vrot.slane %v308, 1
  %311 = vrot.lane.b32.xlu0 %v310, 96
  %v312 = vpop.permute.xlu0 %311
  %v313 = vsel %vm107, %v312, 0
  %315 = vmatprep.subr.mxu0 0.0
  %316 = vmatpush1.msra.mxu0 %v24
  %317 = vmatprep.subr.mxu0 0.0
  %318 = vmatpush1.msra.mxu0 %v25
  %319 = vmatprep.subr.mxu0 0.0
  %320 = vmatpush1.msra.mxu0 %v26
  %321 = vmatprep.subr.mxu0 0.0
  %322 = vmatpush1.msra.mxu0 %v27
  %323 = vmatprep.subr.mxu0 0.0
  %324 = vmatpush1.msra.mxu0 0.0
  %325 = vmatprep.subr.mxu0 0.0
  %326 = vmatpush1.msra.mxu0 0.0
  %327 = vmatprep.subr.mxu0 0.0
  %328 = vmatpush1.msra.mxu0 0.0
  %329 = vmatprep.subr.mxu0 0.0
  %330 = vmatpush1.msra.mxu0 0.0
  %331 = vmatprep.subr.mxu0 0.0
  %332 = vmatpush1.msra.mxu0 0.0
  %333 = vmatprep.subr.mxu0 0.0
  %334 = vmatpush1.msra.mxu0 0.0
  %335 = vmatprep.subr.mxu0 0.0
  %336 = vmatpush1.msra.mxu0 0.0
  %337 = vmatprep.subr.mxu0 0.0
  %338 = vmatpush1.msra.mxu0 0.0
  %339 = vmatprep.subr.mxu0 0.0
  %340 = vmatpush1.msra.mxu0 0.0
  %341 = vmatprep.subr.mxu0 0.0
  %342 = vmatpush1.msra.mxu0 0.0
  %343 = vmatprep.subr.mxu0 0.0
  %344 = vmatpush1.msra.mxu0 0.0
  %345 = vmatprep.subr.mxu0 0.0
  %346 = vmatpush1.msra.mxu0 0.0
  %347 = vmatprep.subr.mxu0 0.0
  %348 = vmatpush1.msra.mxu0 0.0
  %349 = vmatprep.subr.mxu0 0.0
  %350 = vmatpush1.msra.mxu0 0.0
  %351 = vmatprep.subr.mxu0 0.0
  %352 = vmatpush1.msra.mxu0 0.0
  %353 = vmatprep.subr.mxu0 0.0
  %354 = vmatpush1.msra.mxu0 0.0
  %355 = vmatprep.subr.mxu0 0.0
  %356 = vmatpush1.msra.mxu0 0.0
  %357 = vmatprep.subr.mxu0 0.0
  %358 = vmatpush1.msra.mxu0 0.0
  %359 = vmatprep.subr.mxu0 0.0
  %360 = vmatpush1.msra.mxu0 0.0
  %361 = vmatprep.subr.mxu0 0.0
  %362 = vmatpush1.msra.mxu0 0.0
  %363 = vmatprep.subr.mxu0 0.0
  %364 = vmatpush1.msra.mxu0 0.0
  %365 = vmatprep.subr.mxu0 0.0
  %366 = vmatpush1.msra.mxu0 0.0
  %367 = vmatprep.subr.mxu0 0.0
  %368 = vmatpush1.msra.mxu0 0.0
  %369 = vmatprep.subr.mxu0 0.0
  %370 = vmatpush1.msra.mxu0 0.0
  %371 = vmatprep.subr.mxu0 0.0
  %372 = vmatpush1.msra.mxu0 0.0
  %373 = vmatprep.subr.mxu0 0.0
  %374 = vmatpush1.msra.mxu0 0.0
  %375 = vmatprep.subr.mxu0 0.0
  %376 = vmatpush1.msra.mxu0 0.0
  %377 = vmatprep.subr.mxu0 0.0
  %378 = vmatpush1.msra.mxu0 0.0
  %379 = vmatprep.mubr.f32.mxu0 0.0
  %380 = vmatmul.mubr.f32.gmra.mrb[0].mxu0 %v313
  %v381 = vpop.f32.mrb[0].mxu0
  %v382 = vadd.f32 0.0, %v381
  %v383 = vpop.f32.mrb[0].mxu0
  %384 = vdwg.mxu0
  %v386 = vrot.slane %v382, 6
  %v388 = vadd.f32 %v104, %v386
  %v389 = vmul.f32 %v388, 0.5
  %v390 = vtanh.pop %v389
  %v391 = vmul.f32 %v390, 0.5
  %v392 = vadd.f32 %v391, 0.5
  %394 = vrot.lane.b32.xlu0 %v388, 32
  %v395 = vpop.permute.xlu0 %394
  %v397 = vmul.f32 %v392, %v395
  %399 = vrot.lane.b32.xlu0 %v397, 64
  %v400 = vpop.permute.xlu0 %399
  %v402 = vadd.f32 %v388, %v400
  %v403 = vtanh.pop %v402
  %v404 = vsub.f32 1.0, %v392
  %406 = vrot.lane.b32.xlu0 %v403, 96
  %v407 = vpop.permute.xlu0 %406
  %v409 = vmul.f32 %v404, %v407
  %v410 = vrot.slane %v308, 7
  %v412 = vmul.f32 %v392, %v410
  %v413 = vadd.f32 %v409, %v412
  %v415 = vrot.slane %v413, 2
  %416 = vrot.lane.b32.xlu0 %v415, 96
  %v417 = vpop.permute.xlu0 %416
  %v418 = vsel %vm107, %v417, 0
  %420 = vmatprep.subr.mxu0 0.0
  %421 = vmatpush1.msra.mxu0 %v24
  %422 = vmatprep.subr.mxu0 0.0
  %423 = vmatpush1.msra.mxu0 %v25
  %424 = vmatprep.subr.mxu0 0.0
  %425 = vmatpush1.msra.mxu0 %v26
  %426 = vmatprep.subr.mxu0 0.0
  %427 = vmatpush1.msra.mxu0 %v27
  %428 = vmatprep.subr.mxu0 0.0
  %429 = vmatpush1.msra.mxu0 0.0
  %430 = vmatprep.subr.mxu0 0.0
  %431 = vmatpush1.msra.mxu0 0.0
  %432 = vmatprep.subr.mxu0 0.0
  %433 = vmatpush1.msra.mxu0 0.0
  %434 = vmatprep.subr.mxu0 0.0
  %435 = vmatpush1.msra.mxu0 0.0
  %436 = vmatprep.subr.mxu0 0.0
  %437 = vmatpush1.msra.mxu0 0.0
  %438 = vmatprep.subr.mxu0 0.0
  %439 = vmatpush1.msra.mxu0 0.0
  %440 = vmatprep.subr.mxu0 0.0
  %441 = vmatpush1.msra.mxu0 0.0
  %442 = vmatprep.subr.mxu0 0.0
  %443 = vmatpush1.msra.mxu0 0.0
  %444 = vmatprep.subr.mxu0 0.0
  %445 = vmatpush1.msra.mxu0 0.0
  %446 = vmatprep.subr.mxu0 0.0
  %447 = vmatpush1.msra.mxu0 0.0
  %448 = vmatprep.subr.mxu0 0.0
  %449 = vmatpush1.msra.mxu0 0.0
  %450 = vmatprep.subr.mxu0 0.0
  %451 = vmatpush1.msra.mxu0 0.0
  %452 = vmatprep.subr.mxu0 0.0
  %453 = vmatpush1.msra.mxu0 0.0
  %454 = vmatprep.subr.mxu0 0.0
  %455 = vmatpush1.msra.mxu0 0.0
  %456 = vmatprep.subr.mxu0 0.0
  %457 = vmatpush1.msra.mxu0 0.0
  %458 = vmatprep.subr.mxu0 0.0
  %459 = vmatpush1.msra.mxu0 0.0
  %460 = vmatprep.subr.mxu0 0.0
  %461 = vmatpush1.msra.mxu0 0.0
  %462 = vmatprep.subr.mxu0 0.0
  %463 = vmatpush1.msra.mxu0 0.0
  %464 = vmatprep.subr.mxu0 0.0
  %465 = vmatpush1.msra.mxu0 0.0
  %466 = vmatprep.subr.mxu0 0.0
  %467 = vmatpush1.msra.mxu0 0.0
  %468 = vmatprep.subr.mxu0 0.0
  %469 = vmatpush1.msra.mxu0 0.0
  %470 = vmatprep.subr.mxu0 0.0
  %471 = vmatpush1.msra.mxu0 0.0
  %472 = vmatprep.subr.mxu0 0.0
  %473 = vmatpush1.msra.mxu0 0.0
  %474 = vmatprep.subr.mxu0 0.0
  %475 = vmatpush1.msra.mxu0 0.0
  %476 = vmatprep.subr.mxu0 0.0
  %477 = vmatpush1.msra.mxu0 0.0
  %478 = vmatprep.subr.mxu0 0.0
  %479 = vmatpush1.msra.mxu0 0.0
  %480 = vmatprep.subr.mxu0 0.0
  %481 = vmatpush1.msra.mxu0 0.0
  %482 = vmatprep.subr.mxu0 0.0
  %483 = vmatpush1.msra.mxu0 0.0
  %484 = vmatprep.mubr.f32.mxu0 0.0
  %485 = vmatmul.mubr.f32.gmra.mrb[0].mxu0 %v418
  %v486 = vpop.f32.mrb[0].mxu0
  %v487 = vadd.f32 0.0, %v486
  %v488 = vpop.f32.mrb[0].mxu0
  %489 = vdwg.mxu0
  %v491 = vrot.slane %v487, 5
  %v493 = vadd.f32 %v104, %v491
  %v494 = vmul.f32 %v493, 0.5
  %v495 = vtanh.pop %v494
  %v496 = vmul.f32 %v495, 0.5
  %v497 = vadd.f32 %v496, 0.5
  %499 = vrot.lane.b32.xlu0 %v493, 32
  %v500 = vpop.permute.xlu0 %499
  %v502 = vmul.f32 %v497, %v500
  %504 = vrot.lane.b32.xlu0 %v502, 64
  %v505 = vpop.permute.xlu0 %504
  %v507 = vadd.f32 %v493, %v505
  %v508 = vtanh.pop %v507
  %v509 = vsub.f32 1.0, %v497
  %511 = vrot.lane.b32.xlu0 %v508, 96
  %v512 = vpop.permute.xlu0 %511
  %v514 = vmul.f32 %v509, %v512
  %v515 = vrot.slane %v413, 7
  %v517 = vmul.f32 %v497, %v515
  %v518 = vadd.f32 %v514, %v517
  %v520 = vrot.slane %v518, 3
  %521 = vrot.lane.b32.xlu0 %v520, 96
  %v522 = vpop.permute.xlu0 %521
  %v523 = vsel %vm107, %v522, 0
  %525 = vmatprep.subr.mxu0 0.0
  %526 = vmatpush1.msra.mxu0 %v24
  %527 = vmatprep.subr.mxu0 0.0
  %528 = vmatpush1.msra.mxu0 %v25
  %529 = vmatprep.subr.mxu0 0.0
  %530 = vmatpush1.msra.mxu0 %v26
  %531 = vmatprep.subr.mxu0 0.0
  %532 = vmatpush1.msra.mxu0 %v27
  %533 = vmatprep.subr.mxu0 0.0
  %534 = vmatpush1.msra.mxu0 0.0
  %535 = vmatprep.subr.mxu0 0.0
  %536 = vmatpush1.msra.mxu0 0.0
  %537 = vmatprep.subr.mxu0 0.0
  %538 = vmatpush1.msra.mxu0 0.0
  %539 = vmatprep.subr.mxu0 0.0
  %540 = vmatpush1.msra.mxu0 0.0
  %541 = vmatprep.subr.mxu0 0.0
  %542 = vmatpush1.msra.mxu0 0.0
  %543 = vmatprep.subr.mxu0 0.0
  %544 = vmatpush1.msra.mxu0 0.0
  %545 = vmatprep.subr.mxu0 0.0
  %546 = vmatpush1.msra.mxu0 0.0
  %547 = vmatprep.subr.mxu0 0.0
  %548 = vmatpush1.msra.mxu0 0.0
  %549 = vmatprep.subr.mxu0 0.0
  %550 = vmatpush1.msra.mxu0 0.0
  %551 = vmatprep.subr.mxu0 0.0
  %552 = vmatpush1.msra.mxu0 0.0
  %553 = vmatprep.subr.mxu0 0.0
  %554 = vmatpush1.msra.mxu0 0.0
  %555 = vmatprep.subr.mxu0 0.0
  %556 = vmatpush1.msra.mxu0 0.0
  %557 = vmatprep.subr.mxu0 0.0
  %558 = vmatpush1.msra.mxu0 0.0
  %559 = vmatprep.subr.mxu0 0.0
  %560 = vmatpush1.msra.mxu0 0.0
  %561 = vmatprep.subr.mxu0 0.0
  %562 = vmatpush1.msra.mxu0 0.0
  %563 = vmatprep.subr.mxu0 0.0
  %564 = vmatpush1.msra.mxu0 0.0
  %565 = vmatprep.subr.mxu0 0.0
  %566 = vmatpush1.msra.mxu0 0.0
  %567 = vmatprep.subr.mxu0 0.0
  %568 = vmatpush1.msra.mxu0 0.0
  %569 = vmatprep.subr.mxu0 0.0
  %570 = vmatpush1.msra.mxu0 0.0
  %571 = vmatprep.subr.mxu0 0.0
  %572 = vmatpush1.msra.mxu0 0.0
  %573 = vmatprep.subr.mxu0 0.0
  %574 = vmatpush1.msra.mxu0 0.0
  %575 = vmatprep.subr.mxu0 0.0
  %576 = vmatpush1.msra.mxu0 0.0
  %577 = vmatprep.subr.mxu0 0.0
  %578 = vmatpush1.msra.mxu0 0.0
  %579 = vmatprep.subr.mxu0 0.0
  %580 = vmatpush1.msra.mxu0 0.0
  %581 = vmatprep.subr.mxu0 0.0
  %582 = vmatpush1.msra.mxu0 0.0
  %583 = vmatprep.subr.mxu0 0.0
  %584 = vmatpush1.msra.mxu0 0.0
  %585 = vmatprep.subr.mxu0 0.0
  %586 = vmatpush1.msra.mxu0 0.0
  %587 = vmatprep.subr.mxu0 0.0
  %588 = vmatpush1.msra.mxu0 0.0
  %589 = vmatprep.mubr.f32.mxu0 0.0
  %590 = vmatmul.mubr.f32.gmra.mrb[0].mxu0 %v523
  %v591 = vpop.f32.mrb[0].mxu0
  %v592 = vadd.f32 0.0, %v591
  %v593 = vpop.f32.mrb[0].mxu0
  %594 = vdwg.mxu0
  %v596 = vrot.slane %v592, 4
  %v598 = vadd.f32 %v104, %v596
  %v599 = vmul.f32 %v598, 0.5
  %v600 = vtanh.pop %v599
  %v601 = vmul.f32 %v600, 0.5
  %v602 = vadd.f32 %v601, 0.5
  %604 = vrot.lane.b32.xlu0 %v598, 32
  %v605 = vpop.permute.xlu0 %604
  %v607 = vmul.f32 %v602, %v605
  %609 = vrot.lane.b32.xlu0 %v607, 64
  %v610 = vpop.permute.xlu0 %609
  %v612 = vadd.f32 %v598, %v610
  %v613 = vtanh.pop %v612
  %v614 = vsub.f32 1.0, %v602
  %616 = vrot.lane.b32.xlu0 %v613, 96
  %v617 = vpop.permute.xlu0 %616
  %v619 = vmul.f32 %v614, %v617
  %v620 = vrot.slane %v518, 7
  %v622 = vmul.f32 %v602, %v620
  %v623 = vadd.f32 %v619, %v622
  %v625 = vrot.slane %v623, 4
  %626 = vrot.lane.b32.xlu0 %v625, 96
  %v627 = vpop.permute.xlu0 %626
  %v628 = vsel %vm107, %v627, 0
  %630 = vmatprep.subr.mxu0 0.0
  %631 = vmatpush1.msra.mxu0 %v24
  %632 = vmatprep.subr.mxu0 0.0
  %633 = vmatpush1.msra.mxu0 %v25
  %634 = vmatprep.subr.mxu0 0.0
  %635 = vmatpush1.msra.mxu0 %v26
  %636 = vmatprep.subr.mxu0 0.0
  %637 = vmatpush1.msra.mxu0 %v27
  %638 = vmatprep.subr.mxu0 0.0
  %639 = vmatpush1.msra.mxu0 0.0
  %640 = vmatprep.subr.mxu0 0.0
  %641 = vmatpush1.msra.mxu0 0.0
  %642 = vmatprep.subr.mxu0 0.0
  %643 = vmatpush1.msra.mxu0 0.0
  %644 = vmatprep.subr.mxu0 0.0
  %645 = vmatpush1.msra.mxu0 0.0
  %646 = vmatprep.subr.mxu0 0.0
  %647 = vmatpush1.msra.mxu0 0.0
  %648 = vmatprep.subr.mxu0 0.0
  %649 = vmatpush1.msra.mxu0 0.0
  %650 = vmatprep.subr.mxu0 0.0
  %651 = vmatpush1.msra.mxu0 0.0
  %652 = vmatprep.subr.mxu0 0.0
  %653 = vmatpush1.msra.mxu0 0.0
  %654 = vmatprep.subr.mxu0 0.0
  %655 = vmatpush1.msra.mxu0 0.0
  %656 = vmatprep.subr.mxu0 0.0
  %657 = vmatpush1.msra.mxu0 0.0
  %658 = vmatprep.subr.mxu0 0.0
  %659 = vmatpush1.msra.mxu0 0.0
  %660 = vmatprep.subr.mxu0 0.0
  %661 = vmatpush1.msra.mxu0 0.0
  %662 = vmatprep.subr.mxu0 0.0
  %663 = vmatpush1.msra.mxu0 0.0
  %664 = vmatprep.subr.mxu0 0.0
  %665 = vmatpush1.msra.mxu0 0.0
  %666 = vmatprep.subr.mxu0 0.0
  %667 = vmatpush1.msra.mxu0 0.0
  %668 = vmatprep.subr.mxu0 0.0
  %669 = vmatpush1.msra.mxu0 0.0
  %670 = vmatprep.subr.mxu0 0.0
  %671 = vmatpush1.msra.mxu0 0.0
  %672 = vmatprep.subr.mxu0 0.0
  %673 = vmatpush1.msra.mxu0 0.0
  %674 = vmatprep.subr.mxu0 0.0
  %675 = vmatpush1.msra.mxu0 0.0
  %676 = vmatprep.subr.mxu0 0.0
  %677 = vmatpush1.msra.mxu0 0.0
  %678 = vmatprep.subr.mxu0 0.0
  %679 = vmatpush1.msra.mxu0 0.0
  %680 = vmatprep.subr.mxu0 0.0
  %681 = vmatpush1.msra.mxu0 0.0
  %682 = vmatprep.subr.mxu0 0.0
  %683 = vmatpush1.msra.mxu0 0.0
  %684 = vmatprep.subr.mxu0 0.0
  %685 = vmatpush1.msra.mxu0 0.0
  %686 = vmatprep.subr.mxu0 0.0
  %687 = vmatpush1.msra.mxu0 0.0
  %688 = vmatprep.subr.mxu0 0.0
  %689 = vmatpush1.msra.mxu0 0.0
  %690 = vmatprep.subr.mxu0 0.0
  %691 = vmatpush1.msra.mxu0 0.0
  %692 = vmatprep.subr.mxu0 0.0
  %693 = vmatpush1.msra.mxu0 0.0
  %694 = vmatprep.mubr.f32.mxu0 0.0
  %695 = vmatmul.mubr.f32.gmra.mrb[0].mxu0 %v628
  %v696 = vpop.f32.mrb[0].mxu0
  %v697 = vadd.f32 0.0, %v696
  %v698 = vpop.f32.mrb[0].mxu0
  %699 = vdwg.mxu0
  %v701 = vrot.slane %v697, 3
  %v703 = vadd.f32 %v104, %v701
  %v704 = vmul.f32 %v703, 0.5
  %v705 = vtanh.pop %v704
  %v706 = vmul.f32 %v705, 0.5
  %v707 = vadd.f32 %v706, 0.5
  %709 = vrot.lane.b32.xlu0 %v703, 32
  %v710 = vpop.permute.xlu0 %709
  %v712 = vmul.f32 %v707, %v710
  %714 = vrot.lane.b32.xlu0 %v712, 64
  %v715 = vpop.permute.xlu0 %714
  %v717 = vadd.f32 %v703, %v715
  %v718 = vtanh.pop %v717
  %v719 = vsub.f32 1.0, %v707
  %721 = vrot.lane.b32.xlu0 %v718, 96
  %v722 = vpop.permute.xlu0 %721
  %v724 = vmul.f32 %v719, %v722
  %v725 = vrot.slane %v623, 7
  %v727 = vmul.f32 %v707, %v725
  %v728 = vadd.f32 %v724, %v727
  %v730 = vrot.slane %v728, 5
  %731 = vrot.lane.b32.xlu0 %v730, 96
  %v732 = vpop.permute.xlu0 %731
  %v733 = vsel %vm107, %v732, 0
  %735 = vmatprep.subr.mxu0 0.0
  %736 = vmatpush1.msra.mxu0 %v24
  %737 = vmatprep.subr.mxu0 0.0
  %738 = vmatpush1.msra.mxu0 %v25
  %739 = vmatprep.subr.mxu0 0.0
  %740 = vmatpush1.msra.mxu0 %v26
  %741 = vmatprep.subr.mxu0 0.0
  %742 = vmatpush1.msra.mxu0 %v27
  %743 = vmatprep.subr.mxu0 0.0
  %744 = vmatpush1.msra.mxu0 0.0
  %745 = vmatprep.subr.mxu0 0.0
  %746 = vmatpush1.msra.mxu0 0.0
  %747 = vmatprep.subr.mxu0 0.0
  %748 = vmatpush1.msra.mxu0 0.0
  %749 = vmatprep.subr.mxu0 0.0
  %750 = vmatpush1.msra.mxu0 0.0
  %751 = vmatprep.subr.mxu0 0.0
  %752 = vmatpush1.msra.mxu0 0.0
  %753 = vmatprep.subr.mxu0 0.0
  %754 = vmatpush1.msra.mxu0 0.0
  %755 = vmatprep.subr.mxu0 0.0
  %756 = vmatpush1.msra.mxu0 0.0
  %757 = vmatprep.subr.mxu0 0.0
  %758 = vmatpush1.msra.mxu0 0.0
  %759 = vmatprep.subr.mxu0 0.0
  %760 = vmatpush1.msra.mxu0 0.0
  %761 = vmatprep.subr.mxu0 0.0
  %762 = vmatpush1.msra.mxu0 0.0
  %763 = vmatprep.subr.mxu0 0.0
  %764 = vmatpush1.msra.mxu0 0.0
  %765 = vmatprep.subr.mxu0 0.0
  %766 = vmatpush1.msra.mxu0 0.0
  %767 = vmatprep.subr.mxu0 0.0
  %768 = vmatpush1.msra.mxu0 0.0
  %769 = vmatprep.subr.mxu0 0.0
  %770 = vmatpush1.msra.mxu0 0.0
  %771 = vmatprep.subr.mxu0 0.0
  %772 = vmatpush1.msra.mxu0 0.0
  %773 = vmatprep.subr.mxu0 0.0
  %774 = vmatpush1.msra.mxu0 0.0
  %775 = vmatprep.subr.mxu0 0.0
  %776 = vmatpush1.msra.mxu0 0.0
  %777 = vmatprep.subr.mxu0 0.0
  %778 = vmatpush1.msra.mxu0 0.0
  %779 = vmatprep.subr.mxu0 0.0
  %780 = vmatpush1.msra.mxu0 0.0
  %781 = vmatprep.subr.mxu0 0.0
  %782 = vmatpush1.msra.mxu0 0.0
  %783 = vmatprep.subr.mxu0 0.0
  %784 = vmatpush1.msra.mxu0 0.0
  %785 = vmatprep.subr.mxu0 0.0
  %786 = vmatpush1.msra.mxu0 0.0
  %787 = vmatprep.subr.mxu0 0.0
  %788 = vmatpush1.msra.mxu0 0.0
  %789 = vmatprep.subr.mxu0 0.0
  %790 = vmatpush1.msra.mxu0 0.0
  %791 = vmatprep.subr.mxu0 0.0
  %792 = vmatpush1.msra.mxu0 0.0
  %793 = vmatprep.subr.mxu0 0.0
  %794 = vmatpush1.msra.mxu0 0.0
  %795 = vmatprep.subr.mxu0 0.0
  %796 = vmatpush1.msra.mxu0 0.0
  %797 = vmatprep.subr.mxu0 0.0
  %798 = vmatpush1.msra.mxu0 0.0
  %799 = vmatprep.mubr.f32.mxu0 0.0
  %800 = vmatmul.mubr.f32.gmra.mrb[0].mxu0 %v733
  %v801 = vpop.f32.mrb[0].mxu0
  %v802 = vadd.f32 0.0, %v801
  %v803 = vpop.f32.mrb[0].mxu0
  %804 = vdwg.mxu0
  %v806 = vrot.slane %v802, 2
  %v808 = vadd.f32 %v104, %v806
  %v809 = vmul.f32 %v808, 0.5
  %v810 = vtanh.pop %v809
  %v811 = vmul.f32 %v810, 0.5
  %v812 = vadd.f32 %v811, 0.5
  %814 = vrot.lane.b32.xlu0 %v808, 32
  %v815 = vpop.permute.xlu0 %814
  %v817 = vmul.f32 %v812, %v815
  %819 = vrot.lane.b32.xlu0 %v817, 64
  %v820 = vpop.permute.xlu0 %819
  %v822 = vadd.f32 %v808, %v820
  %v823 = vtanh.pop %v822
  %v824 = vsub.f32 1.0, %v812
  %826 = vrot.lane.b32.xlu0 %v823, 96
  %v827 = vpop.permute.xlu0 %826
  %v829 = vmul.f32 %v824, %v827
  %v830 = vrot.slane %v728, 7
  %v832 = vmul.f32 %v812, %v830
  %v833 = vadd.f32 %v829, %v832
  %v835 = vrot.slane %v833, 6
  %836 = vrot.lane.b32.xlu0 %v835, 96
  %v837 = vpop.permute.xlu0 %836
  %v838 = vsel %vm107, %v837, 0
  %840 = vmatprep.subr.mxu0 0.0
  %841 = vmatpush1.msra.mxu0 %v24
  %842 = vmatprep.subr.mxu0 0.0
  %843 = vmatpush1.msra.mxu0 %v25
  %844 = vmatprep.subr.mxu0 0.0
  %845 = vmatpush1.msra.mxu0 %v26
  %846 = vmatprep.subr.mxu0 0.0
  %847 = vmatpush1.msra.mxu0 %v27
  %848 = vmatprep.subr.mxu0 0.0
  %849 = vmatpush1.msra.mxu0 0.0
  %850 = vmatprep.subr.mxu0 0.0
  %851 = vmatpush1.msra.mxu0 0.0
  %852 = vmatprep.subr.mxu0 0.0
  %853 = vmatpush1.msra.mxu0 0.0
  %854 = vmatprep.subr.mxu0 0.0
  %855 = vmatpush1.msra.mxu0 0.0
  %856 = vmatprep.subr.mxu0 0.0
  %857 = vmatpush1.msra.mxu0 0.0
  %858 = vmatprep.subr.mxu0 0.0
  %859 = vmatpush1.msra.mxu0 0.0
  %860 = vmatprep.subr.mxu0 0.0
  %861 = vmatpush1.msra.mxu0 0.0
  %862 = vmatprep.subr.mxu0 0.0
  %863 = vmatpush1.msra.mxu0 0.0
  %864 = vmatprep.subr.mxu0 0.0
  %865 = vmatpush1.msra.mxu0 0.0
  %866 = vmatprep.subr.mxu0 0.0
  %867 = vmatpush1.msra.mxu0 0.0
  %868 = vmatprep.subr.mxu0 0.0
  %869 = vmatpush1.msra.mxu0 0.0
  %870 = vmatprep.subr.mxu0 0.0
  %871 = vmatpush1.msra.mxu0 0.0
  %872 = vmatprep.subr.mxu0 0.0
  %873 = vmatpush1.msra.mxu0 0.0
  %874 = vmatprep.subr.mxu0 0.0
  %875 = vmatpush1.msra.mxu0 0.0
  %876 = vmatprep.subr.mxu0 0.0
  %877 = vmatpush1.msra.mxu0 0.0
  %878 = vmatprep.subr.mxu0 0.0
  %879 = vmatpush1.msra.mxu0 0.0
  %880 = vmatprep.subr.mxu0 0.0
  %881 = vmatpush1.msra.mxu0 0.0
  %882 = vmatprep.subr.mxu0 0.0
  %883 = vmatpush1.msra.mxu0 0.0
  %884 = vmatprep.subr.mxu0 0.0
  %885 = vmatpush1.msra.mxu0 0.0
  %886 = vmatprep.subr.mxu0 0.0
  %887 = vmatpush1.msra.mxu0 0.0
  %888 = vmatprep.subr.mxu0 0.0
  %889 = vmatpush1.msra.mxu0 0.0
  %890 = vmatprep.subr.mxu0 0.0
  %891 = vmatpush1.msra.mxu0 0.0
  %892 = vmatprep.subr.mxu0 0.0
  %893 = vmatpush1.msra.mxu0 0.0
  %894 = vmatprep.subr.mxu0 0.0
  %895 = vmatpush1.msra.mxu0 0.0
  %896 = vmatprep.subr.mxu0 0.0
  %897 = vmatpush1.msra.mxu0 0.0
  %898 = vmatprep.subr.mxu0 0.0
  %899 = vmatpush1.msra.mxu0 0.0
  %900 = vmatprep.subr.mxu0 0.0
  %901 = vmatpush1.msra.mxu0 0.0
  %902 = vmatprep.subr.mxu0 0.0
  %903 = vmatpush1.msra.mxu0 0.0
  %904 = vmatprep.mubr.f32.mxu0 0.0
  %905 = vmatmul.mubr.f32.gmra.mrb[0].mxu0 %v838
  %v906 = vpop.f32.mrb[0].mxu0
  %v907 = vadd.f32 0.0, %v906
  %v908 = vpop.f32.mrb[0].mxu0
  %909 = vdwg.mxu0
  %v911 = vrot.slane %v907, 1
  %v913 = vadd.f32 %v104, %v911
  %v914 = vmul.f32 %v913, 0.5
  %v915 = vtanh.pop %v914
  %v916 = vmul.f32 %v915, 0.5
  %v917 = vadd.f32 %v916, 0.5
  %919 = vrot.lane.b32.xlu0 %v913, 32
  %v920 = vpop.permute.xlu0 %919
  %v922 = vmul.f32 %v917, %v920
  %924 = vrot.lane.b32.xlu0 %v922, 64
  %v925 = vpop.permute.xlu0 %924
  %v927 = vadd.f32 %v913, %v925
  %v928 = vtanh.pop %v927
  %v929 = vsub.f32 1.0, %v917
  %931 = vrot.lane.b32.xlu0 %v928, 96
  %v932 = vpop.permute.xlu0 %931
  %v934 = vmul.f32 %v929, %v932
  %v935 = vrot.slane %v833, 7
  %v937 = vmul.f32 %v917, %v935
  %v938 = vadd.f32 %v934, %v937
  %v939 = vld [vmem:[%s1 + $0x40] sm:$0xff]
  %v940 = vld [vmem:[%s1 + $0x48] sm:$0xff]
  %v941 = vld [vmem:[%s1 + $0x50] sm:$0xff]
  %v942 = vld [vmem:[%s1 + $0x58] sm:$0xff]
  %v943 = vld [vmem:[%s1 + $0x60] sm:$0xff]
  %v944 = vld [vmem:[%s1 + $0x68] sm:$0xff]
  %v945 = vld [vmem:[%s1 + $0x70] sm:$0xff]
  %v946 = vld [vmem:[%s1 + $0x78] sm:$0xff]
  %v947 = vld [vmem:[%s1 + $0x38] sm:$0x1]
  %v949 = vsel %vm107, %v207, 0.0
  %vm950 = vcmask 523264
  %v952 = vsel %vm950, %v949, 0
  %954 = vmatprep.subr.mxu0 0.0
  %955 = vmatpush1.msra.mxu0 %v939
  %956 = vmatprep.subr.mxu0 0.0
  %957 = vmatpush1.msra.mxu0 %v940
  %958 = vmatprep.subr.mxu0 0.0
  %959 = vmatpush1.msra.mxu0 %v941
  %960 = vmatprep.subr.mxu0 0.0
  %961 = vmatpush1.msra.mxu0 %v942
  %962 = vmatprep.subr.mxu0 0.0
  %963 = vmatpush1.msra.mxu0 %v943
  %964 = vmatprep.subr.mxu0 0.0
  %965 = vmatpush1.msra.mxu0 %v944
  %966 = vmatprep.subr.mxu0 0.0
  %967 = vmatpush1.msra.mxu0 %v945
  %968 = vmatprep.subr.mxu0 0.0
  %969 = vmatpush1.msra.mxu0 %v946
  %970 = vmatprep.subr.mxu0 0.0
  %971 = vmatpush1.msra.mxu0 0.0
  %972 = vmatprep.subr.mxu0 0.0
  %973 = vmatpush1.msra.mxu0 0.0
  %974 = vmatprep.subr.mxu0 0.0
  %975 = vmatpush1.msra.mxu0 0.0
  %976 = vmatprep.subr.mxu0 0.0
  %977 = vmatpush1.msra.mxu0 0.0
  %978 = vmatprep.subr.mxu0 0.0
  %979 = vmatpush1.msra.mxu0 0.0
  %980 = vmatprep.subr.mxu0 0.0
  %981 = vmatpush1.msra.mxu0 0.0
  %982 = vmatprep.subr.mxu0 0.0
  %983 = vmatpush1.msra.mxu0 0.0
  %984 = vmatprep.subr.mxu0 0.0
  %985 = vmatpush1.msra.mxu0 0.0
  %986 = vmatprep.subr.mxu0 0.0
  %987 = vmatpush1.msra.mxu0 0.0
  %988 = vmatprep.subr.mxu0 0.0
  %989 = vmatpush1.msra.mxu0 0.0
  %990 = vmatprep.subr.mxu0 0.0
  %991 = vmatpush1.msra.mxu0 0.0
  %992 = vmatprep.subr.mxu0 0.0
  %993 = vmatpush1.msra.mxu0 0.0
  %994 = vmatprep.subr.mxu0 0.0
  %995 = vmatpush1.msra.mxu0 0.0
  %996 = vmatprep.subr.mxu0 0.0
  %997 = vmatpush1.msra.mxu0 0.0
  %998 = vmatprep.subr.mxu0 0.0
  %999 = vmatpush1.msra.mxu0 0.0
  %1000 = vmatprep.subr.mxu0 0.0
  %1001 = vmatpush1.msra.mxu0 0.0
  %1002 = vmatprep.subr.mxu0 0.0
  %1003 = vmatpush1.msra.mxu0 0.0
  %1004 = vmatprep.subr.mxu0 0.0
  %1005 = vmatpush1.msra.mxu0 0.0
  %1006 = vmatprep.subr.mxu0 0.0
  %1007 = vmatpush1.msra.mxu0 0.0
  %1008 = vmatprep.subr.mxu0 0.0
  %1009 = vmatpush1.msra.mxu0 0.0
  %1010 = vmatprep.subr.mxu0 0.0
  %1011 = vmatpush1.msra.mxu0 0.0
  %1012 = vmatprep.subr.mxu0 0.0
  %1013 = vmatpush1.msra.mxu0 0.0
  %1014 = vmatprep.subr.mxu0 0.0
  %1015 = vmatpush1.msra.mxu0 0.0
  %1016 = vmatprep.subr.mxu0 0.0
  %1017 = vmatpush1.msra.mxu0 0.0
  %1018 = vmatprep.mubr.f32.mxu0 0.0
  %1019 = vmatmul.mubr.f32.gmra.mrb[0].mxu0 %v952
  %v1020 = vpop.f32.mrb[0].mxu0
  %v1021 = vadd.f32 %v947, %v1020
  %v1022 = vpop.f32.mrb[0].mxu0
  %1023 = vdwg.mxu0
  %v1024 = vmul.f32 %v1021, 0.5
  %v1025 = vtanh.pop %v1024
  %v1026 = vmul.f32 %v1025, 0.5
  %v1027 = vadd.f32 %v1026, 0.5
  %1029 = vrot.lane.b32.xlu0 %v1021, 32
  %v1030 = vpop.permute.xlu0 %1029
  %v1032 = vmul.f32 %v1027, %v1030
  %1034 = vrot.lane.b32.xlu0 %v1032, 64
  %v1035 = vpop.permute.xlu0 %1034
  %v1037 = vadd.f32 %v1021, %v1035
  %v1038 = vtanh.pop %v1037
  %v1039 = vsub.f32 1.0, %v1027
  %1041 = vrot.lane.b32.xlu0 %v1038, 96
  %v1042 = vpop.permute.xlu0 %1041
  %v1044 = vmul.f32 %v1039, %v1042
  %v1045 = vmul.f32 %v1027, 0.0
  %v1046 = vadd.f32 %v1044, %v1045
  %1047 = vrot.lane.b32.xlu0 %v308, 96
  %v1048 = vpop.permute.xlu0 %1047
  %v1051 = vrot.slane %v1046, 7
  %v1053 = vsel %vm107, %v1048, %v1051
  %v1055 = vrot.slane %v1053, 1
  %v1056 = vsel %vm950, %v1055, 0
  %1058 = vmatprep.subr.mxu0 0.0
  %1059 = vmatpush1.msra.mxu0 %v939
  %1060 = vmatprep.subr.mxu0 0.0
  %1061 = vmatpush1.msra.mxu0 %v940
  %1062 = vmatprep.subr.mxu0 0.0
  %1063 = vmatpush1.msra.mxu0 %v941
  %1064 = vmatprep.subr.mxu0 0.0
  %1065 = vmatpush1.msra.mxu0 %v942
  %1066 = vmatprep.subr.mxu0 0.0
  %1067 = vmatpush1.msra.mxu0 %v943
  %1068 = vmatprep.subr.mxu0 0.0
  %1069 = vmatpush1.msra.mxu0 %v944
  %1070 = vmatprep.subr.mxu0 0.0
  %1071 = vmatpush1.msra.mxu0 %v945
  %1072 = vmatprep.subr.mxu0 0.0
  %1073 = vmatpush1.msra.mxu0 %v946
  %1074 = vmatprep.subr.mxu0 0.0
  %1075 = vmatpush1.msra.mxu0 0.0
  %1076 = vmatprep.subr.mxu0 0.0
  %1077 = vmatpush1.msra.mxu0 0.0
  %1078 = vmatprep.subr.mxu0 0.0
  %1079 = vmatpush1.msra.mxu0 0.0
  %1080 = vmatprep.subr.mxu0 0.0
  %1081 = vmatpush1.msra.mxu0 0.0
  %1082 = vmatprep.subr.mxu0 0.0
  %1083 = vmatpush1.msra.mxu0 0.0
  %1084 = vmatprep.subr.mxu0 0.0
  %1085 = vmatpush1.msra.mxu0 0.0
  %1086 = vmatprep.subr.mxu0 0.0
  %1087 = vmatpush1.msra.mxu0 0.0
  %1088 = vmatprep.subr.mxu0 0.0
  %1089 = vmatpush1.msra.mxu0 0.0
  %1090 = vmatprep.subr.mxu0 0.0
  %1091 = vmatpush1.msra.mxu0 0.0
  %1092 = vmatprep.subr.mxu0 0.0
  %1093 = vmatpush1.msra.mxu0 0.0
  %1094 = vmatprep.subr.mxu0 0.0
  %1095 = vmatpush1.msra.mxu0 0.0
  %1096 = vmatprep.subr.mxu0 0.0
  %1097 = vmatpush1.msra.mxu0 0.0
  %1098 = vmatprep.subr.mxu0 0.0
  %1099 = vmatpush1.msra.mxu0 0.0
  %1100 = vmatprep.subr.mxu0 0.0
  %1101 = vmatpush1.msra.mxu0 0.0
  %1102 = vmatprep.subr.mxu0 0.0
  %1103 = vmatpush1.msra.mxu0 0.0
  %1104 = vmatprep.subr.mxu0 0.0
  %1105 = vmatpush1.msra.mxu0 0.0
  %1106 = vmatprep.subr.mxu0 0.0
  %1107 = vmatpush1.msra.mxu0 0.0
  %1108 = vmatprep.subr.mxu0 0.0
  %1109 = vmatpush1.msra.mxu0 0.0
  %1110 = vmatprep.subr.mxu0 0.0
  %1111 = vmatpush1.msra.mxu0 0.0
  %1112 = vmatprep.subr.mxu0 0.0
  %1113 = vmatpush1.msra.mxu0 0.0
  %1114 = vmatprep.subr.mxu0 0.0
  %1115 = vmatpush1.msra.mxu0 0.0
  %1116 = vmatprep.subr.mxu0 0.0
  %1117 = vmatpush1.msra.mxu0 0.0
  %1118 = vmatprep.subr.mxu0 0.0
  %1119 = vmatpush1.msra.mxu0 0.0
  %1120 = vmatprep.subr.mxu0 0.0
  %1121 = vmatpush1.msra.mxu0 0.0
  %1122 = vmatprep.mubr.f32.mxu0 0.0
  %1123 = vmatmul.mubr.f32.gmra.mrb[0].mxu0 %v1056
  %v1124 = vpop.f32.mrb[0].mxu0
  %v1125 = vadd.f32 %v947, %v1124
  %v1126 = vpop.f32.mrb[0].mxu0
  %1127 = vdwg.mxu0
  %v1128 = vmul.f32 %v1125, 0.5
  %v1129 = vtanh.pop %v1128
  %v1130 = vmul.f32 %v1129, 0.5
  %v1131 = vadd.f32 %v1130, 0.5
  %1133 = vrot.lane.b32.xlu0 %v1125, 32
  %v1134 = vpop.permute.xlu0 %1133
  %v1136 = vmul.f32 %v1131, %v1134
  %1138 = vrot.lane.b32.xlu0 %v1136, 64
  %v1139 = vpop.permute.xlu0 %1138
  %v1141 = vadd.f32 %v1125, %v1139
  %v1142 = vtanh.pop %v1141
  %v1143 = vsub.f32 1.0, %v1131
  %1145 = vrot.lane.b32.xlu0 %v1142, 96
  %v1146 = vpop.permute.xlu0 %1145
  %v1148 = vmul.f32 %v1143, %v1146
  %v1149 = vmul.f32 %v1131, %v1046
  %v1150 = vadd.f32 %v1148, %v1149
  %1151 = vrot.lane.b32.xlu0 %v413, 96
  %v1152 = vpop.permute.xlu0 %1151
  %v1155 = vrot.slane %v1150, 6
  %v1157 = vsel %vm107, %v1152, %v1155
  %v1159 = vrot.slane %v1157, 2
  %v1160 = vsel %vm950, %v1159, 0
  %1162 = vmatprep.subr.mxu0 0.0
  %1163 = vmatpush1.msra.mxu0 %v939
  %1164 = vmatprep.subr.mxu0 0.0
  %1165 = vmatpush1.msra.mxu0 %v940
  %1166 = vmatprep.subr.mxu0 0.0
  %1167 = vmatpush1.msra.mxu0 %v941
  %1168 = vmatprep.subr.mxu0 0.0
  %1169 = vmatpush1.msra.mxu0 %v942
  %1170 = vmatprep.subr.mxu0 0.0
  %1171 = vmatpush1.msra.mxu0 %v943
  %1172 = vmatprep.subr.mxu0 0.0
  %1173 = vmatpush1.msra.mxu0 %v944
  %1174 = vmatprep.subr.mxu0 0.0
  %1175 = vmatpush1.msra.mxu0 %v945
  %1176 = vmatprep.subr.mxu0 0.0
  %1177 = vmatpush1.msra.mxu0 %v946
  %1178 = vmatprep.subr.mxu0 0.0
  %1179 = vmatpush1.msra.mxu0 0.0
  %1180 = vmatprep.subr.mxu0 0.0
  %1181 = vmatpush1.msra.mxu0 0.0
  %1182 = vmatprep.subr.mxu0 0.0
  %1183 = vmatpush1.msra.mxu0 0.0
  %1184 = vmatprep.subr.mxu0 0.0
  %1185 = vmatpush1.msra.mxu0 0.0
  %1186 = vmatprep.subr.mxu0 0.0
  %1187 = vmatpush1.msra.mxu0 0.0
  %1188 = vmatprep.subr.mxu0 0.0
  %1189 = vmatpush1.msra.mxu0 0.0
  %1190 = vmatprep.subr.mxu0 0.0
  %1191 = vmatpush1.msra.mxu0 0.0
  %1192 = vmatprep.subr.mxu0 0.0
  %1193 = vmatpush1.msra.mxu0 0.0
  %1194 = vmatprep.subr.mxu0 0.0
  %1195 = vmatpush1.msra.mxu0 0.0
  %1196 = vmatprep.subr.mxu0 0.0
  %1197 = vmatpush1.msra.mxu0 0.0
  %1198 = vmatprep.subr.mxu0 0.0
  %1199 = vmatpush1.msra.mxu0 0.0
  %1200 = vmatprep.subr.mxu0 0.0
  %1201 = vmatpush1.msra.mxu0 0.0
  %1202 = vmatprep.subr.mxu0 0.0
  %1203 = vmatpush1.msra.mxu0 0.0
  %1204 = vmatprep.subr.mxu0 0.0
  %1205 = vmatpush1.msra.mxu0 0.0
  %1206 = vmatprep.subr.mxu0 0.0
  %1207 = vmatpush1.msra.mxu0 0.0
  %1208 = vmatprep.subr.mxu0 0.0
  %1209 = vmatpush1.msra.mxu0 0.0
  %1210 = vmatprep.subr.mxu0 0.0
  %1211 = vmatpush1.msra.mxu0 0.0
  %1212 = vmatprep.subr.mxu0 0.0
  %1213 = vmatpush1.msra.mxu0 0.0
  %1214 = vmatprep.subr.mxu0 0.0
  %1215 = vmatpush1.msra.mxu0 0.0
  %1216 = vmatprep.subr.mxu0 0.0
  %1217 = vmatpush1.msra.mxu0 0.0
  %1218 = vmatprep.subr.mxu0 0.0
  %1219 = vmatpush1.msra.mxu0 0.0
  %1220 = vmatprep.subr.mxu0 0.0
  %1221 = vmatpush1.msra.mxu0 0.0
  %1222 = vmatprep.subr.mxu0 0.0
  %1223 = vmatpush1.msra.mxu0 0.0
  %1224 = vmatprep.subr.mxu0 0.0
  %1225 = vmatpush1.msra.mxu0 0.0
  %1226 = vmatprep.mubr.f32.mxu0 0.0
  %1227 = vmatmul.mubr.f32.gmra.mrb[0].mxu0 %v1160
  %v1228 = vpop.f32.mrb[0].mxu0
  %v1229 = vadd.f32 %v947, %v1228
  %v1230 = vpop.f32.mrb[0].mxu0
  %1231 = vdwg.mxu0
  %v1232 = vmul.f32 %v1229, 0.5
  %v1233 = vtanh.pop %v1232
  %v1234 = vmul.f32 %v1233, 0.5
  %v1235 = vadd.f32 %v1234, 0.5
  %1237 = vrot.lane.b32.xlu0 %v1229, 32
  %v1238 = vpop.permute.xlu0 %1237
  %v1240 = vmul.f32 %v1235, %v1238
  %1242 = vrot.lane.b32.xlu0 %v1240, 64
  %v1243 = vpop.permute.xlu0 %1242
  %v1245 = vadd.f32 %v1229, %v1243
  %v1246 = vtanh.pop %v1245
  %v1247 = vsub.f32 1.0, %v1235
  %1249 = vrot.lane.b32.xlu0 %v1246, 96
  %v1250 = vpop.permute.xlu0 %1249
  %v1252 = vmul.f32 %v1247, %v1250
  %v1253 = vmul.f32 %v1235, %v1150
  %v1254 = vadd.f32 %v1252, %v1253
  %1255 = vrot.lane.b32.xlu0 %v518, 96
  %v1256 = vpop.permute.xlu0 %1255
  %v1259 = vrot.slane %v1254, 5
  %v1261 = vsel %vm107, %v1256, %v1259
  %v1263 = vrot.slane %v1261, 3
  %v1264 = vsel %vm950, %v1263, 0
  %1266 = vmatprep.subr.mxu0 0.0
  %1267 = vmatpush1.msra.mxu0 %v939
  %1268 = vmatprep.subr.mxu0 0.0
  %1269 = vmatpush1.msra.mxu0 %v940
  %1270 = vmatprep.subr.mxu0 0.0
  %1271 = vmatpush1.msra.mxu0 %v941
  %1272 = vmatprep.subr.mxu0 0.0
  %1273 = vmatpush1.msra.mxu0 %v942
  %1274 = vmatprep.subr.mxu0 0.0
  %1275 = vmatpush1.msra.mxu0 %v943
  %1276 = vmatprep.subr.mxu0 0.0
  %1277 = vmatpush1.msra.mxu0 %v944
  %1278 = vmatprep.subr.mxu0 0.0
  %1279 = vmatpush1.msra.mxu0 %v945
  %1280 = vmatprep.subr.mxu0 0.0
  %1281 = vmatpush1.msra.mxu0 %v946
  %1282 = vmatprep.subr.mxu0 0.0
  %1283 = vmatpush1.msra.mxu0 0.0
  %1284 = vmatprep.subr.mxu0 0.0
  %1285 = vmatpush1.msra.mxu0 0.0
  %1286 = vmatprep.subr.mxu0 0.0
  %1287 = vmatpush1.msra.mxu0 0.0
  %1288 = vmatprep.subr.mxu0 0.0
  %1289 = vmatpush1.msra.mxu0 0.0
  %1290 = vmatprep.subr.mxu0 0.0
  %1291 = vmatpush1.msra.mxu0 0.0
  %1292 = vmatprep.subr.mxu0 0.0
  %1293 = vmatpush1.msra.mxu0 0.0
  %1294 = vmatprep.subr.mxu0 0.0
  %1295 = vmatpush1.msra.mxu0 0.0
  %1296 = vmatprep.subr.mxu0 0.0
  %1297 = vmatpush1.msra.mxu0 0.0
  %1298 = vmatprep.subr.mxu0 0.0
  %1299 = vmatpush1.msra.mxu0 0.0
  %1300 = vmatprep.subr.mxu0 0.0
  %1301 = vmatpush1.msra.mxu0 0.0
  %1302 = vmatprep.subr.mxu0 0.0
  %1303 = vmatpush1.msra.mxu0 0.0
  %1304 = vmatprep.subr.mxu0 0.0
  %1305 = vmatpush1.msra.mxu0 0.0
  %1306 = vmatprep.subr.mxu0 0.0
  %1307 = vmatpush1.msra.mxu0 0.0
  %1308 = vmatprep.subr.mxu0 0.0
  %1309 = vmatpush1.msra.mxu0 0.0
  %1310 = vmatprep.subr.mxu0 0.0
  %1311 = vmatpush1.msra.mxu0 0.0
  %1312 = vmatprep.subr.mxu0 0.0
  %1313 = vmatpush1.msra.mxu0 0.0
  %1314 = vmatprep.subr.mxu0 0.0
  %1315 = vmatpush1.msra.mxu0 0.0
  %1316 = vmatprep.subr.mxu0 0.0
  %1317 = vmatpush1.msra.mxu0 0.0
  %1318 = vmatprep.subr.mxu0 0.0
  %1319 = vmatpush1.msra.mxu0 0.0
  %1320 = vmatprep.subr.mxu0 0.0
  %1321 = vmatpush1.msra.mxu0 0.0
  %1322 = vmatprep.subr.mxu0 0.0
  %1323 = vmatpush1.msra.mxu0 0.0
  %1324 = vmatprep.subr.mxu0 0.0
  %1325 = vmatpush1.msra.mxu0 0.0
  %1326 = vmatprep.subr.mxu0 0.0
  %1327 = vmatpush1.msra.mxu0 0.0
  %1328 = vmatprep.subr.mxu0 0.0
  %1329 = vmatpush1.msra.mxu0 0.0
  %1330 = vmatprep.mubr.f32.mxu0 0.0
  %1331 = vmatmul.mubr.f32.gmra.mrb[0].mxu0 %v1264
  %v1332 = vpop.f32.mrb[0].mxu0
  %v1333 = vadd.f32 %v947, %v1332
  %v1334 = vpop.f32.mrb[0].mxu0
  %1335 = vdwg.mxu0
  %v1336 = vmul.f32 %v1333, 0.5
  %v1337 = vtanh.pop %v1336
  %v1338 = vmul.f32 %v1337, 0.5
  %v1339 = vadd.f32 %v1338, 0.5
  %1341 = vrot.lane.b32.xlu0 %v1333, 32
  %v1342 = vpop.permute.xlu0 %1341
  %v1344 = vmul.f32 %v1339, %v1342
  %1346 = vrot.lane.b32.xlu0 %v1344, 64
  %v1347 = vpop.permute.xlu0 %1346
  %v1349 = vadd.f32 %v1333, %v1347
  %v1350 = vtanh.pop %v1349
  %v1351 = vsub.f32 1.0, %v1339
  %1353 = vrot.lane.b32.xlu0 %v1350, 96
  %v1354 = vpop.permute.xlu0 %1353
  %v1356 = vmul.f32 %v1351, %v1354
  %v1357 = vmul.f32 %v1339, %v1254
  %v1358 = vadd.f32 %v1356, %v1357
  %1359 = vrot.lane.b32.xlu0 %v623, 96
  %v1360 = vpop.permute.xlu0 %1359
  %v1363 = vrot.slane %v1358, 4
  %v1365 = vsel %vm107, %v1360, %v1363
  %v1367 = vrot.slane %v1365, 4
  %v1368 = vsel %vm950, %v1367, 0
  %1370 = vmatprep.subr.mxu0 0.0
  %1371 = vmatpush1.msra.mxu0 %v939
  %1372 = vmatprep.subr.mxu0 0.0
  %1373 = vmatpush1.msra.mxu0 %v940
  %1374 = vmatprep.subr.mxu0 0.0
  %1375 = vmatpush1.msra.mxu0 %v941
  %1376 = vmatprep.subr.mxu0 0.0
  %1377 = vmatpush1.msra.mxu0 %v942
  %1378 = vmatprep.subr.mxu0 0.0
  %1379 = vmatpush1.msra.mxu0 %v943
  %1380 = vmatprep.subr.mxu0 0.0
  %1381 = vmatpush1.msra.mxu0 %v944
  %1382 = vmatprep.subr.mxu0 0.0
  %1383 = vmatpush1.msra.mxu0 %v945
  %1384 = vmatprep.subr.mxu0 0.0
  %1385 = vmatpush1.msra.mxu0 %v946
  %1386 = vmatprep.subr.mxu0 0.0
  %1387 = vmatpush1.msra.mxu0 0.0
  %1388 = vmatprep.subr.mxu0 0.0
  %1389 = vmatpush1.msra.mxu0 0.0
  %1390 = vmatprep.subr.mxu0 0.0
  %1391 = vmatpush1.msra.mxu0 0.0
  %1392 = vmatprep.subr.mxu0 0.0
  %1393 = vmatpush1.msra.mxu0 0.0
  %1394 = vmatprep.subr.mxu0 0.0
  %1395 = vmatpush1.msra.mxu0 0.0
  %1396 = vmatprep.subr.mxu0 0.0
  %1397 = vmatpush1.msra.mxu0 0.0
  %1398 = vmatprep.subr.mxu0 0.0
  %1399 = vmatpush1.msra.mxu0 0.0
  %1400 = vmatprep.subr.mxu0 0.0
  %1401 = vmatpush1.msra.mxu0 0.0
  %1402 = vmatprep.subr.mxu0 0.0
  %1403 = vmatpush1.msra.mxu0 0.0
  %1404 = vmatprep.subr.mxu0 0.0
  %1405 = vmatpush1.msra.mxu0 0.0
  %1406 = vmatprep.subr.mxu0 0.0
  %1407 = vmatpush1.msra.mxu0 0.0
  %1408 = vmatprep.subr.mxu0 0.0
  %1409 = vmatpush1.msra.mxu0 0.0
  %1410 = vmatprep.subr.mxu0 0.0
  %1411 = vmatpush1.msra.mxu0 0.0
  %1412 = vmatprep.subr.mxu0 0.0
  %1413 = vmatpush1.msra.mxu0 0.0
  %1414 = vmatprep.subr.mxu0 0.0
  %1415 = vmatpush1.msra.mxu0 0.0
  %1416 = vmatprep.subr.mxu0 0.0
  %1417 = vmatpush1.msra.mxu0 0.0
  %1418 = vmatprep.subr.mxu0 0.0
  %1419 = vmatpush1.msra.mxu0 0.0
  %1420 = vmatprep.subr.mxu0 0.0
  %1421 = vmatpush1.msra.mxu0 0.0
  %1422 = vmatprep.subr.mxu0 0.0
  %1423 = vmatpush1.msra.mxu0 0.0
  %1424 = vmatprep.subr.mxu0 0.0
  %1425 = vmatpush1.msra.mxu0 0.0
  %1426 = vmatprep.subr.mxu0 0.0
  %1427 = vmatpush1.msra.mxu0 0.0
  %1428 = vmatprep.subr.mxu0 0.0
  %1429 = vmatpush1.msra.mxu0 0.0
  %1430 = vmatprep.subr.mxu0 0.0
  %1431 = vmatpush1.msra.mxu0 0.0
  %1432 = vmatprep.subr.mxu0 0.0
  %1433 = vmatpush1.msra.mxu0 0.0
  %1434 = vmatprep.mubr.f32.mxu0 0.0
  %1435 = vmatmul.mubr.f32.gmra.mrb[0].mxu0 %v1368
  %v1436 = vpop.f32.mrb[0].mxu0
  %v1437 = vadd.f32 %v947, %v1436
  %v1438 = vpop.f32.mrb[0].mxu0
  %1439 = vdwg.mxu0
  %v1440 = vmul.f32 %v1437, 0.5
  %v1441 = vtanh.pop %v1440
  %v1442 = vmul.f32 %v1441, 0.5
  %v1443 = vadd.f32 %v1442, 0.5
  %1445 = vrot.lane.b32.xlu0 %v1437, 32
  %v1446 = vpop.permute.xlu0 %1445
  %v1448 = vmul.f32 %v1443, %v1446
  %1450 = vrot.lane.b32.xlu0 %v1448, 64
  %v1451 = vpop.permute.xlu0 %1450
  %v1453 = vadd.f32 %v1437, %v1451
  %v1454 = vtanh.pop %v1453
  %v1455 = vsub.f32 1.0, %v1443
  %1457 = vrot.lane.b32.xlu0 %v1454, 96
  %v1458 = vpop.permute.xlu0 %1457
  %v1460 = vmul.f32 %v1455, %v1458
  %v1461 = vmul.f32 %v1443, %v1358
  %v1462 = vadd.f32 %v1460, %v1461
  %1463 = vrot.lane.b32.xlu0 %v728, 96
  %v1464 = vpop.permute.xlu0 %1463
  %v1467 = vrot.slane %v1462, 3
  %v1469 = vsel %vm107, %v1464, %v1467
  %v1471 = vrot.slane %v1469, 5
  %v1472 = vsel %vm950, %v1471, 0
  %1474 = vmatprep.subr.mxu0 0.0
  %1475 = vmatpush1.msra.mxu0 %v939
  %1476 = vmatprep.subr.mxu0 0.0
  %1477 = vmatpush1.msra.mxu0 %v940
  %1478 = vmatprep.subr.mxu0 0.0
  %1479 = vmatpush1.msra.mxu0 %v941
  %1480 = vmatprep.subr.mxu0 0.0
  %1481 = vmatpush1.msra.mxu0 %v942
  %1482 = vmatprep.subr.mxu0 0.0
  %1483 = vmatpush1.msra.mxu0 %v943
  %1484 = vmatprep.subr.mxu0 0.0
  %1485 = vmatpush1.msra.mxu0 %v944
  %1486 = vmatprep.subr.mxu0 0.0
  %1487 = vmatpush1.msra.mxu0 %v945
  %1488 = vmatprep.subr.mxu0 0.0
  %1489 = vmatpush1.msra.mxu0 %v946
  %1490 = vmatprep.subr.mxu0 0.0
  %1491 = vmatpush1.msra.mxu0 0.0
  %1492 = vmatprep.subr.mxu0 0.0
  %1493 = vmatpush1.msra.mxu0 0.0
  %1494 = vmatprep.subr.mxu0 0.0
  %1495 = vmatpush1.msra.mxu0 0.0
  %1496 = vmatprep.subr.mxu0 0.0
  %1497 = vmatpush1.msra.mxu0 0.0
  %1498 = vmatprep.subr.mxu0 0.0
  %1499 = vmatpush1.msra.mxu0 0.0
  %1500 = vmatprep.subr.mxu0 0.0
  %1501 = vmatpush1.msra.mxu0 0.0
  %1502 = vmatprep.subr.mxu0 0.0
  %1503 = vmatpush1.msra.mxu0 0.0
  %1504 = vmatprep.subr.mxu0 0.0
  %1505 = vmatpush1.msra.mxu0 0.0
  %1506 = vmatprep.subr.mxu0 0.0
  %1507 = vmatpush1.msra.mxu0 0.0
  %1508 = vmatprep.subr.mxu0 0.0
  %1509 = vmatpush1.msra.mxu0 0.0
  %1510 = vmatprep.subr.mxu0 0.0
  %1511 = vmatpush1.msra.mxu0 0.0
  %1512 = vmatprep.subr.mxu0 0.0
  %1513 = vmatpush1.msra.mxu0 0.0
  %1514 = vmatprep.subr.mxu0 0.0
  %1515 = vmatpush1.msra.mxu0 0.0
  %1516 = vmatprep.subr.mxu0 0.0
  %1517 = vmatpush1.msra.mxu0 0.0
  %1518 = vmatprep.subr.mxu0 0.0
  %1519 = vmatpush1.msra.mxu0 0.0
  %1520 = vmatprep.subr.mxu0 0.0
  %1521 = vmatpush1.msra.mxu0 0.0
  %1522 = vmatprep.subr.mxu0 0.0
  %1523 = vmatpush1.msra.mxu0 0.0
  %1524 = vmatprep.subr.mxu0 0.0
  %1525 = vmatpush1.msra.mxu0 0.0
  %1526 = vmatprep.subr.mxu0 0.0
  %1527 = vmatpush1.msra.mxu0 0.0
  %1528 = vmatprep.subr.mxu0 0.0
  %1529 = vmatpush1.msra.mxu0 0.0
  %1530 = vmatprep.subr.mxu0 0.0
  %1531 = vmatpush1.msra.mxu0 0.0
  %1532 = vmatprep.subr.mxu0 0.0
  %1533 = vmatpush1.msra.mxu0 0.0
  %1534 = vmatprep.subr.mxu0 0.0
  %1535 = vmatpush1.msra.mxu0 0.0
  %1536 = vmatprep.subr.mxu0 0.0
  %1537 = vmatpush1.msra.mxu0 0.0
  %1538 = vmatprep.mubr.f32.mxu0 0.0
  %1539 = vmatmul.mubr.f32.gmra.mrb[0].mxu0 %v1472
  %v1540 = vpop.f32.mrb[0].mxu0
  %v1541 = vadd.f32 %v947, %v1540
  %v1542 = vpop.f32.mrb[0].mxu0
  %1543 = vdwg.mxu0
  %v1544 = vmul.f32 %v1541, 0.5
  %v1545 = vtanh.pop %v1544
  %v1546 = vmul.f32 %v1545, 0.5
  %v1547 = vadd.f32 %v1546, 0.5
  %1549 = vrot.lane.b32.xlu0 %v1541, 32
  %v1550 = vpop.permute.xlu0 %1549
  %v1552 = vmul.f32 %v1547, %v1550
  %1554 = vrot.lane.b32.xlu0 %v1552, 64
  %v1555 = vpop.permute.xlu0 %1554
  %v1557 = vadd.f32 %v1541, %v1555
  %v1558 = vtanh.pop %v1557
  %v1559 = vsub.f32 1.0, %v1547
  %1561 = vrot.lane.b32.xlu0 %v1558, 96
  %v1562 = vpop.permute.xlu0 %1561
  %v1564 = vmul.f32 %v1559, %v1562
  %v1565 = vmul.f32 %v1547, %v1462
  %v1566 = vadd.f32 %v1564, %v1565
  %1567 = vrot.lane.b32.xlu0 %v833, 96
  %v1568 = vpop.permute.xlu0 %1567
  %v1571 = vrot.slane %v1566, 2
  %v1573 = vsel %vm107, %v1568, %v1571
  %v1575 = vrot.slane %v1573, 6
  %v1576 = vsel %vm950, %v1575, 0
  %1578 = vmatprep.subr.mxu0 0.0
  %1579 = vmatpush1.msra.mxu0 %v939
  %1580 = vmatprep.subr.mxu0 0.0
  %1581 = vmatpush1.msra.mxu0 %v940
  %1582 = vmatprep.subr.mxu0 0.0
  %1583 = vmatpush1.msra.mxu0 %v941
  %1584 = vmatprep.subr.mxu0 0.0
  %1585 = vmatpush1.msra.mxu0 %v942
  %1586 = vmatprep.subr.mxu0 0.0
  %1587 = vmatpush1.msra.mxu0 %v943
  %1588 = vmatprep.subr.mxu0 0.0
  %1589 = vmatpush1.msra.mxu0 %v944
  %1590 = vmatprep.subr.mxu0 0.0
  %1591 = vmatpush1.msra.mxu0 %v945
  %1592 = vmatprep.subr.mxu0 0.0
  %1593 = vmatpush1.msra.mxu0 %v946
  %1594 = vmatprep.subr.mxu0 0.0
  %1595 = vmatpush1.msra.mxu0 0.0
  %1596 = vmatprep.subr.mxu0 0.0
  %1597 = vmatpush1.msra.mxu0 0.0
  %1598 = vmatprep.subr.mxu0 0.0
  %1599 = vmatpush1.msra.mxu0 0.0
  %1600 = vmatprep.subr.mxu0 0.0
  %1601 = vmatpush1.msra.mxu0 0.0
  %1602 = vmatprep.subr.mxu0 0.0
  %1603 = vmatpush1.msra.mxu0 0.0
  %1604 = vmatprep.subr.mxu0 0.0
  %1605 = vmatpush1.msra.mxu0 0.0
  %1606 = vmatprep.subr.mxu0 0.0
  %1607 = vmatpush1.msra.mxu0 0.0
  %1608 = vmatprep.subr.mxu0 0.0
  %1609 = vmatpush1.msra.mxu0 0.0
  %1610 = vmatprep.subr.mxu0 0.0
  %1611 = vmatpush1.msra.mxu0 0.0
  %1612 = vmatprep.subr.mxu0 0.0
  %1613 = vmatpush1.msra.mxu0 0.0
  %1614 = vmatprep.subr.mxu0 0.0
  %1615 = vmatpush1.msra.mxu0 0.0
  %1616 = vmatprep.subr.mxu0 0.0
  %1617 = vmatpush1.msra.mxu0 0.0
  %1618 = vmatprep.subr.mxu0 0.0
  %1619 = vmatpush1.msra.mxu0 0.0
  %1620 = vmatprep.subr.mxu0 0.0
  %1621 = vmatpush1.msra.mxu0 0.0
  %1622 = vmatprep.subr.mxu0 0.0
  %1623 = vmatpush1.msra.mxu0 0.0
  %1624 = vmatprep.subr.mxu0 0.0
  %1625 = vmatpush1.msra.mxu0 0.0
  %1626 = vmatprep.subr.mxu0 0.0
  %1627 = vmatpush1.msra.mxu0 0.0
  %1628 = vmatprep.subr.mxu0 0.0
  %1629 = vmatpush1.msra.mxu0 0.0
  %1630 = vmatprep.subr.mxu0 0.0
  %1631 = vmatpush1.msra.mxu0 0.0
  %1632 = vmatprep.subr.mxu0 0.0
  %1633 = vmatpush1.msra.mxu0 0.0
  %1634 = vmatprep.subr.mxu0 0.0
  %1635 = vmatpush1.msra.mxu0 0.0
  %1636 = vmatprep.subr.mxu0 0.0
  %1637 = vmatpush1.msra.mxu0 0.0
  %1638 = vmatprep.subr.mxu0 0.0
  %1639 = vmatpush1.msra.mxu0 0.0
  %1640 = vmatprep.subr.mxu0 0.0
  %1641 = vmatpush1.msra.mxu0 0.0
  %1642 = vmatprep.mubr.f32.mxu0 0.0
  %1643 = vmatmul.mubr.f32.gmra.mrb[0].mxu0 %v1576
  %v1644 = vpop.f32.mrb[0].mxu0
  %v1645 = vadd.f32 %v947, %v1644
  %v1646 = vpop.f32.mrb[0].mxu0
  %1647 = vdwg.mxu0
  %v1648 = vmul.f32 %v1645, 0.5
  %v1649 = vtanh.pop %v1648
  %v1650 = vmul.f32 %v1649, 0.5
  %v1651 = vadd.f32 %v1650, 0.5
  %1653 = vrot.lane.b32.xlu0 %v1645, 32
  %v1654 = vpop.permute.xlu0 %1653
  %v1656 = vmul.f32 %v1651, %v1654
  %1658 = vrot.lane.b32.xlu0 %v1656, 64
  %v1659 = vpop.permute.xlu0 %1658
  %v1661 = vadd.f32 %v1645, %v1659
  %v1662 = vtanh.pop %v1661
  %v1663 = vsub.f32 1.0, %v1651
  %1665 = vrot.lane.b32.xlu0 %v1662, 96
  %v1666 = vpop.permute.xlu0 %1665
  %v1668 = vmul.f32 %v1663, %v1666
  %v1669 = vmul.f32 %v1651, %v1566
  %v1670 = vadd.f32 %v1668, %v1669
  %1672 = vrot.lane.b32.xlu0 %v938, 96
  %v1673 = vpop.permute.xlu0 %1672
  %v1676 = vrot.slane %v1670, 1
  %v1678 = vsel %vm107, %v1673, %v1676
  %v1680 = vrot.slane %v1678, 7
  %v1681 = vsel %vm950, %v1680, 0
  %1683 = vmatprep.subr.mxu0 0.0
  %1684 = vmatpush1.msra.mxu0 %v939
  %1685 = vmatprep.subr.mxu0 0.0
  %1686 = vmatpush1.msra.mxu0 %v940
  %1687 = vmatprep.subr.mxu0 0.0
  %1688 = vmatpush1.msra.mxu0 %v941
  %1689 = vmatprep.subr.mxu0 0.0
  %1690 = vmatpush1.msra.mxu0 %v942
  %1691 = vmatprep.subr.mxu0 0.0
  %1692 = vmatpush1.msra.mxu0 %v943
  %1693 = vmatprep.subr.mxu0 0.0
  %1694 = vmatpush1.msra.mxu0 %v944
  %1695 = vmatprep.subr.mxu0 0.0
  %1696 = vmatpush1.msra.mxu0 %v945
  %1697 = vmatprep.subr.mxu0 0.0
  %1698 = vmatpush1.msra.mxu0 %v946
  %1699 = vmatprep.subr.mxu0 0.0
  %1700 = vmatpush1.msra.mxu0 0.0
  %1701 = vmatprep.subr.mxu0 0.0
  %1702 = vmatpush1.msra.mxu0 0.0
  %1703 = vmatprep.subr.mxu0 0.0
  %1704 = vmatpush1.msra.mxu0 0.0
  %1705 = vmatprep.subr.mxu0 0.0
  %1706 = vmatpush1.msra.mxu0 0.0
  %1707 = vmatprep.subr.mxu0 0.0
  %1708 = vmatpush1.msra.mxu0 0.0
  %1709 = vmatprep.subr.mxu0 0.0
  %1710 = vmatpush1.msra.mxu0 0.0
  %1711 = vmatprep.subr.mxu0 0.0
  %1712 = vmatpush1.msra.mxu0 0.0
  %1713 = vmatprep.subr.mxu0 0.0
  %1714 = vmatpush1.msra.mxu0 0.0
  %1715 = vmatprep.subr.mxu0 0.0
  %1716 = vmatpush1.msra.mxu0 0.0
  %1717 = vmatprep.subr.mxu0 0.0
  %1718 = vmatpush1.msra.mxu0 0.0
  %1719 = vmatprep.subr.mxu0 0.0
  %1720 = vmatpush1.msra.mxu0 0.0
  %1721 = vmatprep.subr.mxu0 0.0
  %1722 = vmatpush1.msra.mxu0 0.0
  %1723 = vmatprep.subr.mxu0 0.0
  %1724 = vmatpush1.msra.mxu0 0.0
  %1725 = vmatprep.subr.mxu0 0.0
  %1726 = vmatpush1.msra.mxu0 0.0
  %1727 = vmatprep.subr.mxu0 0.0
  %1728 = vmatpush1.msra.mxu0 0.0
  %1729 = vmatprep.subr.mxu0 0.0
  %1730 = vmatpush1.msra.mxu0 0.0
  %1731 = vmatprep.subr.mxu0 0.0
  %1732 = vmatpush1.msra.mxu0 0.0
  %1733 = vmatprep.subr.mxu0 0.0
  %1734 = vmatpush1.msra.mxu0 0.0
  %1735 = vmatprep.subr.mxu0 0.0
  %1736 = vmatpush1.msra.mxu0 0.0
  %1737 = vmatprep.subr.mxu0 0.0
  %1738 = vmatpush1.msra.mxu0 0.0
  %1739 = vmatprep.subr.mxu0 0.0
  %1740 = vmatpush1.msra.mxu0 0.0
  %1741 = vmatprep.subr.mxu0 0.0
  %1742 = vmatpush1.msra.mxu0 0.0
  %1743 = vmatprep.subr.mxu0 0.0
  %1744 = vmatpush1.msra.mxu0 0.0
  %1745 = vmatprep.subr.mxu0 0.0
  %1746 = vmatpush1.msra.mxu0 0.0
  %1747 = vmatprep.mubr.f32.mxu0 0.0
  %1748 = vmatmul.mubr.f32.gmra.mrb[0].mxu0 %v1681
  %v1749 = vpop.f32.mrb[0].mxu0
  %v1750 = vadd.f32 %v947, %v1749
  %v1751 = vpop.f32.mrb[0].mxu0
  %1752 = vdwg.mxu0
  %v1753 = vmul.f32 %v1750, 0.5
  %v1754 = vtanh.pop %v1753
  %v1755 = vmul.f32 %v1754, 0.5
  %v1756 = vadd.f32 %v1755, 0.5
  %1758 = vrot.lane.b32.xlu0 %v1750, 32
  %v1759 = vpop.permute.xlu0 %1758
  %v1761 = vmul.f32 %v1756, %v1759
  %1763 = vrot.lane.b32.xlu0 %v1761, 64
  %v1764 = vpop.permute.xlu0 %1763
  %v1766 = vadd.f32 %v1750, %v1764
  %v1767 = vtanh.pop %v1766
  %v1768 = vsub.f32 1.0, %v1756
  %1770 = vrot.lane.b32.xlu0 %v1767, 96
  %v1771 = vpop.permute.xlu0 %1770
  %v1773 = vmul.f32 %v1768, %v1771
  %v1774 = vmul.f32 %v1756, %v1670
  %v1775 = vadd.f32 %v1773, %v1774
  %v1776 = vrot.slane %v1150, 7
  %v1778 = vrot.slane %v1254, 6
  %v1780 = vrot.slane %v1358, 5
  %v1782 = vrot.slane %v1462, 4
  %v1784 = vrot.slane %v1566, 3
  %v1786 = vrot.slane %v1670, 2
  %v1789 = vrot.slane %v1775, 1
  %vm1791 = vcmask 1040384
  %v1792 = vsel %vm1791, %v1046, %v1776
  %vm1793 = vcmask 1041408
  %v1794 = vsel %vm1793, %v1792, %v1778
  %vm1795 = vcmask 1042432
  %v1796 = vsel %vm1795, %v1794, %v1780
  %vm1797 = vcmask 1043456
  %v1798 = vsel %vm1797, %v1796, %v1782
  %vm1799 = vcmask 1044480
  %v1800 = vsel %vm1799, %v1798, %v1784
  %vm1801 = vcmask 1045504
  %v1802 = vsel %vm1801, %v1800, %v1786
  %vm1803 = vcmask 1046528
  %v1804 = vsel %vm1803, %v1802, %v1789
  %s1805 = sld [smem:[#allocation2]]
  %v1806 = vld [vmem:[%s2] sm:$0xff]
  %v1807 = vld [vmem:[%s2 + $0x8] sm:$0xff]
  %v1808 = vld [vmem:[%s2 + $0x10] sm:$0xff]
  %v1809 = vld [vmem:[%s2 + $0x18] sm:$0xff]
  %v1810 = vld [vmem:[%s2 + $0x20] sm:$0xff]
  %v1811 = vld [vmem:[%s2 + $0x28] sm:$0xff]
  %v1812 = vld [vmem:[%s2 + $0x30] sm:$0xff]
  %v1813 = vld [vmem:[%s2 + $0x38] sm:$0xff]
  %v1814 = vld [vmem:[%s2 + $0x40] sm:$0xff]
  %v1815 = vld [vmem:[%s2 + $0x48] sm:$0xff]
  %v1816 = vld [vmem:[%s2 + $0x50] sm:$0xff]
  %v1817 = vld [vmem:[%s2 + $0x58] sm:$0xff]
  %v1818 = vld [vmem:[%s2 + $0x60] sm:$0xff]
  %v1819 = vld [vmem:[%s2 + $0x68] sm:$0xff]
  %v1820 = vld [vmem:[%s2 + $0x70] sm:$0xff]
  %v1821 = vld [vmem:[%s2 + $0x78] sm:$0xff]
  %v1822 = vld [vmem:[%s2 + $0x80] sm:$0xff]
  %v1823 = vld [vmem:[%s2 + $0x88] sm:$0xff]
  %v1824 = vld [vmem:[%s2 + $0x90] sm:$0xff]
  %v1825 = vld [vmem:[%s2 + $0x98] sm:$0xff]
  %v1826 = vld [vmem:[%s2 + $0xa0] sm:$0xff]
  %v1827 = vld [vmem:[%s2 + $0xa8] sm:$0xff]
  %v1828 = vld [vmem:[%s2 + $0xb0] sm:$0xff]
  %v1829 = vld [vmem:[%s2 + $0xb8] sm:$0xff]
  %v1830 = vld [vmem:[%s2 + $0xc0] sm:$0xff]
  %v1831 = vld [vmem:[%s2 + $0xc8] sm:$0xff]
  %v1832 = vld [vmem:[%s2 + $0xd0] sm:$0xff]
  %v1833 = vld [vmem:[%s2 + $0xd8] sm:$0xff]
  %v1834 = vld [vmem:[%s2 + $0xe0] sm:$0xff]
  %v1835 = vld [vmem:[%s2 + $0xe8] sm:$0xff]
  %v1836 = vld [vmem:[%s2 + $0xf0] sm:$0xff]
  %v1837 = vld [vmem:[%s2 + $0xf8] sm:$0xff]
  %s1838 = scalar_lea.vmem %s2, 256
  %v1839 = vld [vmem:[%s1838] ss:$8 sm:$0xf]
  %v1840 = vld [vmem:[%s1838] ss:$8 sm:$0xf0]
  %v1841 = vor.u32 %v1839, %v1840
  %v1843 = vlaneseq
  %v1844 = vshrl.u32 %v1843, 7
  %v1845 = vsub.s32 0, %v1844
  %v1846 = vrot.slane %v1841, %v1845
  %v1847 = vlaneseq
  %v1848 = vshrl.u32 %v1847, 7
  %v1849 = vsub.s32 1, %v1848
  %v1850 = vrot.slane %v1841, %v1849
  %v1851 = vlaneseq
  %v1852 = vshrl.u32 %v1851, 7
  %v1853 = vsub.s32 2, %v1852
  %v1854 = vrot.slane %v1841, %v1853
  %v1855 = vlaneseq
  %v1856 = vshrl.u32 %v1855, 7
  %v1857 = vsub.s32 3, %v1856
  %v1858 = vrot.slane %v1841, %v1857
  %v1859 = vlaneseq
  %v1860 = vshrl.u32 %v1859, 7
  %v1861 = vsub.s32 4, %v1860
  %v1862 = vrot.slane %v1841, %v1861
  %v1863 = vlaneseq
  %v1864 = vshrl.u32 %v1863, 7
  %v1865 = vsub.s32 5, %v1864
  %v1866 = vrot.slane %v1841, %v1865
  %v1867 = vlaneseq
  %v1868 = vshrl.u32 %v1867, 7
  %v1869 = vsub.s32 6, %v1868
  %v1870 = vrot.slane %v1841, %v1869
  %v1871 = vlaneseq
  %v1872 = vshrl.u32 %v1871, 7
  %v1873 = vsub.s32 7, %v1872
  %v1874 = vrot.slane %v1841, %v1873
  %1884 = vrot.lane.b32.xlu0 %v1804, 96
  %v1885 = vpop.permute.xlu0 %1884
  %v1886 = vsel %vm107, %v1885, 0
  %1888 = vmatprep.subr.mxu0 %v1807
  %1889 = vmatpush1.msra.mxu0 %v1806
  %1890 = vmatprep.subr.mxu0 %v1815
  %1891 = vmatpush1.msra.mxu0 %v1814
  %1892 = vmatprep.subr.mxu0 %v1823
  %1893 = vmatpush1.msra.mxu0 %v1822
  %1894 = vmatprep.subr.mxu0 %v1831
  %1895 = vmatpush1.msra.mxu0 %v1830
  %1896 = vmatprep.subr.mxu0 0.0
  %1897 = vmatpush1.msra.mxu0 0.0
  %1898 = vmatprep.subr.mxu0 0.0
  %1899 = vmatpush1.msra.mxu0 0.0
  %1900 = vmatprep.subr.mxu0 0.0
  %1901 = vmatpush1.msra.mxu0 0.0
  %1902 = vmatprep.subr.mxu0 0.0
  %1903 = vmatpush1.msra.mxu0 0.0
  %1904 = vmatprep.subr.mxu0 0.0
  %1905 = vmatpush1.msra.mxu0 0.0
  %1906 = vmatprep.subr.mxu0 0.0
  %1907 = vmatpush1.msra.mxu0 0.0
  %1908 = vmatprep.subr.mxu0 0.0
  %1909 = vmatpush1.msra.mxu0 0.0
  %1910 = vmatprep.subr.mxu0 0.0
  %1911 = vmatpush1.msra.mxu0 0.0
  %1912 = vmatprep.subr.mxu0 0.0
  %1913 = vmatpush1.msra.mxu0 0.0
  %1914 = vmatprep.subr.mxu0 0.0
  %1915 = vmatpush1.msra.mxu0 0.0
  %1916 = vmatprep.subr.mxu0 0.0
  %1917 = vmatpush1.msra.mxu0 0.0
  %1918 = vmatprep.subr.mxu0 0.0
  %1919 = vmatpush1.msra.mxu0 0.0
  %1920 = vmatprep.subr.mxu0 0.0
  %1921 = vmatpush1.msra.mxu0 0.0
  %1922 = vmatprep.subr.mxu0 0.0
  %1923 = vmatpush1.msra.mxu0 0.0
  %1924 = vmatprep.subr.mxu0 0.0
  %1925 = vmatpush1.msra.mxu0 0.0
  %1926 = vmatprep.subr.mxu0 0.0
  %1927 = vmatpush1.msra.mxu0 0.0
  %1928 = vmatprep.subr.mxu0 0.0
  %1929 = vmatpush1.msra.mxu0 0.0
  %1930 = vmatprep.subr.mxu0 0.0
  %1931 = vmatpush1.msra.mxu0 0.0
  %1932 = vmatprep.subr.mxu0 0.0
  %1933 = vmatpush1.msra.mxu0 0.0
  %1934 = vmatprep.subr.mxu0 0.0
  %1935 = vmatpush1.msra.mxu0 0.0
  %1936 = vmatprep.subr.mxu0 0.0
  %1937 = vmatpush1.msra.mxu0 0.0
  %1938 = vmatprep.subr.mxu0 0.0
  %1939 = vmatpush1.msra.mxu0 0.0
  %1940 = vmatprep.subr.mxu0 0.0
  %1941 = vmatpush1.msra.mxu0 0.0
  %1942 = vmatprep.subr.mxu0 0.0
  %1943 = vmatpush1.msra.mxu0 0.0
  %1944 = vmatprep.subr.mxu0 0.0
  %1945 = vmatpush1.msra.mxu0 0.0
  %1946 = vmatprep.subr.mxu0 0.0
  %1947 = vmatpush1.msra.mxu0 0.0
  %1948 = vmatprep.subr.mxu0 0.0
  %1949 = vmatpush1.msra.mxu0 0.0
  %1950 = vmatprep.subr.mxu0 0.0
  %1951 = vmatpush1.msra.mxu0 0.0
  %1952 = vmatprep.mubr.f32.mxu0 0.0
  %1953 = vmatmul.mubr.f32.gmra.mrb[0].mxu0 %v1886
  %v1954 = vpop.f32.mrb[0].mxu0
  %v1955 = vadd.f32 %v1846, %v1954
  %v1956 = vpop.f32.mrb[0].mxu0
  %v1957 = vadd.f32 %v1850, %v1956
  %1958 = vdwg.mxu0
  %1959 = vmatprep.subr.mxu0 %v1809
  %1960 = vmatpush1.msra.mxu0 %v1808
  %1961 = vmatprep.subr.mxu0 %v1817
  %1962 = vmatpush1.msra.mxu0 %v1816
  %1963 = vmatprep.subr.mxu0 %v1825
  %1964 = vmatpush1.msra.mxu0 %v1824
  %1965 = vmatprep.subr.mxu0 %v1833
  %1966 = vmatpush1.msra.mxu0 %v1832
  %1967 = vmatprep.subr.mxu0 0.0
  %1968 = vmatpush1.msra.mxu0 0.0
  %1969 = vmatprep.subr.mxu0 0.0
  %1970 = vmatpush1.msra.mxu0 0.0
  %1971 = vmatprep.subr.mxu0 0.0
  %1972 = vmatpush1.msra.mxu0 0.0
  %1973 = vmatprep.subr.mxu0 0.0
  %1974 = vmatpush1.msra.mxu0 0.0
  %1975 = vmatprep.subr.mxu0 0.0
  %1976 = vmatpush1.msra.mxu0 0.0
  %1977 = vmatprep.subr.mxu0 0.0
  %1978 = vmatpush1.msra.mxu0 0.0
  %1979 = vmatprep.subr.mxu0 0.0
  %1980 = vmatpush1.msra.mxu0 0.0
  %1981 = vmatprep.subr.mxu0 0.0
  %1982 = vmatpush1.msra.mxu0 0.0
  %1983 = vmatprep.subr.mxu0 0.0
  %1984 = vmatpush1.msra.mxu0 0.0
  %1985 = vmatprep.subr.mxu0 0.0
  %1986 = vmatpush1.msra.mxu0 0.0
  %1987 = vmatprep.subr.mxu0 0.0
  %1988 = vmatpush1.msra.mxu0 0.0
  %1989 = vmatprep.subr.mxu0 0.0
  %1990 = vmatpush1.msra.mxu0 0.0
  %1991 = vmatprep.subr.mxu0 0.0
  %1992 = vmatpush1.msra.mxu0 0.0
  %1993 = vmatprep.subr.mxu0 0.0
  %1994 = vmatpush1.msra.mxu0 0.0
  %1995 = vmatprep.subr.mxu0 0.0
  %1996 = vmatpush1.msra.mxu0 0.0
  %1997 = vmatprep.subr.mxu0 0.0
  %1998 = vmatpush1.msra.mxu0 0.0
  %1999 = vmatprep.subr.mxu0 0.0
  %2000 = vmatpush1.msra.mxu0 0.0
  %2001 = vmatprep.subr.mxu0 0.0
  %2002 = vmatpush1.msra.mxu0 0.0
  %2003 = vmatprep.subr.mxu0 0.0
  %2004 = vmatpush1.msra.mxu0 0.0
  %2005 = vmatprep.subr.mxu0 0.0
  %2006 = vmatpush1.msra.mxu0 0.0
  %2007 = vmatprep.subr.mxu0 0.0
  %2008 = vmatpush1.msra.mxu0 0.0
  %2009 = vmatprep.subr.mxu0 0.0
  %2010 = vmatpush1.msra.mxu0 0.0
  %2011 = vmatprep.subr.mxu0 0.0
  %2012 = vmatpush1.msra.mxu0 0.0
  %2013 = vmatprep.subr.mxu0 0.0
  %2014 = vmatpush1.msra.mxu0 0.0
  %2015 = vmatprep.subr.mxu0 0.0
  %2016 = vmatpush1.msra.mxu0 0.0
  %2017 = vmatprep.subr.mxu0 0.0
  %2018 = vmatpush1.msra.mxu0 0.0
  %2019 = vmatprep.subr.mxu0 0.0
  %2020 = vmatpush1.msra.mxu0 0.0
  %2021 = vmatprep.subr.mxu0 0.0
  %2022 = vmatpush1.msra.mxu0 0.0
  %2023 = vmatprep.mubr.f32.mxu0 0.0
  %2024 = vmatmul.mubr.f32.gmra.mrb[0].mxu0 %v1886
  %v2025 = vpop.f32.mrb[0].mxu0
  %v2026 = vadd.f32 %v1854, %v2025
  %v2027 = vpop.f32.mrb[0].mxu0
  %v2028 = vadd.f32 %v1858, %v2027
  %2029 = vdwg.mxu0
  %2030 = vmatprep.subr.mxu0 %v1811
  %2031 = vmatpush1.msra.mxu0 %v1810
  %2032 = vmatprep.subr.mxu0 %v1819
  %2033 = vmatpush1.msra.mxu0 %v1818
  %2034 = vmatprep.subr.mxu0 %v1827
  %2035 = vmatpush1.msra.mxu0 %v1826
  %2036 = vmatprep.subr.mxu0 %v1835
  %2037 = vmatpush1.msra.mxu0 %v1834
  %2038 = vmatprep.subr.mxu0 0.0
  %2039 = vmatpush1.msra.mxu0 0.0
  %2040 = vmatprep.subr.mxu0 0.0
  %2041 = vmatpush1.msra.mxu0 0.0
  %2042 = vmatprep.subr.mxu0 0.0
  %2043 = vmatpush1.msra.mxu0 0.0
  %2044 = vmatprep.subr.mxu0 0.0
  %2045 = vmatpush1.msra.mxu0 0.0
  %2046 = vmatprep.subr.mxu0 0.0
  %2047 = vmatpush1.msra.mxu0 0.0
  %2048 = vmatprep.subr.mxu0 0.0
  %2049 = vmatpush1.msra.mxu0 0.0
  %2050 = vmatprep.subr.mxu0 0.0
  %2051 = vmatpush1.msra.mxu0 0.0
  %2052 = vmatprep.subr.mxu0 0.0
  %2053 = vmatpush1.msra.mxu0 0.0
  %2054 = vmatprep.subr.mxu0 0.0
  %2055 = vmatpush1.msra.mxu0 0.0
  %2056 = vmatprep.subr.mxu0 0.0
  %2057 = vmatpush1.msra.mxu0 0.0
  %2058 = vmatprep.subr.mxu0 0.0
  %2059 = vmatpush1.msra.mxu0 0.0
  %2060 = vmatprep.subr.mxu0 0.0
  %2061 = vmatpush1.msra.mxu0 0.0
  %2062 = vmatprep.subr.mxu0 0.0
  %2063 = vmatpush1.msra.mxu0 0.0
  %2064 = vmatprep.subr.mxu0 0.0
  %2065 = vmatpush1.msra.mxu0 0.0
  %2066 = vmatprep.subr.mxu0 0.0
  %2067 = vmatpush1.msra.mxu0 0.0
  %2068 = vmatprep.subr.mxu0 0.0
  %2069 = vmatpush1.msra.mxu0 0.0
  %2070 = vmatprep.subr.mxu0 0.0
  %2071 = vmatpush1.msra.mxu0 0.0
  %2072 = vmatprep.subr.mxu0 0.0
  %2073 = vmatpush1.msra.mxu0 0.0
  %2074 = vmatprep.subr.mxu0 0.0
  %2075 = vmatpush1.msra.mxu0 0.0
  %2076 = vmatprep.subr.mxu0 0.0
  %2077 = vmatpush1.msra.mxu0 0.0
  %2078 = vmatprep.subr.mxu0 0.0
  %2079 = vmatpush1.msra.mxu0 0.0
  %2080 = vmatprep.subr.mxu0 0.0
  %2081 = vmatpush1.msra.mxu0 0.0
  %2082 = vmatprep.subr.mxu0 0.0
  %2083 = vmatpush1.msra.mxu0 0.0
  %2084 = vmatprep.subr.mxu0 0.0
  %2085 = vmatpush1.msra.mxu0 0.0
  %2086 = vmatprep.subr.mxu0 0.0
  %2087 = vmatpush1.msra.mxu0 0.0
  %2088 = vmatprep.subr.mxu0 0.0
  %2089 = vmatpush1.msra.mxu0 0.0
  %2090 = vmatprep.subr.mxu0 0.0
  %2091 = vmatpush1.msra.mxu0 0.0
  %2092 = vmatprep.subr.mxu0 0.0
  %2093 = vmatpush1.msra.mxu0 0.0
  %2094 = vmatprep.mubr.f32.mxu0 0.0
  %2095 = vmatmul.mubr.f32.gmra.mrb[0].mxu0 %v1886
  %v2096 = vpop.f32.mrb[0].mxu0
  %v2097 = vadd.f32 %v1862, %v2096
  %v2098 = vpop.f32.mrb[0].mxu0
  %v2099 = vadd.f32 %v1866, %v2098
  %2100 = vdwg.mxu0
  %2101 = vmatprep.subr.mxu0 %v1813
  %2102 = vmatpush1.msra.mxu0 %v1812
  %2103 = vmatprep.subr.mxu0 %v1821
  %2104 = vmatpush1.msra.mxu0 %v1820
  %2105 = vmatprep.subr.mxu0 %v1829
  %2106 = vmatpush1.msra.mxu0 %v1828
  %2107 = vmatprep.subr.mxu0 %v1837
  %2108 = vmatpush1.msra.mxu0 %v1836
  %2109 = vmatprep.subr.mxu0 0.0
  %2110 = vmatpush1.msra.mxu0 0.0
  %2111 = vmatprep.subr.mxu0 0.0
  %2112 = vmatpush1.msra.mxu0 0.0
  %2113 = vmatprep.subr.mxu0 0.0
  %2114 = vmatpush1.msra.mxu0 0.0
  %2115 = vmatprep.subr.mxu0 0.0
  %2116 = vmatpush1.msra.mxu0 0.0
  %2117 = vmatprep.subr.mxu0 0.0
  %2118 = vmatpush1.msra.mxu0 0.0
  %2119 = vmatprep.subr.mxu0 0.0
  %2120 = vmatpush1.msra.mxu0 0.0
  %2121 = vmatprep.subr.mxu0 0.0
  %2122 = vmatpush1.msra.mxu0 0.0
  %2123 = vmatprep.subr.mxu0 0.0
  %2124 = vmatpush1.msra.mxu0 0.0
  %2125 = vmatprep.subr.mxu0 0.0
  %2126 = vmatpush1.msra.mxu0 0.0
  %2127 = vmatprep.subr.mxu0 0.0
  %2128 = vmatpush1.msra.mxu0 0.0
  %2129 = vmatprep.subr.mxu0 0.0
  %2130 = vmatpush1.msra.mxu0 0.0
  %2131 = vmatprep.subr.mxu0 0.0
  %2132 = vmatpush1.msra.mxu0 0.0
  %2133 = vmatprep.subr.mxu0 0.0
  %2134 = vmatpush1.msra.mxu0 0.0
  %2135 = vmatprep.subr.mxu0 0.0
  %2136 = vmatpush1.msra.mxu0 0.0
  %2137 = vmatprep.subr.mxu0 0.0
  %2138 = vmatpush1.msra.mxu0 0.0
  %2139 = vmatprep.subr.mxu0 0.0
  %2140 = vmatpush1.msra.mxu0 0.0
  %2141 = vmatprep.subr.mxu0 0.0
  %2142 = vmatpush1.msra.mxu0 0.0
  %2143 = vmatprep.subr.mxu0 0.0
  %2144 = vmatpush1.msra.mxu0 0.0
  %2145 = vmatprep.subr.mxu0 0.0
  %2146 = vmatpush1.msra.mxu0 0.0
  %2147 = vmatprep.subr.mxu0 0.0
  %2148 = vmatpush1.msra.mxu0 0.0
  %2149 = vmatprep.subr.mxu0 0.0
  %2150 = vmatpush1.msra.mxu0 0.0
  %2151 = vmatprep.subr.mxu0 0.0
  %2152 = vmatpush1.msra.mxu0 0.0
  %2153 = vmatprep.subr.mxu0 0.0
  %2154 = vmatpush1.msra.mxu0 0.0
  %2155 = vmatprep.subr.mxu0 0.0
  %2156 = vmatpush1.msra.mxu0 0.0
  %2157 = vmatprep.subr.mxu0 0.0
  %2158 = vmatpush1.msra.mxu0 0.0
  %2159 = vmatprep.subr.mxu0 0.0
  %2160 = vmatpush1.msra.mxu0 0.0
  %2161 = vmatprep.subr.mxu0 0.0
  %2162 = vmatpush1.msra.mxu0 0.0
  %2163 = vmatprep.subr.mxu0 0.0
  %2164 = vmatpush1.msra.mxu0 0.0
  %2165 = vmatprep.mubr.f32.mxu0 0.0
  %2166 = vmatmul.mubr.f32.gmra.mrb[0].mxu0 %v1886
  %v2167 = vpop.f32.mrb[0].mxu0
  %v2168 = vadd.f32 %v1870, %v2167
  %v2169 = vpop.f32.mrb[0].mxu0
  %v2170 = vadd.f32 %v1874, %v2169
  %2171 = vdwg.mxu0
  %vm2172 = vcmp.ge.f32.partialorder %v1955, 0.0
  %vm2173 = vcmp.ge.f32.partialorder %v1957, 0.0
  %vm2174 = vcmp.ge.f32.partialorder %v2026, 0.0
  %vm2175 = vcmp.ge.f32.partialorder %v2028, 0.0
  %vm2176 = vcmp.ge.f32.partialorder %v2097, 0.0
  %vm2177 = vcmp.ge.f32.partialorder %v2099, 0.0
  %vm2178 = vcmp.ge.f32.partialorder %v2168, 0.0
  %vm2179 = vcmp.ge.f32.partialorder %v2170, 0.0
  %v2180 = vstv %s1805
  %v2181 = vmul.f32 %v2180, %v1955
  %v2182 = vmul.f32 %v2180, %v1957
  %v2183 = vmul.f32 %v2180, %v2026
  %v2184 = vmul.f32 %v2180, %v2028
  %v2185 = vmul.f32 %v2180, %v2097
  %v2186 = vmul.f32 %v2180, %v2099
  %v2187 = vmul.f32 %v2180, %v2168
  %v2188 = vmul.f32 %v2180, %v2170
  %v2189 = vsel %vm2172, %v1955, %v2181
  %v2190 = vsel %vm2173, %v1957, %v2182
  %v2191 = vsel %vm2174, %v2026, %v2183
  %v2192 = vsel %vm2175, %v2028, %v2184
  %v2193 = vsel %vm2176, %v2097, %v2185
  %v2194 = vsel %vm2177, %v2099, %v2186
  %v2195 = vsel %vm2178, %v2168, %v2187
  %v2196 = vsel %vm2179, %v2170, %v2188
  %v2197 = vld [vmem:[%s3] sm:$0xff]
  %v2198 = vld [vmem:[%s3 + $0x8] sm:$0xff]
  %v2199 = vld [vmem:[%s3 + $0x10] sm:$0xff]
  %v2200 = vld [vmem:[%s3 + $0x18] sm:$0xff]
  %v2201 = vld [vmem:[%s3 + $0x20] sm:$0xff]
  %v2202 = vld [vmem:[%s3 + $0x28] sm:$0xff]
  %v2203 = vld [vmem:[%s3 + $0x30] sm:$0xff]
  %v2204 = vld [vmem:[%s3 + $0x38] sm:$0xff]
  %v2205 = vld [vmem:[%s3 + $0x40] sm:$0xff]
  %v2206 = vld [vmem:[%s3 + $0x48] sm:$0xff]
  %v2207 = vld [vmem:[%s3 + $0x50] sm:$0xff]
  %v2208 = vld [vmem:[%s3 + $0x58] sm:$0xff]
  %v2209 = vld [vmem:[%s3 + $0x60] sm:$0xff]
  %v2210 = vld [vmem:[%s3 + $0x68] sm:$0xff]
  %v2211 = vld [vmem:[%s3 + $0x70] sm:$0xff]
  %v2212 = vld [vmem:[%s3 + $0x78] sm:$0xff]
  %v2213 = vld [vmem:[%s3 + $0x80] sm:$0xff]
  %v2214 = vld [vmem:[%s3 + $0x88] sm:$0xff]
  %v2215 = vld [vmem:[%s3 + $0x90] sm:$0xff]
  %v2216 = vld [vmem:[%s3 + $0x98] sm:$0xff]
  %v2217 = vld [vmem:[%s3 + $0xa0] sm:$0xff]
  %v2218 = vld [vmem:[%s3 + $0xa8] sm:$0xff]
  %v2219 = vld [vmem:[%s3 + $0xb0] sm:$0xff]
  %v2220 = vld [vmem:[%s3 + $0xb8] sm:$0xff]
  %v2221 = vld [vmem:[%s3 + $0xc0] sm:$0xff]
  %v2222 = vld [vmem:[%s3 + $0xc8] sm:$0xff]
  %v2223 = vld [vmem:[%s3 + $0xd0] sm:$0xff]
  %v2224 = vld [vmem:[%s3 + $0xd8] sm:$0xff]
  %v2225 = vld [vmem:[%s3 + $0xe0] sm:$0xff]
  %v2226 = vld [vmem:[%s3 + $0xe8] sm:$0xff]
  %v2227 = vld [vmem:[%s3 + $0xf0] sm:$0xff]
  %v2228 = vld [vmem:[%s3 + $0xf8] sm:$0xff]
  %v2229 = vld [vmem:[%s3 + $0x100] sm:$0xff]
  %v2230 = vld [vmem:[%s3 + $0x108] sm:$0xff]
  %v2231 = vld [vmem:[%s3 + $0x110] sm:$0xff]
  %v2232 = vld [vmem:[%s3 + $0x118] sm:$0xff]
  %v2233 = vld [vmem:[%s3 + $0x120] sm:$0xff]
  %v2234 = vld [vmem:[%s3 + $0x128] sm:$0xff]
  %v2235 = vld [vmem:[%s3 + $0x130] sm:$0xff]
  %v2236 = vld [vmem:[%s3 + $0x138] sm:$0xff]
  %v2237 = vld [vmem:[%s3 + $0x140] sm:$0xff]
  %v2238 = vld [vmem:[%s3 + $0x148] sm:$0xff]
  %v2239 = vld [vmem:[%s3 + $0x150] sm:$0xff]
  %v2240 = vld [vmem:[%s3 + $0x158] sm:$0xff]
  %v2241 = vld [vmem:[%s3 + $0x160] sm:$0xff]
  %v2242 = vld [vmem:[%s3 + $0x168] sm:$0xff]
  %v2243 = vld [vmem:[%s3 + $0x170] sm:$0xff]
  %v2244 = vld [vmem:[%s3 + $0x178] sm:$0xff]
  %v2245 = vld [vmem:[%s3 + $0x180] sm:$0xff]
  %v2246 = vld [vmem:[%s3 + $0x188] sm:$0xff]
  %v2247 = vld [vmem:[%s3 + $0x190] sm:$0xff]
  %v2248 = vld [vmem:[%s3 + $0x198] sm:$0xff]
  %v2249 = vld [vmem:[%s3 + $0x1a0] sm:$0xff]
  %v2250 = vld [vmem:[%s3 + $0x1a8] sm:$0xff]
  %v2251 = vld [vmem:[%s3 + $0x1b0] sm:$0xff]
  %v2252 = vld [vmem:[%s3 + $0x1b8] sm:$0xff]
  %v2253 = vld [vmem:[%s3 + $0x1c0] sm:$0xff]
  %v2254 = vld [vmem:[%s3 + $0x1c8] sm:$0xff]
  %v2255 = vld [vmem:[%s3 + $0x1d0] sm:$0xff]
  %v2256 = vld [vmem:[%s3 + $0x1d8] sm:$0xff]
  %v2257 = vld [vmem:[%s3 + $0x1e0] sm:$0xff]
  %v2258 = vld [vmem:[%s3 + $0x1e8] sm:$0xff]
  %v2259 = vld [vmem:[%s3 + $0x1f0] sm:$0xff]
  %v2260 = vld [vmem:[%s3 + $0x1f8] sm:$0xff]
  %v2261 = vld [vmem:[%s3 + $0x200] sm:$0xff]
  %v2262 = vld [vmem:[%s3 + $0x208] sm:$0xff]
  %v2263 = vld [vmem:[%s3 + $0x210] sm:$0xff]
  %v2264 = vld [vmem:[%s3 + $0x218] sm:$0xff]
  %v2265 = vld [vmem:[%s3 + $0x220] sm:$0xff]
  %v2266 = vld [vmem:[%s3 + $0x228] sm:$0xff]
  %v2267 = vld [vmem:[%s3 + $0x230] sm:$0xff]
  %v2268 = vld [vmem:[%s3 + $0x238] sm:$0xff]
  %v2269 = vld [vmem:[%s3 + $0x240] sm:$0xff]
  %v2270 = vld [vmem:[%s3 + $0x248] sm:$0xff]
  %v2271 = vld [vmem:[%s3 + $0x250] sm:$0xff]
  %v2272 = vld [vmem:[%s3 + $0x258] sm:$0xff]
  %v2273 = vld [vmem:[%s3 + $0x260] sm:$0xff]
  %v2274 = vld [vmem:[%s3 + $0x268] sm:$0xff]
  %v2275 = vld [vmem:[%s3 + $0x270] sm:$0xff]
  %v2276 = vld [vmem:[%s3 + $0x278] sm:$0xff]
  %v2277 = vld [vmem:[%s3 + $0x280] sm:$0xff]
  %v2278 = vld [vmem:[%s3 + $0x288] sm:$0xff]
  %v2279 = vld [vmem:[%s3 + $0x290] sm:$0xff]
  %v2280 = vld [vmem:[%s3 + $0x298] sm:$0xff]
  %v2281 = vld [vmem:[%s3 + $0x2a0] sm:$0xff]
  %v2282 = vld [vmem:[%s3 + $0x2a8] sm:$0xff]
  %v2283 = vld [vmem:[%s3 + $0x2b0] sm:$0xff]
  %v2284 = vld [vmem:[%s3 + $0x2b8] sm:$0xff]
  %v2285 = vld [vmem:[%s3 + $0x2c0] sm:$0xff]
  %v2286 = vld [vmem:[%s3 + $0x2c8] sm:$0xff]
  %v2287 = vld [vmem:[%s3 + $0x2d0] sm:$0xff]
  %v2288 = vld [vmem:[%s3 + $0x2d8] sm:$0xff]
  %v2289 = vld [vmem:[%s3 + $0x2e0] sm:$0xff]
  %v2290 = vld [vmem:[%s3 + $0x2e8] sm:$0xff]
  %v2291 = vld [vmem:[%s3 + $0x2f0] sm:$0xff]
  %v2292 = vld [vmem:[%s3 + $0x2f8] sm:$0xff]
  %v2293 = vld [vmem:[%s3 + $0x300] sm:$0xff]
  %v2294 = vld [vmem:[%s3 + $0x308] sm:$0xff]
  %v2295 = vld [vmem:[%s3 + $0x310] sm:$0xff]
  %v2296 = vld [vmem:[%s3 + $0x318] sm:$0xff]
  %v2297 = vld [vmem:[%s3 + $0x320] sm:$0xff]
  %v2298 = vld [vmem:[%s3 + $0x328] sm:$0xff]
  %v2299 = vld [vmem:[%s3 + $0x330] sm:$0xff]
  %v2300 = vld [vmem:[%s3 + $0x338] sm:$0xff]
  %v2301 = vld [vmem:[%s3 + $0x340] sm:$0xff]
  %v2302 = vld [vmem:[%s3 + $0x348] sm:$0xff]
  %v2303 = vld [vmem:[%s3 + $0x350] sm:$0xff]
  %v2304 = vld [vmem:[%s3 + $0x358] sm:$0xff]
  %v2305 = vld [vmem:[%s3 + $0x360] sm:$0xff]
  %v2306 = vld [vmem:[%s3 + $0x368] sm:$0xff]
  %v2307 = vld [vmem:[%s3 + $0x370] sm:$0xff]
  %v2308 = vld [vmem:[%s3 + $0x378] sm:$0xff]
  %v2309 = vld [vmem:[%s3 + $0x380] sm:$0xff]
  %v2310 = vld [vmem:[%s3 + $0x388] sm:$0xff]
  %v2311 = vld [vmem:[%s3 + $0x390] sm:$0xff]
  %v2312 = vld [vmem:[%s3 + $0x398] sm:$0xff]
  %v2313 = vld [vmem:[%s3 + $0x3a0] sm:$0xff]
  %v2314 = vld [vmem:[%s3 + $0x3a8] sm:$0xff]
  %v2315 = vld [vmem:[%s3 + $0x3b0] sm:$0xff]
  %v2316 = vld [vmem:[%s3 + $0x3b8] sm:$0xff]
  %v2317 = vld [vmem:[%s3 + $0x3c0] sm:$0xff]
  %v2318 = vld [vmem:[%s3 + $0x3c8] sm:$0xff]
  %v2319 = vld [vmem:[%s3 + $0x3d0] sm:$0xff]
  %v2320 = vld [vmem:[%s3 + $0x3d8] sm:$0xff]
  %v2321 = vld [vmem:[%s3 + $0x3e0] sm:$0xff]
  %v2322 = vld [vmem:[%s3 + $0x3e8] sm:$0xff]
  %v2323 = vld [vmem:[%s3 + $0x3f0] sm:$0xff]
  %v2324 = vld [vmem:[%s3 + $0x3f8] sm:$0xff]
  %v2325 = vld [vmem:[%s3 + $0x400] sm:$0x1]
  %v2326 = vlaneseq
  %v2327 = vshrl.u32 %v2326, 7
  %v2328 = vsub.s32 0, %v2327
  %v2329 = vrot.slane %v2325, %v2328
  %2330 = vmatprep.subr.mxu0 0.0
  %2331 = vmatpush1.msra.mxu0 %v2197
  %2332 = vmatprep.subr.mxu0 0.0
  %2333 = vmatpush1.msra.mxu0 %v2198
  %2334 = vmatprep.subr.mxu0 0.0
  %2335 = vmatpush1.msra.mxu0 %v2199
  %2336 = vmatprep.subr.mxu0 0.0
  %2337 = vmatpush1.msra.mxu0 %v2200
  %2338 = vmatprep.subr.mxu0 0.0
  %2339 = vmatpush1.msra.mxu0 %v2201
  %2340 = vmatprep.subr.mxu0 0.0
  %2341 = vmatpush1.msra.mxu0 %v2202
  %2342 = vmatprep.subr.mxu0 0.0
  %2343 = vmatpush1.msra.mxu0 %v2203
  %2344 = vmatprep.subr.mxu0 0.0
  %2345 = vmatpush1.msra.mxu0 %v2204
  %2346 = vmatprep.subr.mxu0 0.0
  %2347 = vmatpush1.msra.mxu0 %v2205
  %2348 = vmatprep.subr.mxu0 0.0
  %2349 = vmatpush1.msra.mxu0 %v2206
  %2350 = vmatprep.subr.mxu0 0.0
  %2351 = vmatpush1.msra.mxu0 %v2207
  %2352 = vmatprep.subr.mxu0 0.0
  %2353 = vmatpush1.msra.mxu0 %v2208
  %2354 = vmatprep.subr.mxu0 0.0
  %2355 = vmatpush1.msra.mxu0 %v2209
  %2356 = vmatprep.subr.mxu0 0.0
  %2357 = vmatpush1.msra.mxu0 %v2210
  %2358 = vmatprep.subr.mxu0 0.0
  %2359 = vmatpush1.msra.mxu0 %v2211
  %2360 = vmatprep.subr.mxu0 0.0
  %2361 = vmatpush1.msra.mxu0 %v2212
  %2362 = vmatprep.subr.mxu0 0.0
  %2363 = vmatpush1.msra.mxu0 %v2213
  %2364 = vmatprep.subr.mxu0 0.0
  %2365 = vmatpush1.msra.mxu0 %v2214
  %2366 = vmatprep.subr.mxu0 0.0
  %2367 = vmatpush1.msra.mxu0 %v2215
  %2368 = vmatprep.subr.mxu0 0.0
  %2369 = vmatpush1.msra.mxu0 %v2216
  %2370 = vmatprep.subr.mxu0 0.0
  %2371 = vmatpush1.msra.mxu0 %v2217
  %2372 = vmatprep.subr.mxu0 0.0
  %2373 = vmatpush1.msra.mxu0 %v2218
  %2374 = vmatprep.subr.mxu0 0.0
  %2375 = vmatpush1.msra.mxu0 %v2219
  %2376 = vmatprep.subr.mxu0 0.0
  %2377 = vmatpush1.msra.mxu0 %v2220
  %2378 = vmatprep.subr.mxu0 0.0
  %2379 = vmatpush1.msra.mxu0 %v2221
  %2380 = vmatprep.subr.mxu0 0.0
  %2381 = vmatpush1.msra.mxu0 %v2222
  %2382 = vmatprep.subr.mxu0 0.0
  %2383 = vmatpush1.msra.mxu0 %v2223
  %2384 = vmatprep.subr.mxu0 0.0
  %2385 = vmatpush1.msra.mxu0 %v2224
  %2386 = vmatprep.subr.mxu0 0.0
  %2387 = vmatpush1.msra.mxu0 %v2225
  %2388 = vmatprep.subr.mxu0 0.0
  %2389 = vmatpush1.msra.mxu0 %v2226
  %2390 = vmatprep.subr.mxu0 0.0
  %2391 = vmatpush1.msra.mxu0 %v2227
  %2392 = vmatprep.subr.mxu0 0.0
  %2393 = vmatpush1.msra.mxu0 %v2228
  %2394 = vmatprep.mubr.f32.mxu0 %v2190
  %2395 = vmatmul.mubr.f32.gmra.mrb[0].mxu0 %v2189
  %v2396 = vpop.f32.mrb[0].mxu0
  %v2397 = vadd.f32 %v2329, %v2396
  %v2398 = vpop.f32.mrb[0].mxu0
  %2399 = vdwg.mxu0
  %2400 = vmatprep.subr.mxu0 0.0
  %2401 = vmatpush1.msra.mxu0 %v2229
  %2402 = vmatprep.subr.mxu0 0.0
  %2403 = vmatpush1.msra.mxu0 %v2230
  %2404 = vmatprep.subr.mxu0 0.0
  %2405 = vmatpush1.msra.mxu0 %v2231
  %2406 = vmatprep.subr.mxu0 0.0
  %2407 = vmatpush1.msra.mxu0 %v2232
  %2408 = vmatprep.subr.mxu0 0.0
  %2409 = vmatpush1.msra.mxu0 %v2233
  %2410 = vmatprep.subr.mxu0 0.0
  %2411 = vmatpush1.msra.mxu0 %v2234
  %2412 = vmatprep.subr.mxu0 0.0
  %2413 = vmatpush1.msra.mxu0 %v2235
  %2414 = vmatprep.subr.mxu0 0.0
  %2415 = vmatpush1.msra.mxu0 %v2236
  %2416 = vmatprep.subr.mxu0 0.0
  %2417 = vmatpush1.msra.mxu0 %v2237
  %2418 = vmatprep.subr.mxu0 0.0
  %2419 = vmatpush1.msra.mxu0 %v2238
  %2420 = vmatprep.subr.mxu0 0.0
  %2421 = vmatpush1.msra.mxu0 %v2239
  %2422 = vmatprep.subr.mxu0 0.0
  %2423 = vmatpush1.msra.mxu0 %v2240
  %2424 = vmatprep.subr.mxu0 0.0
  %2425 = vmatpush1.msra.mxu0 %v2241
  %2426 = vmatprep.subr.mxu0 0.0
  %2427 = vmatpush1.msra.mxu0 %v2242
  %2428 = vmatprep.subr.mxu0 0.0
  %2429 = vmatpush1.msra.mxu0 %v2243
  %2430 = vmatprep.subr.mxu0 0.0
  %2431 = vmatpush1.msra.mxu0 %v2244
  %2432 = vmatprep.subr.mxu0 0.0
  %2433 = vmatpush1.msra.mxu0 %v2245
  %2434 = vmatprep.subr.mxu0 0.0
  %2435 = vmatpush1.msra.mxu0 %v2246
  %2436 = vmatprep.subr.mxu0 0.0
  %2437 = vmatpush1.msra.mxu0 %v2247
  %2438 = vmatprep.subr.mxu0 0.0
  %2439 = vmatpush1.msra.mxu0 %v2248
  %2440 = vmatprep.subr.mxu0 0.0
  %2441 = vmatpush1.msra.mxu0 %v2249
  %2442 = vmatprep.subr.mxu0 0.0
  %2443 = vmatpush1.msra.mxu0 %v2250
  %2444 = vmatprep.subr.mxu0 0.0
  %2445 = vmatpush1.msra.mxu0 %v2251
  %2446 = vmatprep.subr.mxu0 0.0
  %2447 = vmatpush1.msra.mxu0 %v2252
  %2448 = vmatprep.subr.mxu0 0.0
  %2449 = vmatpush1.msra.mxu0 %v2253
  %2450 = vmatprep.subr.mxu0 0.0
  %2451 = vmatpush1.msra.mxu0 %v2254
  %2452 = vmatprep.subr.mxu0 0.0
  %2453 = vmatpush1.msra.mxu0 %v2255
  %2454 = vmatprep.subr.mxu0 0.0
  %2455 = vmatpush1.msra.mxu0 %v2256
  %2456 = vmatprep.subr.mxu0 0.0
  %2457 = vmatpush1.msra.mxu0 %v2257
  %2458 = vmatprep.subr.mxu0 0.0
  %2459 = vmatpush1.msra.mxu0 %v2258
  %2460 = vmatprep.subr.mxu0 0.0
  %2461 = vmatpush1.msra.mxu0 %v2259
  %2462 = vmatprep.subr.mxu0 0.0
  %2463 = vmatpush1.msra.mxu0 %v2260
  %2464 = vmatprep.mubr.f32.mxu0 %v2192
  %2465 = vmatmul.mubr.f32.gmra.mrb[0].mxu0 %v2191
  %v2466 = vpop.f32.mrb[0].mxu0
  %v2467 = vadd.f32 %v2397, %v2466
  %v2468 = vpop.f32.mrb[0].mxu0
  %2469 = vdwg.mxu0
  %2470 = vmatprep.subr.mxu0 0.0
  %2471 = vmatpush1.msra.mxu0 %v2261
  %2472 = vmatprep.subr.mxu0 0.0
  %2473 = vmatpush1.msra.mxu0 %v2262
  %2474 = vmatprep.subr.mxu0 0.0
  %2475 = vmatpush1.msra.mxu0 %v2263
  %2476 = vmatprep.subr.mxu0 0.0
  %2477 = vmatpush1.msra.mxu0 %v2264
  %2478 = vmatprep.subr.mxu0 0.0
  %2479 = vmatpush1.msra.mxu0 %v2265
  %2480 = vmatprep.subr.mxu0 0.0
  %2481 = vmatpush1.msra.mxu0 %v2266
  %2482 = vmatprep.subr.mxu0 0.0
  %2483 = vmatpush1.msra.mxu0 %v2267
  %2484 = vmatprep.subr.mxu0 0.0
  %2485 = vmatpush1.msra.mxu0 %v2268
  %2486 = vmatprep.subr.mxu0 0.0
  %2487 = vmatpush1.msra.mxu0 %v2269
  %2488 = vmatprep.subr.mxu0 0.0
  %2489 = vmatpush1.msra.mxu0 %v2270
  %2490 = vmatprep.subr.mxu0 0.0
  %2491 = vmatpush1.msra.mxu0 %v2271
  %2492 = vmatprep.subr.mxu0 0.0
  %2493 = vmatpush1.msra.mxu0 %v2272
  %2494 = vmatprep.subr.mxu0 0.0
  %2495 = vmatpush1.msra.mxu0 %v2273
  %2496 = vmatprep.subr.mxu0 0.0
  %2497 = vmatpush1.msra.mxu0 %v2274
  %2498 = vmatprep.subr.mxu0 0.0
  %2499 = vmatpush1.msra.mxu0 %v2275
  %2500 = vmatprep.subr.mxu0 0.0
  %2501 = vmatpush1.msra.mxu0 %v2276
  %2502 = vmatprep.subr.mxu0 0.0
  %2503 = vmatpush1.msra.mxu0 %v2277
  %2504 = vmatprep.subr.mxu0 0.0
  %2505 = vmatpush1.msra.mxu0 %v2278
  %2506 = vmatprep.subr.mxu0 0.0
  %2507 = vmatpush1.msra.mxu0 %v2279
  %2508 = vmatprep.subr.mxu0 0.0
  %2509 = vmatpush1.msra.mxu0 %v2280
  %2510 = vmatprep.subr.mxu0 0.0
  %2511 = vmatpush1.msra.mxu0 %v2281
  %2512 = vmatprep.subr.mxu0 0.0
  %2513 = vmatpush1.msra.mxu0 %v2282
  %2514 = vmatprep.subr.mxu0 0.0
  %2515 = vmatpush1.msra.mxu0 %v2283
  %2516 = vmatprep.subr.mxu0 0.0
  %2517 = vmatpush1.msra.mxu0 %v2284
  %2518 = vmatprep.subr.mxu0 0.0
  %2519 = vmatpush1.msra.mxu0 %v2285
  %2520 = vmatprep.subr.mxu0 0.0
  %2521 = vmatpush1.msra.mxu0 %v2286
  %2522 = vmatprep.subr.mxu0 0.0
  %2523 = vmatpush1.msra.mxu0 %v2287
  %2524 = vmatprep.subr.mxu0 0.0
  %2525 = vmatpush1.msra.mxu0 %v2288
  %2526 = vmatprep.subr.mxu0 0.0
  %2527 = vmatpush1.msra.mxu0 %v2289
  %2528 = vmatprep.subr.mxu0 0.0
  %2529 = vmatpush1.msra.mxu0 %v2290
  %2530 = vmatprep.subr.mxu0 0.0
  %2531 = vmatpush1.msra.mxu0 %v2291
  %2532 = vmatprep.subr.mxu0 0.0
  %2533 = vmatpush1.msra.mxu0 %v2292
  %2534 = vmatprep.mubr.f32.mxu0 %v2194
  %2535 = vmatmul.mubr.f32.gmra.mrb[0].mxu0 %v2193
  %v2536 = vpop.f32.mrb[0].mxu0
  %v2537 = vadd.f32 %v2467, %v2536
  %v2538 = vpop.f32.mrb[0].mxu0
  %2539 = vdwg.mxu0
  %2540 = vmatprep.subr.mxu0 0.0
  %2541 = vmatpush1.msra.mxu0 %v2293
  %2542 = vmatprep.subr.mxu0 0.0
  %2543 = vmatpush1.msra.mxu0 %v2294
  %2544 = vmatprep.subr.mxu0 0.0
  %2545 = vmatpush1.msra.mxu0 %v2295
  %2546 = vmatprep.subr.mxu0 0.0
  %2547 = vmatpush1.msra.mxu0 %v2296
  %2548 = vmatprep.subr.mxu0 0.0
  %2549 = vmatpush1.msra.mxu0 %v2297
  %2550 = vmatprep.subr.mxu0 0.0
  %2551 = vmatpush1.msra.mxu0 %v2298
  %2552 = vmatprep.subr.mxu0 0.0
  %2553 = vmatpush1.msra.mxu0 %v2299
  %2554 = vmatprep.subr.mxu0 0.0
  %2555 = vmatpush1.msra.mxu0 %v2300
  %2556 = vmatprep.subr.mxu0 0.0
  %2557 = vmatpush1.msra.mxu0 %v2301
  %2558 = vmatprep.subr.mxu0 0.0
  %2559 = vmatpush1.msra.mxu0 %v2302
  %2560 = vmatprep.subr.mxu0 0.0
  %2561 = vmatpush1.msra.mxu0 %v2303
  %2562 = vmatprep.subr.mxu0 0.0
  %2563 = vmatpush1.msra.mxu0 %v2304
  %2564 = vmatprep.subr.mxu0 0.0
  %2565 = vmatpush1.msra.mxu0 %v2305
  %2566 = vmatprep.subr.mxu0 0.0
  %2567 = vmatpush1.msra.mxu0 %v2306
  %2568 = vmatprep.subr.mxu0 0.0
  %2569 = vmatpush1.msra.mxu0 %v2307
  %2570 = vmatprep.subr.mxu0 0.0
  %2571 = vmatpush1.msra.mxu0 %v2308
  %2572 = vmatprep.subr.mxu0 0.0
  %2573 = vmatpush1.msra.mxu0 %v2309
  %2574 = vmatprep.subr.mxu0 0.0
  %2575 = vmatpush1.msra.mxu0 %v2310
  %2576 = vmatprep.subr.mxu0 0.0
  %2577 = vmatpush1.msra.mxu0 %v2311
  %2578 = vmatprep.subr.mxu0 0.0
  %2579 = vmatpush1.msra.mxu0 %v2312
  %2580 = vmatprep.subr.mxu0 0.0
  %2581 = vmatpush1.msra.mxu0 %v2313
  %2582 = vmatprep.subr.mxu0 0.0
  %2583 = vmatpush1.msra.mxu0 %v2314
  %2584 = vmatprep.subr.mxu0 0.0
  %2585 = vmatpush1.msra.mxu0 %v2315
  %2586 = vmatprep.subr.mxu0 0.0
  %2587 = vmatpush1.msra.mxu0 %v2316
  %2588 = vmatprep.subr.mxu0 0.0
  %2589 = vmatpush1.msra.mxu0 %v2317
  %2590 = vmatprep.subr.mxu0 0.0
  %2591 = vmatpush1.msra.mxu0 %v2318
  %2592 = vmatprep.subr.mxu0 0.0
  %2593 = vmatpush1.msra.mxu0 %v2319
  %2594 = vmatprep.subr.mxu0 0.0
  %2595 = vmatpush1.msra.mxu0 %v2320
  %2596 = vmatprep.subr.mxu0 0.0
  %2597 = vmatpush1.msra.mxu0 %v2321
  %2598 = vmatprep.subr.mxu0 0.0
  %2599 = vmatpush1.msra.mxu0 %v2322
  %2600 = vmatprep.subr.mxu0 0.0
  %2601 = vmatpush1.msra.mxu0 %v2323
  %2602 = vmatprep.subr.mxu0 0.0
  %2603 = vmatpush1.msra.mxu0 %v2324
  %2604 = vmatprep.mubr.f32.mxu0 %v2196
  %2605 = vmatmul.mubr.f32.gmra.mrb[0].mxu0 %v2195
  %v2606 = vpop.f32.mrb[0].mxu0
  %v2607 = vadd.f32 %v2537, %v2606
  %v2608 = vpop.f32.mrb[0].mxu0
  %2609 = vdwg.mxu0
  %vm2610 = vcmp.ge.f32.partialorder %v2607, 0.0
  %v2611 = vmul.f32 %v2180, %v2607
  %v2612 = vsel %vm2610, %v2607, %v2611
  %2613 = vst [vmem:[%s5] sm:$0xff] %v2612
  // Predicated region
  $region22: #{gru_model_forward.1} parent=0 // pred_check
    _
  $region23: #{gru_model_forward.1} parent=0 // pred_check_branch
    %2615 = sbr.rel (0) target = $region25
  $region24: #{gru_model_forward.1} parent=0 // pred_region
    _
  $region25: #{gru_model_forward.1} parent=0 // pred_fallthru
    _
  // Predicated region
  $region26: #{gru_model_forward.1} parent=0 // pred_check
    _
  $region27: #{gru_model_forward.1} parent=0 // pred_check_branch
    %2617 = sbr.rel (0) target = $region29
  $region28: #{gru_model_forward.1} parent=0 // pred_region
    _
  $region29: #{gru_model_forward.1} parent=0 // pred_fallthru
    _

</llo_original>
